<compile_context>
chip_gen: v7x
topology: tpu7x:2x2x1
jax: 0.10.0
libtpu: 0.0.40
codegen_flags: <defaults>
</compile_context>

<pallas_src>
import functools

import jax
import jax.numpy as jnp
from jax.experimental import pallas as pl
from jax.experimental.pallas import tpu as pltpu


# ----------------------------------------------------------------------------
# Kernel 1: fused CF (N2 parallel convs) + CE (3x3 conv + tanh), per batch.
# ----------------------------------------------------------------------------
def _cf_ce_kernel(hh_ref, ww_ref, x_ref, wcf_ref, bcf_ref, wce_ref, bce_ref,
                  o_ref, *, H, W, KS, O1, N3, activation):
    HW = H * W
    f32 = jnp.float32
    hh = hh_ref[...]          # (1, HW) int32: row index of each flattened lane
    ww = ww_ref[...]          # (1, HW) int32: col index of each flattened lane

    def shift2d(v, dr, dc):
        # v[:, h*W + w]  ->  v[:, (h+dr)*W + (w+dc)], zeros outside the image.
        # Implements 'same' zero padding without any padded copy: a lane roll
        # (XLU, cheap) plus a VPU border mask.
        delta = dr * W + dc
        y = v if delta == 0 else pltpu.roll(v, shift=(-delta) % HW, axis=1)
        if dr == 0 and dc == 0:
            return y
        m = ((hh + dr >= 0) & (hh + dr < H) &
             (ww + dc >= 0) & (ww + dc < W))
        return jnp.where(m, y, 0.0)

    # ---- CF: the N2 parallel convs fused into one (O1 = N1*N2 outputs). ----
    p = KS // 2
    xv = x_ref[0]                                          # (Cin, HW)
    acc = jnp.zeros((O1, HW), f32)
    for di in range(KS):
        for dj in range(KS):
            xs = shift2d(xv, di - p, dj - p)
            acc = acc + jnp.dot(wcf_ref[di * KS + dj], xs,
                                preferred_element_type=f32)
    acc = acc + bcf_ref[...]                               # (O1, 1) broadcast
    if activation == "relu":
        cf = jnp.maximum(acc, 0.0)
    elif activation == "tanh":
        cf = jnp.tanh(acc)
    elif activation is None:
        cf = acc
    else:
        raise ValueError(f"unknown activation: {activation}")

    # ---- CE: 3x3 'same' conv + tanh, consuming cf straight from registers
    #      (no HBM round trip, no CE im2col). ----
    acc2 = jnp.zeros((N3, HW), f32)
    for di in range(3):
        for dj in range(3):
            ys = shift2d(cf, di - 1, dj - 1)
            acc2 = acc2 + jnp.dot(wce_ref[di * 3 + dj], ys,
                                  preferred_element_type=f32)
    ce = jnp.tanh(acc2 + bce_ref[...])

    # Fused channel concat: cf rows then ce rows of the (C_total, HW) block.
    o_ref[0, 0:O1, :] = cf.astype(o_ref.dtype)
    o_ref[0, O1:O1 + N3, :] = ce.astype(o_ref.dtype)


def conv_cf_ce_pallas(xf, hh, ww, wcf_t, bcf_c, wce_t, bce_c, H, W, KS,
                      activation):
    """xf: (B, Cin, H*W) -> feat (B, O1+N3, H*W) float32."""
    B, Cin, HW = xf.shape
    O1 = wcf_t.shape[1]
    N3 = wce_t.shape[1]
    C_total = O1 + N3
    kern = functools.partial(_cf_ce_kernel, H=H, W=W, KS=KS, O1=O1, N3=N3,
                             activation=activation)
    return pl.pallas_call(
        kern,
        out_shape=jax.ShapeDtypeStruct((B, C_total, HW), jnp.float32),
        grid=(B,),
        in_specs=[
            pl.BlockSpec((1, HW), lambda b: (0, 0)),             # hh
            pl.BlockSpec((1, HW), lambda b: (0, 0)),             # ww
            pl.BlockSpec((1, Cin, HW), lambda b: (b, 0, 0)),     # x (one image)
            pl.BlockSpec((KS * KS, O1, Cin), lambda b: (0, 0, 0)),
            pl.BlockSpec((O1, 1), lambda b: (0, 0)),
            pl.BlockSpec((9, N3, O1), lambda b: (0, 0, 0)),
            pl.BlockSpec((N3, 1), lambda b: (0, 0)),
        ],
        out_specs=pl.BlockSpec((1, C_total, HW), lambda b: (b, 0, 0)),
        compiler_params=pltpu.CompilerParams(
            dimension_semantics=("parallel",)),
    )(hh, ww, xf, wcf_t, bcf_c, wce_t, bce_c)


# ----------------------------------------------------------------------------
# Kernel 2: SPP (levels 1, 2, 3) + z-score Normalize(dim=0, eps), per
# channel block (channel grid keeps VMEM small and is megacore-parallel).
# ----------------------------------------------------------------------------
def _spp_znorm_kernel(hh_ref, ww_ref, x_ref, o_ref, *, H, W, eps, denom):
    Bn, c_blk, HW = x_ref.shape
    x = x_ref[...]                                         # (B, c_blk, HW)
    hh = hh_ref[...]                                       # (1, HW)
    ww = ww_ref[...]                                       # (1, HW)
    neg = jnp.float32(-jnp.inf)
    lane_k = jax.lax.broadcasted_iota(jnp.int32, (1, 1, 14), 2)

    # 14 adaptive-max-pool bins (PyTorch bin edges), gathered lane-dense into
    # a single (B, c_blk, 14) value so the 14 z-norms run as one batched pass.
    bins = jnp.zeros((Bn, c_blk, 14), jnp.float32)
    k = 0
    for n in (1, 2, 3):
        for i in range(n):
            hs, he = (i * H) // n, -(-((i + 1) * H) // n)
            for j in range(n):
                ws, we = (j * W) // n, -(-((j + 1) * W) // n)
                m = (hh >= hs) & (hh < he) & (ww >= ws) & (ww < we)
                mk = jnp.max(jnp.where(m, x, neg), axis=2, keepdims=True)
                bins = jnp.where(lane_k == k, mk, bins)
                k += 1

    # z-score over the batch dim: (x - mean) / (std + eps), unbiased std.
    mean = jnp.mean(bins, axis=0, keepdims=True)
    diff = bins - mean
    var = jnp.sum(diff * diff, axis=0, keepdims=True) * (1.0 / denom)
    inv = pl.reciprocal(jnp.sqrt(var) + eps, approx=True)
    o_ref[...] = (diff * inv).astype(o_ref.dtype)


def spp_znorm_pallas(feat, hh, ww, H, W, eps=0.01):
    """feat: (B, C, H*W) -> normalized SPP features (B, C*14) float32."""
    B, C, HW = feat.shape
    c_blk = 8 if C % 8 == 0 else C          # channel grid (v7x VMEM / 2 TCs)
    denom = max(B - 1, 1)                   # torch unbiased std; avoid 0-div at B=1
    zn = pl.pallas_call(
        functools.partial(_spp_znorm_kernel, H=H, W=W, eps=eps, denom=denom),
        out_shape=jax.ShapeDtypeStruct((B, C, 14), jnp.float32),
        grid=(C // c_blk,),
        in_specs=[
            pl.BlockSpec((1, HW), lambda c: (0, 0)),
            pl.BlockSpec((1, HW), lambda c: (0, 0)),
            pl.BlockSpec((B, c_blk, HW), lambda c: (0, c, 0)),
        ],
        out_specs=pl.BlockSpec((B, c_blk, 14), lambda c: (0, c, 0)),
        compiler_params=pltpu.CompilerParams(
            dimension_semantics=("parallel",)),
    )(hh, ww, feat)
    # Reassemble torch SPP order: [lvl1 (C)] ++ [lvl2 (C*4)] ++ [lvl3 (C*9)].
    # Z-norm is per (bin, channel) column so it commutes with this reorder.
    lvl1 = zn[:, :, 0]
    lvl2 = zn[:, :, 1:5].reshape(B, C * 4)
    lvl3 = zn[:, :, 5:14].reshape(B, C * 9)
    return jnp.concatenate([lvl1, lvl2, lvl3], axis=1)


# ----------------------------------------------------------------------------
# FE_SPP_SFL_Parallel forward
# ----------------------------------------------------------------------------
def fe_spp_sfl_parallel(x, params, activation="relu", eps=0.01):
    B, Cin, H, W = x.shape
    HW = H * W

    # Host-side prep: only tiny reshapes/transposes (no im2col, no padded copies).
    wcf = jnp.concatenate([w for (w, _) in params["cf"]], axis=0)  # (N1*N2,Cin,KS,KS)
    bcf = jnp.concatenate([b for (_, b) in params["cf"]], axis=0)  # (N1*N2,)
    O1, _, KS, _ = wcf.shape
    assert KS % 2 == 1, "'same' padding assumed with odd kernel size"
    wce, bce = params["ce_w"], params["ce_b"]
    N3 = wce.shape[0]

    wcf_t = jnp.transpose(wcf, (2, 3, 0, 1)).reshape(KS * KS, O1, Cin)
    wce_t = jnp.transpose(wce, (2, 3, 0, 1)).reshape(9, N3, O1)
    bcf_c = bcf.reshape(O1, 1)
    bce_c = bce.reshape(N3, 1)

    xf = x.reshape(B, Cin, HW)
    idx = jnp.arange(HW, dtype=jnp.int32)
    hh = (idx // W).reshape(1, HW)
    ww = (idx % W).reshape(1, HW)

    feat = conv_cf_ce_pallas(xf, hh, ww, wcf_t, bcf_c, wce_t, bce_c,
                             H, W, KS, activation)          # (B, O1+N3, HW)
    out = spp_znorm_pallas(feat, hh, ww, H, W, eps=eps)     # (B, (O1+N3)*14)
    # TODO(synk): torch `.double()` — cast to float64 on the host if exact
    # dtype parity is required; TPUs have no native f64 vector path.
    return out


def init_params(key, in_channels, N1, N2, N3, KS):
    keys = jax.random.split(key, 2 * N2 + 2)
    cf = []
    for i in range(N2):
        w = 0.1 * jax.random.normal(keys[2 * i], (N1, in_channels, KS, KS),
                                    dtype=jnp.float32)
        b = 0.1 * jax.random.normal(keys[2 * i + 1], (N1,), dtype=jnp.float32)
        cf.append((w, b))
    ce_w = 0.1 * jax.random.normal(keys[-2], (N3, N1 * N2, 3, 3),
                                   dtype=jnp.float32)
    ce_b = 0.1 * jax.random.normal(keys[-1], (N3,), dtype=jnp.float32)
    return {"cf": cf, "ce_w": ce_w, "ce_b": ce_b}


if __name__ == "__main__":
    B, in_channels, H, W = 2, 4, 16, 16
    N1, N2, N3, KS = 8, 3, 16, 3

    key = jax.random.PRNGKey(0)
    kx, kp = jax.random.split(key)
    x = jax.random.normal(kx, (B, in_channels, H, W), dtype=jnp.float32)
    params = init_params(kp, in_channels, N1, N2, N3, KS)

    fwd = jax.jit(fe_spp_sfl_parallel)
    out = jax.block_until_ready(fwd(x, params))

    expected_feat = (N1 * N2 + N3) * (1 + 4 + 9)   # C_total * 14
    assert out.shape == (B, expected_feat), out.shape
    assert bool(jnp.all(jnp.isfinite(out)))
    print("KERNEL_OK")
</pallas_src>

<mosaic_0001>
module attributes {stable_mosaic.version = 11 : i64} {
  func.func @_cf_ce_kernel(%arg0: i32, %arg1: memref<1x256xi32, #tpu.memory_space<vmem>>, %arg2: memref<1x256xi32, #tpu.memory_space<vmem>>, %arg3: memref<1x4x256xf32, #tpu.memory_space<vmem>>, %arg4: memref<9x24x4xf32, #tpu.memory_space<vmem>>, %arg5: memref<24x1xf32, #tpu.memory_space<vmem>>, %arg6: memref<9x16x24xf32, #tpu.memory_space<vmem>>, %arg7: memref<16x1xf32, #tpu.memory_space<vmem>>, %arg8: memref<1x40x256xf32, #tpu.memory_space<vmem>>) attributes {dimension_semantics = [#tpu.dimension_semantics<parallel>], iteration_bounds = array<i64: 2>, scalar_prefetch = 0 : i64, scratch_operands = 0 : i64, tpu.core_type = #tpu.core_type<tc>, window_params = [{pipeline_mode = #tpu.pipeline_mode<synchronous>, transform_indices = @transform_0, window_bounds = array<i64: 1, 256>}, {pipeline_mode = #tpu.pipeline_mode<synchronous>, transform_indices = @transform_1, window_bounds = array<i64: 1, 256>}, {transform_indices = @transform_2, window_bounds = array<i64: 1, 4, 256>}, {pipeline_mode = #tpu.pipeline_mode<synchronous>, transform_indices = @transform_3, window_bounds = array<i64: 9, 24, 4>}, {pipeline_mode = #tpu.pipeline_mode<synchronous>, transform_indices = @transform_4, window_bounds = array<i64: 24, 1>}, {pipeline_mode = #tpu.pipeline_mode<synchronous>, transform_indices = @transform_5, window_bounds = array<i64: 9, 16, 24>}, {pipeline_mode = #tpu.pipeline_mode<synchronous>, transform_indices = @transform_6, window_bounds = array<i64: 16, 1>}, {transform_indices = @transform_7, window_bounds = array<i64: 1, 40, 256>}]} {
    %c0 = arith.constant 0 : index
    %c0_0 = arith.constant 0 : index
    %0 = vector.load %arg1[%c0, %c0_0] : memref<1x256xi32, #tpu.memory_space<vmem>>, vector<1x256xi32>
    %c0_1 = arith.constant 0 : index
    %c0_2 = arith.constant 0 : index
    %1 = vector.load %arg2[%c0_1, %c0_2] : memref<1x256xi32, #tpu.memory_space<vmem>>, vector<1x256xi32>
    %c0_3 = arith.constant 0 : index
    %c0_4 = arith.constant 0 : index
    %c0_5 = arith.constant 0 : index
    %2 = vector.load %arg3[%c0_3, %c0_4, %c0_5] : memref<1x4x256xf32, #tpu.memory_space<vmem>>, vector<1x4x256xf32>
    %3 = vector.shape_cast %2 : vector<1x4x256xf32> to vector<4x256xf32>
    %cst = arith.constant 0.000000e+00 : f32
    %4 = vector.broadcast %cst : f32 to vector<24x256xf32>
    %c17_i32 = arith.constant 17 : i32
    %5 = tpu.dynamic_rotate %3 by %c17_i32 dim 1 : vector<4x256xf32>, i32 -> vector<4x256xf32>
    %c-1_i32 = arith.constant -1 : i32
    %6 = vector.broadcast %c-1_i32 : i32 to vector<1x256xi32>
    %7 = arith.addi %0, %6 : vector<1x256xi32>
    %c0_i32 = arith.constant 0 : i32
    %8 = vector.broadcast %c0_i32 : i32 to vector<1x256xi32>
    %9 = arith.cmpi sge, %7, %8 : vector<1x256xi32>
    %c-1_i32_6 = arith.constant -1 : i32
    %10 = vector.broadcast %c-1_i32_6 : i32 to vector<1x256xi32>
    %11 = arith.addi %0, %10 : vector<1x256xi32>
    %c16_i32 = arith.constant 16 : i32
    %12 = vector.broadcast %c16_i32 : i32 to vector<1x256xi32>
    %13 = arith.cmpi slt, %11, %12 : vector<1x256xi32>
    %14 = arith.andi %9, %13 : vector<1x256xi1>
    %c-1_i32_7 = arith.constant -1 : i32
    %15 = vector.broadcast %c-1_i32_7 : i32 to vector<1x256xi32>
    %16 = arith.addi %1, %15 : vector<1x256xi32>
    %c0_i32_8 = arith.constant 0 : i32
    %17 = vector.broadcast %c0_i32_8 : i32 to vector<1x256xi32>
    %18 = arith.cmpi sge, %16, %17 : vector<1x256xi32>
    %19 = arith.andi %14, %18 : vector<1x256xi1>
    %c-1_i32_9 = arith.constant -1 : i32
    %20 = vector.broadcast %c-1_i32_9 : i32 to vector<1x256xi32>
    %21 = arith.addi %1, %20 : vector<1x256xi32>
    %c16_i32_10 = arith.constant 16 : i32
    %22 = vector.broadcast %c16_i32_10 : i32 to vector<1x256xi32>
    %23 = arith.cmpi slt, %21, %22 : vector<1x256xi32>
    %24 = arith.andi %19, %23 : vector<1x256xi1>
    %cst_11 = arith.constant 0.000000e+00 : f32
    %25 = vector.shape_cast %24 : vector<1x256xi1> to vector<1x256xi1>
    %26 = vector.broadcast %25 : vector<1x256xi1> to vector<4x256xi1>
    %27 = vector.broadcast %cst_11 : f32 to vector<4x256xf32>
    %28 = arith.select %26, %5, %27 : vector<4x256xi1>, vector<4x256xf32>
    %c0_12 = arith.constant 0 : index
    %c0_13 = arith.constant 0 : index
    %c0_14 = arith.constant 0 : index
    %29 = vector.load %arg4[%c0_12, %c0_13, %c0_14] : memref<9x24x4xf32, #tpu.memory_space<vmem>>, vector<1x24x4xf32>
    %30 = vector.shape_cast %29 : vector<1x24x4xf32> to vector<24x4xf32>
    %cst_15 = arith.constant dense<0.000000e+00> : vector<24x256xf32>
    %31 = tpu.matmul %30, %28, %cst_15 {dimension_numbers = #tpu.dot_dimension_numbers<[1], [0], [0], [1], [0, 0, 1, 1], [], []>} : vector<24x4xf32>, vector<4x256xf32>, vector<24x256xf32> -> vector<24x256xf32>
    %32 = arith.addf %4, %31 : vector<24x256xf32>
    %c16_i32_16 = arith.constant 16 : i32
    %33 = tpu.dynamic_rotate %3 by %c16_i32_16 dim 1 : vector<4x256xf32>, i32 -> vector<4x256xf32>
    %c-1_i32_17 = arith.constant -1 : i32
    %34 = vector.broadcast %c-1_i32_17 : i32 to vector<1x256xi32>
    %35 = arith.addi %0, %34 : vector<1x256xi32>
    %c0_i32_18 = arith.constant 0 : i32
    %36 = vector.broadcast %c0_i32_18 : i32 to vector<1x256xi32>
    %37 = arith.cmpi sge, %35, %36 : vector<1x256xi32>
    %c-1_i32_19 = arith.constant -1 : i32
    %38 = vector.broadcast %c-1_i32_19 : i32 to vector<1x256xi32>
    %39 = arith.addi %0, %38 : vector<1x256xi32>
    %c16_i32_20 = arith.constant 16 : i32
    %40 = vector.broadcast %c16_i32_20 : i32 to vector<1x256xi32>
    %41 = arith.cmpi slt, %39, %40 : vector<1x256xi32>
    %42 = arith.andi %37, %41 : vector<1x256xi1>
    %c0_i32_21 = arith.constant 0 : i32
    %43 = vector.broadcast %c0_i32_21 : i32 to vector<1x256xi32>
    %44 = arith.addi %1, %43 : vector<1x256xi32>
    %c0_i32_22 = arith.constant 0 : i32
    %45 = vector.broadcast %c0_i32_22 : i32 to vector<1x256xi32>
    %46 = arith.cmpi sge, %44, %45 : vector<1x256xi32>
    %47 = arith.andi %42, %46 : vector<1x256xi1>
    %c0_i32_23 = arith.constant 0 : i32
    %48 = vector.broadcast %c0_i32_23 : i32 to vector<1x256xi32>
    %49 = arith.addi %1, %48 : vector<1x256xi32>
    %c16_i32_24 = arith.constant 16 : i32
    %50 = vector.broadcast %c16_i32_24 : i32 to vector<1x256xi32>
    %51 = arith.cmpi slt, %49, %50 : vector<1x256xi32>
    %52 = arith.andi %47, %51 : vector<1x256xi1>
    %cst_25 = arith.constant 0.000000e+00 : f32
    %53 = vector.shape_cast %52 : vector<1x256xi1> to vector<1x256xi1>
    %54 = vector.broadcast %53 : vector<1x256xi1> to vector<4x256xi1>
    %55 = vector.broadcast %cst_25 : f32 to vector<4x256xf32>
    %56 = arith.select %54, %33, %55 : vector<4x256xi1>, vector<4x256xf32>
    %c1 = arith.constant 1 : index
    %c0_26 = arith.constant 0 : index
    %c0_27 = arith.constant 0 : index
    %57 = vector.load %arg4[%c1, %c0_26, %c0_27] : memref<9x24x4xf32, #tpu.memory_space<vmem>>, vector<1x24x4xf32>
    %58 = vector.shape_cast %57 : vector<1x24x4xf32> to vector<24x4xf32>
    %cst_28 = arith.constant dense<0.000000e+00> : vector<24x256xf32>
    %59 = tpu.matmul %58, %56, %cst_28 {dimension_numbers = #tpu.dot_dimension_numbers<[1], [0], [0], [1], [0, 0, 1, 1], [], []>} : vector<24x4xf32>, vector<4x256xf32>, vector<24x256xf32> -> vector<24x256xf32>
    %60 = arith.addf %32, %59 : vector<24x256xf32>
    %c15_i32 = arith.constant 15 : i32
    %61 = tpu.dynamic_rotate %3 by %c15_i32 dim 1 : vector<4x256xf32>, i32 -> vector<4x256xf32>
    %c-1_i32_29 = arith.constant -1 : i32
    %62 = vector.broadcast %c-1_i32_29 : i32 to vector<1x256xi32>
    %63 = arith.addi %0, %62 : vector<1x256xi32>
    %c0_i32_30 = arith.constant 0 : i32
    %64 = vector.broadcast %c0_i32_30 : i32 to vector<1x256xi32>
    %65 = arith.cmpi sge, %63, %64 : vector<1x256xi32>
    %c-1_i32_31 = arith.constant -1 : i32
    %66 = vector.broadcast %c-1_i32_31 : i32 to vector<1x256xi32>
    %67 = arith.addi %0, %66 : vector<1x256xi32>
    %c16_i32_32 = arith.constant 16 : i32
    %68 = vector.broadcast %c16_i32_32 : i32 to vector<1x256xi32>
    %69 = arith.cmpi slt, %67, %68 : vector<1x256xi32>
    %70 = arith.andi %65, %69 : vector<1x256xi1>
    %c1_i32 = arith.constant 1 : i32
    %71 = vector.broadcast %c1_i32 : i32 to vector<1x256xi32>
    %72 = arith.addi %1, %71 : vector<1x256xi32>
    %c0_i32_33 = arith.constant 0 : i32
    %73 = vector.broadcast %c0_i32_33 : i32 to vector<1x256xi32>
    %74 = arith.cmpi sge, %72, %73 : vector<1x256xi32>
    %75 = arith.andi %70, %74 : vector<1x256xi1>
    %c1_i32_34 = arith.constant 1 : i32
    %76 = vector.broadcast %c1_i32_34 : i32 to vector<1x256xi32>
    %77 = arith.addi %1, %76 : vector<1x256xi32>
    %c16_i32_35 = arith.constant 16 : i32
    %78 = vector.broadcast %c16_i32_35 : i32 to vector<1x256xi32>
    %79 = arith.cmpi slt, %77, %78 : vector<1x256xi32>
    %80 = arith.andi %75, %79 : vector<1x256xi1>
    %cst_36 = arith.constant 0.000000e+00 : f32
    %81 = vector.shape_cast %80 : vector<1x256xi1> to vector<1x256xi1>
    %82 = vector.broadcast %81 : vector<1x256xi1> to vector<4x256xi1>
    %83 = vector.broadcast %cst_36 : f32 to vector<4x256xf32>
    %84 = arith.select %82, %61, %83 : vector<4x256xi1>, vector<4x256xf32>
    %c2 = arith.constant 2 : index
    %c0_37 = arith.constant 0 : index
    %c0_38 = arith.constant 0 : index
    %85 = vector.load %arg4[%c2, %c0_37, %c0_38] : memref<9x24x4xf32, #tpu.memory_space<vmem>>, vector<1x24x4xf32>
    %86 = vector.shape_cast %85 : vector<1x24x4xf32> to vector<24x4xf32>
    %cst_39 = arith.constant dense<0.000000e+00> : vector<24x256xf32>
    %87 = tpu.matmul %86, %84, %cst_39 {dimension_numbers = #tpu.dot_dimension_numbers<[1], [0], [0], [1], [0, 0, 1, 1], [], []>} : vector<24x4xf32>, vector<4x256xf32>, vector<24x256xf32> -> vector<24x256xf32>
    %88 = arith.addf %60, %87 : vector<24x256xf32>
    %c1_i32_40 = arith.constant 1 : i32
    %89 = tpu.dynamic_rotate %3 by %c1_i32_40 dim 1 : vector<4x256xf32>, i32 -> vector<4x256xf32>
    %c0_i32_41 = arith.constant 0 : i32
    %90 = vector.broadcast %c0_i32_41 : i32 to vector<1x256xi32>
    %91 = arith.addi %0, %90 : vector<1x256xi32>
    %c0_i32_42 = arith.constant 0 : i32
    %92 = vector.broadcast %c0_i32_42 : i32 to vector<1x256xi32>
    %93 = arith.cmpi sge, %91, %92 : vector<1x256xi32>
    %c0_i32_43 = arith.constant 0 : i32
    %94 = vector.broadcast %c0_i32_43 : i32 to vector<1x256xi32>
    %95 = arith.addi %0, %94 : vector<1x256xi32>
    %c16_i32_44 = arith.constant 16 : i32
    %96 = vector.broadcast %c16_i32_44 : i32 to vector<1x256xi32>
    %97 = arith.cmpi slt, %95, %96 : vector<1x256xi32>
    %98 = arith.andi %93, %97 : vector<1x256xi1>
    %c-1_i32_45 = arith.constant -1 : i32
    %99 = vector.broadcast %c-1_i32_45 : i32 to vector<1x256xi32>
    %100 = arith.addi %1, %99 : vector<1x256xi32>
    %c0_i32_46 = arith.constant 0 : i32
    %101 = vector.broadcast %c0_i32_46 : i32 to vector<1x256xi32>
    %102 = arith.cmpi sge, %100, %101 : vector<1x256xi32>
    %103 = arith.andi %98, %102 : vector<1x256xi1>
    %c-1_i32_47 = arith.constant -1 : i32
    %104 = vector.broadcast %c-1_i32_47 : i32 to vector<1x256xi32>
    %105 = arith.addi %1, %104 : vector<1x256xi32>
    %c16_i32_48 = arith.constant 16 : i32
    %106 = vector.broadcast %c16_i32_48 : i32 to vector<1x256xi32>
    %107 = arith.cmpi slt, %105, %106 : vector<1x256xi32>
    %108 = arith.andi %103, %107 : vector<1x256xi1>
    %cst_49 = arith.constant 0.000000e+00 : f32
    %109 = vector.shape_cast %108 : vector<1x256xi1> to vector<1x256xi1>
    %110 = vector.broadcast %109 : vector<1x256xi1> to vector<4x256xi1>
    %111 = vector.broadcast %cst_49 : f32 to vector<4x256xf32>
    %112 = arith.select %110, %89, %111 : vector<4x256xi1>, vector<4x256xf32>
    %c3 = arith.constant 3 : index
    %c0_50 = arith.constant 0 : index
    %c0_51 = arith.constant 0 : index
    %113 = vector.load %arg4[%c3, %c0_50, %c0_51] : memref<9x24x4xf32, #tpu.memory_space<vmem>>, vector<1x24x4xf32>
    %114 = vector.shape_cast %113 : vector<1x24x4xf32> to vector<24x4xf32>
    %cst_52 = arith.constant dense<0.000000e+00> : vector<24x256xf32>
    %115 = tpu.matmul %114, %112, %cst_52 {dimension_numbers = #tpu.dot_dimension_numbers<[1], [0], [0], [1], [0, 0, 1, 1], [], []>} : vector<24x4xf32>, vector<4x256xf32>, vector<24x256xf32> -> vector<24x256xf32>
    %116 = arith.addf %88, %115 : vector<24x256xf32>
    %c4 = arith.constant 4 : index
    %c0_53 = arith.constant 0 : index
    %c0_54 = arith.constant 0 : index
    %117 = vector.load %arg4[%c4, %c0_53, %c0_54] : memref<9x24x4xf32, #tpu.memory_space<vmem>>, vector<1x24x4xf32>
    %118 = vector.shape_cast %117 : vector<1x24x4xf32> to vector<24x4xf32>
    %cst_55 = arith.constant dense<0.000000e+00> : vector<24x256xf32>
    %119 = tpu.matmul %118, %3, %cst_55 {dimension_numbers = #tpu.dot_dimension_numbers<[1], [0], [0], [1], [0, 0, 1, 1], [], []>} : vector<24x4xf32>, vector<4x256xf32>, vector<24x256xf32> -> vector<24x256xf32>
    %120 = arith.addf %116, %119 : vector<24x256xf32>
    %c255_i32 = arith.constant 255 : i32
    %121 = tpu.dynamic_rotate %3 by %c255_i32 dim 1 : vector<4x256xf32>, i32 -> vector<4x256xf32>
    %c0_i32_56 = arith.constant 0 : i32
    %122 = vector.broadcast %c0_i32_56 : i32 to vector<1x256xi32>
    %123 = arith.addi %0, %122 : vector<1x256xi32>
    %c0_i32_57 = arith.constant 0 : i32
    %124 = vector.broadcast %c0_i32_57 : i32 to vector<1x256xi32>
    %125 = arith.cmpi sge, %123, %124 : vector<1x256xi32>
    %c0_i32_58 = arith.constant 0 : i32
    %126 = vector.broadcast %c0_i32_58 : i32 to vector<1x256xi32>
    %127 = arith.addi %0, %126 : vector<1x256xi32>
    %c16_i32_59 = arith.constant 16 : i32
    %128 = vector.broadcast %c16_i32_59 : i32 to vector<1x256xi32>
    %129 = arith.cmpi slt, %127, %128 : vector<1x256xi32>
    %130 = arith.andi %125, %129 : vector<1x256xi1>
    %c1_i32_60 = arith.constant 1 : i32
    %131 = vector.broadcast %c1_i32_60 : i32 to vector<1x256xi32>
    %132 = arith.addi %1, %131 : vector<1x256xi32>
    %c0_i32_61 = arith.constant 0 : i32
    %133 = vector.broadcast %c0_i32_61 : i32 to vector<1x256xi32>
    %134 = arith.cmpi sge, %132, %133 : vector<1x256xi32>
    %135 = arith.andi %130, %134 : vector<1x256xi1>
    %c1_i32_62 = arith.constant 1 : i32
    %136 = vector.broadcast %c1_i32_62 : i32 to vector<1x256xi32>
    %137 = arith.addi %1, %136 : vector<1x256xi32>
    %c16_i32_63 = arith.constant 16 : i32
    %138 = vector.broadcast %c16_i32_63 : i32 to vector<1x256xi32>
    %139 = arith.cmpi slt, %137, %138 : vector<1x256xi32>
    %140 = arith.andi %135, %139 : vector<1x256xi1>
    %cst_64 = arith.constant 0.000000e+00 : f32
    %141 = vector.shape_cast %140 : vector<1x256xi1> to vector<1x256xi1>
    %142 = vector.broadcast %141 : vector<1x256xi1> to vector<4x256xi1>
    %143 = vector.broadcast %cst_64 : f32 to vector<4x256xf32>
    %144 = arith.select %142, %121, %143 : vector<4x256xi1>, vector<4x256xf32>
    %c5 = arith.constant 5 : index
    %c0_65 = arith.constant 0 : index
    %c0_66 = arith.constant 0 : index
    %145 = vector.load %arg4[%c5, %c0_65, %c0_66] : memref<9x24x4xf32, #tpu.memory_space<vmem>>, vector<1x24x4xf32>
    %146 = vector.shape_cast %145 : vector<1x24x4xf32> to vector<24x4xf32>
    %cst_67 = arith.constant dense<0.000000e+00> : vector<24x256xf32>
    %147 = tpu.matmul %146, %144, %cst_67 {dimension_numbers = #tpu.dot_dimension_numbers<[1], [0], [0], [1], [0, 0, 1, 1], [], []>} : vector<24x4xf32>, vector<4x256xf32>, vector<24x256xf32> -> vector<24x256xf32>
    %148 = arith.addf %120, %147 : vector<24x256xf32>
    %c241_i32 = arith.constant 241 : i32
    %149 = tpu.dynamic_rotate %3 by %c241_i32 dim 1 : vector<4x256xf32>, i32 -> vector<4x256xf32>
    %c1_i32_68 = arith.constant 1 : i32
    %150 = vector.broadcast %c1_i32_68 : i32 to vector<1x256xi32>
    %151 = arith.addi %0, %150 : vector<1x256xi32>
    %c0_i32_69 = arith.constant 0 : i32
    %152 = vector.broadcast %c0_i32_69 : i32 to vector<1x256xi32>
    %153 = arith.cmpi sge, %151, %152 : vector<1x256xi32>
    %c1_i32_70 = arith.constant 1 : i32
    %154 = vector.broadcast %c1_i32_70 : i32 to vector<1x256xi32>
    %155 = arith.addi %0, %154 : vector<1x256xi32>
    %c16_i32_71 = arith.constant 16 : i32
    %156 = vector.broadcast %c16_i32_71 : i32 to vector<1x256xi32>
    %157 = arith.cmpi slt, %155, %156 : vector<1x256xi32>
    %158 = arith.andi %153, %157 : vector<1x256xi1>
    %c-1_i32_72 = arith.constant -1 : i32
    %159 = vector.broadcast %c-1_i32_72 : i32 to vector<1x256xi32>
    %160 = arith.addi %1, %159 : vector<1x256xi32>
    %c0_i32_73 = arith.constant 0 : i32
    %161 = vector.broadcast %c0_i32_73 : i32 to vector<1x256xi32>
    %162 = arith.cmpi sge, %160, %161 : vector<1x256xi32>
    %163 = arith.andi %158, %162 : vector<1x256xi1>
    %c-1_i32_74 = arith.constant -1 : i32
    %164 = vector.broadcast %c-1_i32_74 : i32 to vector<1x256xi32>
    %165 = arith.addi %1, %164 : vector<1x256xi32>
    %c16_i32_75 = arith.constant 16 : i32
    %166 = vector.broadcast %c16_i32_75 : i32 to vector<1x256xi32>
    %167 = arith.cmpi slt, %165, %166 : vector<1x256xi32>
    %168 = arith.andi %163, %167 : vector<1x256xi1>
    %cst_76 = arith.constant 0.000000e+00 : f32
    %169 = vector.shape_cast %168 : vector<1x256xi1> to vector<1x256xi1>
    %170 = vector.broadcast %169 : vector<1x256xi1> to vector<4x256xi1>
    %171 = vector.broadcast %cst_76 : f32 to vector<4x256xf32>
    %172 = arith.select %170, %149, %171 : vector<4x256xi1>, vector<4x256xf32>
    %c6 = arith.constant 6 : index
    %c0_77 = arith.constant 0 : index
    %c0_78 = arith.constant 0 : index
    %173 = vector.load %arg4[%c6, %c0_77, %c0_78] : memref<9x24x4xf32, #tpu.memory_space<vmem>>, vector<1x24x4xf32>
    %174 = vector.shape_cast %173 : vector<1x24x4xf32> to vector<24x4xf32>
    %cst_79 = arith.constant dense<0.000000e+00> : vector<24x256xf32>
    %175 = tpu.matmul %174, %172, %cst_79 {dimension_numbers = #tpu.dot_dimension_numbers<[1], [0], [0], [1], [0, 0, 1, 1], [], []>} : vector<24x4xf32>, vector<4x256xf32>, vector<24x256xf32> -> vector<24x256xf32>
    %176 = arith.addf %148, %175 : vector<24x256xf32>
    %c240_i32 = arith.constant 240 : i32
    %177 = tpu.dynamic_rotate %3 by %c240_i32 dim 1 : vector<4x256xf32>, i32 -> vector<4x256xf32>
    %c1_i32_80 = arith.constant 1 : i32
    %178 = vector.broadcast %c1_i32_80 : i32 to vector<1x256xi32>
    %179 = arith.addi %0, %178 : vector<1x256xi32>
    %c0_i32_81 = arith.constant 0 : i32
    %180 = vector.broadcast %c0_i32_81 : i32 to vector<1x256xi32>
    %181 = arith.cmpi sge, %179, %180 : vector<1x256xi32>
    %c1_i32_82 = arith.constant 1 : i32
    %182 = vector.broadcast %c1_i32_82 : i32 to vector<1x256xi32>
    %183 = arith.addi %0, %182 : vector<1x256xi32>
    %c16_i32_83 = arith.constant 16 : i32
    %184 = vector.broadcast %c16_i32_83 : i32 to vector<1x256xi32>
    %185 = arith.cmpi slt, %183, %184 : vector<1x256xi32>
    %186 = arith.andi %181, %185 : vector<1x256xi1>
    %c0_i32_84 = arith.constant 0 : i32
    %187 = vector.broadcast %c0_i32_84 : i32 to vector<1x256xi32>
    %188 = arith.addi %1, %187 : vector<1x256xi32>
    %c0_i32_85 = arith.constant 0 : i32
    %189 = vector.broadcast %c0_i32_85 : i32 to vector<1x256xi32>
    %190 = arith.cmpi sge, %188, %189 : vector<1x256xi32>
    %191 = arith.andi %186, %190 : vector<1x256xi1>
    %c0_i32_86 = arith.constant 0 : i32
    %192 = vector.broadcast %c0_i32_86 : i32 to vector<1x256xi32>
    %193 = arith.addi %1, %192 : vector<1x256xi32>
    %c16_i32_87 = arith.constant 16 : i32
    %194 = vector.broadcast %c16_i32_87 : i32 to vector<1x256xi32>
    %195 = arith.cmpi slt, %193, %194 : vector<1x256xi32>
    %196 = arith.andi %191, %195 : vector<1x256xi1>
    %cst_88 = arith.constant 0.000000e+00 : f32
    %197 = vector.shape_cast %196 : vector<1x256xi1> to vector<1x256xi1>
    %198 = vector.broadcast %197 : vector<1x256xi1> to vector<4x256xi1>
    %199 = vector.broadcast %cst_88 : f32 to vector<4x256xf32>
    %200 = arith.select %198, %177, %199 : vector<4x256xi1>, vector<4x256xf32>
    %c7 = arith.constant 7 : index
    %c0_89 = arith.constant 0 : index
    %c0_90 = arith.constant 0 : index
    %201 = vector.load %arg4[%c7, %c0_89, %c0_90] : memref<9x24x4xf32, #tpu.memory_space<vmem>>, vector<1x24x4xf32>
    %202 = vector.shape_cast %201 : vector<1x24x4xf32> to vector<24x4xf32>
    %cst_91 = arith.constant dense<0.000000e+00> : vector<24x256xf32>
    %203 = tpu.matmul %202, %200, %cst_91 {dimension_numbers = #tpu.dot_dimension_numbers<[1], [0], [0], [1], [0, 0, 1, 1], [], []>} : vector<24x4xf32>, vector<4x256xf32>, vector<24x256xf32> -> vector<24x256xf32>
    %204 = arith.addf %176, %203 : vector<24x256xf32>
    %c239_i32 = arith.constant 239 : i32
    %205 = tpu.dynamic_rotate %3 by %c239_i32 dim 1 : vector<4x256xf32>, i32 -> vector<4x256xf32>
    %c1_i32_92 = arith.constant 1 : i32
    %206 = vector.broadcast %c1_i32_92 : i32 to vector<1x256xi32>
    %207 = arith.addi %0, %206 : vector<1x256xi32>
    %c0_i32_93 = arith.constant 0 : i32
    %208 = vector.broadcast %c0_i32_93 : i32 to vector<1x256xi32>
    %209 = arith.cmpi sge, %207, %208 : vector<1x256xi32>
    %c1_i32_94 = arith.constant 1 : i32
    %210 = vector.broadcast %c1_i32_94 : i32 to vector<1x256xi32>
    %211 = arith.addi %0, %210 : vector<1x256xi32>
    %c16_i32_95 = arith.constant 16 : i32
    %212 = vector.broadcast %c16_i32_95 : i32 to vector<1x256xi32>
    %213 = arith.cmpi slt, %211, %212 : vector<1x256xi32>
    %214 = arith.andi %209, %213 : vector<1x256xi1>
    %c1_i32_96 = arith.constant 1 : i32
    %215 = vector.broadcast %c1_i32_96 : i32 to vector<1x256xi32>
    %216 = arith.addi %1, %215 : vector<1x256xi32>
    %c0_i32_97 = arith.constant 0 : i32
    %217 = vector.broadcast %c0_i32_97 : i32 to vector<1x256xi32>
    %218 = arith.cmpi sge, %216, %217 : vector<1x256xi32>
    %219 = arith.andi %214, %218 : vector<1x256xi1>
    %c1_i32_98 = arith.constant 1 : i32
    %220 = vector.broadcast %c1_i32_98 : i32 to vector<1x256xi32>
    %221 = arith.addi %1, %220 : vector<1x256xi32>
    %c16_i32_99 = arith.constant 16 : i32
    %222 = vector.broadcast %c16_i32_99 : i32 to vector<1x256xi32>
    %223 = arith.cmpi slt, %221, %222 : vector<1x256xi32>
    %224 = arith.andi %219, %223 : vector<1x256xi1>
    %cst_100 = arith.constant 0.000000e+00 : f32
    %225 = vector.shape_cast %224 : vector<1x256xi1> to vector<1x256xi1>
    %226 = vector.broadcast %225 : vector<1x256xi1> to vector<4x256xi1>
    %227 = vector.broadcast %cst_100 : f32 to vector<4x256xf32>
    %228 = arith.select %226, %205, %227 : vector<4x256xi1>, vector<4x256xf32>
    %c8 = arith.constant 8 : index
    %c0_101 = arith.constant 0 : index
    %c0_102 = arith.constant 0 : index
    %229 = vector.load %arg4[%c8, %c0_101, %c0_102] : memref<9x24x4xf32, #tpu.memory_space<vmem>>, vector<1x24x4xf32>
    %230 = vector.shape_cast %229 : vector<1x24x4xf32> to vector<24x4xf32>
    %cst_103 = arith.constant dense<0.000000e+00> : vector<24x256xf32>
    %231 = tpu.matmul %230, %228, %cst_103 {dimension_numbers = #tpu.dot_dimension_numbers<[1], [0], [0], [1], [0, 0, 1, 1], [], []>} : vector<24x4xf32>, vector<4x256xf32>, vector<24x256xf32> -> vector<24x256xf32>
    %232 = arith.addf %204, %231 : vector<24x256xf32>
    %c0_104 = arith.constant 0 : index
    %c0_105 = arith.constant 0 : index
    %233 = vector.load %arg5[%c0_104, %c0_105] : memref<24x1xf32, #tpu.memory_space<vmem>>, vector<24x1xf32>
    %234 = vector.broadcast %233 : vector<24x1xf32> to vector<24x256xf32>
    %235 = arith.addf %232, %234 : vector<24x256xf32>
    %cst_106 = arith.constant 0.000000e+00 : f32
    %236 = vector.broadcast %cst_106 : f32 to vector<24x256xf32>
    %237 = arith.maximumf %235, %236 : vector<24x256xf32>
    %cst_107 = arith.constant 0.000000e+00 : f32
    %238 = vector.broadcast %cst_107 : f32 to vector<16x256xf32>
    %c17_i32_108 = arith.constant 17 : i32
    %239 = tpu.dynamic_rotate %237 by %c17_i32_108 dim 1 : vector<24x256xf32>, i32 -> vector<24x256xf32>
    %c-1_i32_109 = arith.constant -1 : i32
    %240 = vector.broadcast %c-1_i32_109 : i32 to vector<1x256xi32>
    %241 = arith.addi %0, %240 : vector<1x256xi32>
    %c0_i32_110 = arith.constant 0 : i32
    %242 = vector.broadcast %c0_i32_110 : i32 to vector<1x256xi32>
    %243 = arith.cmpi sge, %241, %242 : vector<1x256xi32>
    %c-1_i32_111 = arith.constant -1 : i32
    %244 = vector.broadcast %c-1_i32_111 : i32 to vector<1x256xi32>
    %245 = arith.addi %0, %244 : vector<1x256xi32>
    %c16_i32_112 = arith.constant 16 : i32
    %246 = vector.broadcast %c16_i32_112 : i32 to vector<1x256xi32>
    %247 = arith.cmpi slt, %245, %246 : vector<1x256xi32>
    %248 = arith.andi %243, %247 : vector<1x256xi1>
    %c-1_i32_113 = arith.constant -1 : i32
    %249 = vector.broadcast %c-1_i32_113 : i32 to vector<1x256xi32>
    %250 = arith.addi %1, %249 : vector<1x256xi32>
    %c0_i32_114 = arith.constant 0 : i32
    %251 = vector.broadcast %c0_i32_114 : i32 to vector<1x256xi32>
    %252 = arith.cmpi sge, %250, %251 : vector<1x256xi32>
    %253 = arith.andi %248, %252 : vector<1x256xi1>
    %c-1_i32_115 = arith.constant -1 : i32
    %254 = vector.broadcast %c-1_i32_115 : i32 to vector<1x256xi32>
    %255 = arith.addi %1, %254 : vector<1x256xi32>
    %c16_i32_116 = arith.constant 16 : i32
    %256 = vector.broadcast %c16_i32_116 : i32 to vector<1x256xi32>
    %257 = arith.cmpi slt, %255, %256 : vector<1x256xi32>
    %258 = arith.andi %253, %257 : vector<1x256xi1>
    %cst_117 = arith.constant 0.000000e+00 : f32
    %259 = vector.shape_cast %258 : vector<1x256xi1> to vector<1x256xi1>
    %260 = vector.broadcast %259 : vector<1x256xi1> to vector<24x256xi1>
    %261 = vector.broadcast %cst_117 : f32 to vector<24x256xf32>
    %262 = arith.select %260, %239, %261 : vector<24x256xi1>, vector<24x256xf32>
    %c0_118 = arith.constant 0 : index
    %c0_119 = arith.constant 0 : index
    %c0_120 = arith.constant 0 : index
    %263 = vector.load %arg6[%c0_118, %c0_119, %c0_120] : memref<9x16x24xf32, #tpu.memory_space<vmem>>, vector<1x16x24xf32>
    %264 = vector.shape_cast %263 : vector<1x16x24xf32> to vector<16x24xf32>
    %cst_121 = arith.constant dense<0.000000e+00> : vector<16x256xf32>
    %265 = tpu.matmul %264, %262, %cst_121 {dimension_numbers = #tpu.dot_dimension_numbers<[1], [0], [0], [1], [0, 0, 1, 1], [], []>} : vector<16x24xf32>, vector<24x256xf32>, vector<16x256xf32> -> vector<16x256xf32>
    %266 = arith.addf %238, %265 : vector<16x256xf32>
    %c16_i32_122 = arith.constant 16 : i32
    %267 = tpu.dynamic_rotate %237 by %c16_i32_122 dim 1 : vector<24x256xf32>, i32 -> vector<24x256xf32>
    %c-1_i32_123 = arith.constant -1 : i32
    %268 = vector.broadcast %c-1_i32_123 : i32 to vector<1x256xi32>
    %269 = arith.addi %0, %268 : vector<1x256xi32>
    %c0_i32_124 = arith.constant 0 : i32
    %270 = vector.broadcast %c0_i32_124 : i32 to vector<1x256xi32>
    %271 = arith.cmpi sge, %269, %270 : vector<1x256xi32>
    %c-1_i32_125 = arith.constant -1 : i32
    %272 = vector.broadcast %c-1_i32_125 : i32 to vector<1x256xi32>
    %273 = arith.addi %0, %272 : vector<1x256xi32>
    %c16_i32_126 = arith.constant 16 : i32
    %274 = vector.broadcast %c16_i32_126 : i32 to vector<1x256xi32>
    %275 = arith.cmpi slt, %273, %274 : vector<1x256xi32>
    %276 = arith.andi %271, %275 : vector<1x256xi1>
    %c0_i32_127 = arith.constant 0 : i32
    %277 = vector.broadcast %c0_i32_127 : i32 to vector<1x256xi32>
    %278 = arith.addi %1, %277 : vector<1x256xi32>
    %c0_i32_128 = arith.constant 0 : i32
    %279 = vector.broadcast %c0_i32_128 : i32 to vector<1x256xi32>
    %280 = arith.cmpi sge, %278, %279 : vector<1x256xi32>
    %281 = arith.andi %276, %280 : vector<1x256xi1>
    %c0_i32_129 = arith.constant 0 : i32
    %282 = vector.broadcast %c0_i32_129 : i32 to vector<1x256xi32>
    %283 = arith.addi %1, %282 : vector<1x256xi32>
    %c16_i32_130 = arith.constant 16 : i32
    %284 = vector.broadcast %c16_i32_130 : i32 to vector<1x256xi32>
    %285 = arith.cmpi slt, %283, %284 : vector<1x256xi32>
    %286 = arith.andi %281, %285 : vector<1x256xi1>
    %cst_131 = arith.constant 0.000000e+00 : f32
    %287 = vector.shape_cast %286 : vector<1x256xi1> to vector<1x256xi1>
    %288 = vector.broadcast %287 : vector<1x256xi1> to vector<24x256xi1>
    %289 = vector.broadcast %cst_131 : f32 to vector<24x256xf32>
    %290 = arith.select %288, %267, %289 : vector<24x256xi1>, vector<24x256xf32>
    %c1_132 = arith.constant 1 : index
    %c0_133 = arith.constant 0 : index
    %c0_134 = arith.constant 0 : index
    %291 = vector.load %arg6[%c1_132, %c0_133, %c0_134] : memref<9x16x24xf32, #tpu.memory_space<vmem>>, vector<1x16x24xf32>
    %292 = vector.shape_cast %291 : vector<1x16x24xf32> to vector<16x24xf32>
    %cst_135 = arith.constant dense<0.000000e+00> : vector<16x256xf32>
    %293 = tpu.matmul %292, %290, %cst_135 {dimension_numbers = #tpu.dot_dimension_numbers<[1], [0], [0], [1], [0, 0, 1, 1], [], []>} : vector<16x24xf32>, vector<24x256xf32>, vector<16x256xf32> -> vector<16x256xf32>
    %294 = arith.addf %266, %293 : vector<16x256xf32>
    %c15_i32_136 = arith.constant 15 : i32
    %295 = tpu.dynamic_rotate %237 by %c15_i32_136 dim 1 : vector<24x256xf32>, i32 -> vector<24x256xf32>
    %c-1_i32_137 = arith.constant -1 : i32
    %296 = vector.broadcast %c-1_i32_137 : i32 to vector<1x256xi32>
    %297 = arith.addi %0, %296 : vector<1x256xi32>
    %c0_i32_138 = arith.constant 0 : i32
    %298 = vector.broadcast %c0_i32_138 : i32 to vector<1x256xi32>
    %299 = arith.cmpi sge, %297, %298 : vector<1x256xi32>
    %c-1_i32_139 = arith.constant -1 : i32
    %300 = vector.broadcast %c-1_i32_139 : i32 to vector<1x256xi32>
    %301 = arith.addi %0, %300 : vector<1x256xi32>
    %c16_i32_140 = arith.constant 16 : i32
    %302 = vector.broadcast %c16_i32_140 : i32 to vector<1x256xi32>
    %303 = arith.cmpi slt, %301, %302 : vector<1x256xi32>
    %304 = arith.andi %299, %303 : vector<1x256xi1>
    %c1_i32_141 = arith.constant 1 : i32
    %305 = vector.broadcast %c1_i32_141 : i32 to vector<1x256xi32>
    %306 = arith.addi %1, %305 : vector<1x256xi32>
    %c0_i32_142 = arith.constant 0 : i32
    %307 = vector.broadcast %c0_i32_142 : i32 to vector<1x256xi32>
    %308 = arith.cmpi sge, %306, %307 : vector<1x256xi32>
    %309 = arith.andi %304, %308 : vector<1x256xi1>
    %c1_i32_143 = arith.constant 1 : i32
    %310 = vector.broadcast %c1_i32_143 : i32 to vector<1x256xi32>
    %311 = arith.addi %1, %310 : vector<1x256xi32>
    %c16_i32_144 = arith.constant 16 : i32
    %312 = vector.broadcast %c16_i32_144 : i32 to vector<1x256xi32>
    %313 = arith.cmpi slt, %311, %312 : vector<1x256xi32>
    %314 = arith.andi %309, %313 : vector<1x256xi1>
    %cst_145 = arith.constant 0.000000e+00 : f32
    %315 = vector.shape_cast %314 : vector<1x256xi1> to vector<1x256xi1>
    %316 = vector.broadcast %315 : vector<1x256xi1> to vector<24x256xi1>
    %317 = vector.broadcast %cst_145 : f32 to vector<24x256xf32>
    %318 = arith.select %316, %295, %317 : vector<24x256xi1>, vector<24x256xf32>
    %c2_146 = arith.constant 2 : index
    %c0_147 = arith.constant 0 : index
    %c0_148 = arith.constant 0 : index
    %319 = vector.load %arg6[%c2_146, %c0_147, %c0_148] : memref<9x16x24xf32, #tpu.memory_space<vmem>>, vector<1x16x24xf32>
    %320 = vector.shape_cast %319 : vector<1x16x24xf32> to vector<16x24xf32>
    %cst_149 = arith.constant dense<0.000000e+00> : vector<16x256xf32>
    %321 = tpu.matmul %320, %318, %cst_149 {dimension_numbers = #tpu.dot_dimension_numbers<[1], [0], [0], [1], [0, 0, 1, 1], [], []>} : vector<16x24xf32>, vector<24x256xf32>, vector<16x256xf32> -> vector<16x256xf32>
    %322 = arith.addf %294, %321 : vector<16x256xf32>
    %c1_i32_150 = arith.constant 1 : i32
    %323 = tpu.dynamic_rotate %237 by %c1_i32_150 dim 1 : vector<24x256xf32>, i32 -> vector<24x256xf32>
    %c0_i32_151 = arith.constant 0 : i32
    %324 = vector.broadcast %c0_i32_151 : i32 to vector<1x256xi32>
    %325 = arith.addi %0, %324 : vector<1x256xi32>
    %c0_i32_152 = arith.constant 0 : i32
    %326 = vector.broadcast %c0_i32_152 : i32 to vector<1x256xi32>
    %327 = arith.cmpi sge, %325, %326 : vector<1x256xi32>
    %c0_i32_153 = arith.constant 0 : i32
    %328 = vector.broadcast %c0_i32_153 : i32 to vector<1x256xi32>
    %329 = arith.addi %0, %328 : vector<1x256xi32>
    %c16_i32_154 = arith.constant 16 : i32
    %330 = vector.broadcast %c16_i32_154 : i32 to vector<1x256xi32>
    %331 = arith.cmpi slt, %329, %330 : vector<1x256xi32>
    %332 = arith.andi %327, %331 : vector<1x256xi1>
    %c-1_i32_155 = arith.constant -1 : i32
    %333 = vector.broadcast %c-1_i32_155 : i32 to vector<1x256xi32>
    %334 = arith.addi %1, %333 : vector<1x256xi32>
    %c0_i32_156 = arith.constant 0 : i32
    %335 = vector.broadcast %c0_i32_156 : i32 to vector<1x256xi32>
    %336 = arith.cmpi sge, %334, %335 : vector<1x256xi32>
    %337 = arith.andi %332, %336 : vector<1x256xi1>
    %c-1_i32_157 = arith.constant -1 : i32
    %338 = vector.broadcast %c-1_i32_157 : i32 to vector<1x256xi32>
    %339 = arith.addi %1, %338 : vector<1x256xi32>
    %c16_i32_158 = arith.constant 16 : i32
    %340 = vector.broadcast %c16_i32_158 : i32 to vector<1x256xi32>
    %341 = arith.cmpi slt, %339, %340 : vector<1x256xi32>
    %342 = arith.andi %337, %341 : vector<1x256xi1>
    %cst_159 = arith.constant 0.000000e+00 : f32
    %343 = vector.shape_cast %342 : vector<1x256xi1> to vector<1x256xi1>
    %344 = vector.broadcast %343 : vector<1x256xi1> to vector<24x256xi1>
    %345 = vector.broadcast %cst_159 : f32 to vector<24x256xf32>
    %346 = arith.select %344, %323, %345 : vector<24x256xi1>, vector<24x256xf32>
    %c3_160 = arith.constant 3 : index
    %c0_161 = arith.constant 0 : index
    %c0_162 = arith.constant 0 : index
    %347 = vector.load %arg6[%c3_160, %c0_161, %c0_162] : memref<9x16x24xf32, #tpu.memory_space<vmem>>, vector<1x16x24xf32>
    %348 = vector.shape_cast %347 : vector<1x16x24xf32> to vector<16x24xf32>
    %cst_163 = arith.constant dense<0.000000e+00> : vector<16x256xf32>
    %349 = tpu.matmul %348, %346, %cst_163 {dimension_numbers = #tpu.dot_dimension_numbers<[1], [0], [0], [1], [0, 0, 1, 1], [], []>} : vector<16x24xf32>, vector<24x256xf32>, vector<16x256xf32> -> vector<16x256xf32>
    %350 = arith.addf %322, %349 : vector<16x256xf32>
    %c4_164 = arith.constant 4 : index
    %c0_165 = arith.constant 0 : index
    %c0_166 = arith.constant 0 : index
    %351 = vector.load %arg6[%c4_164, %c0_165, %c0_166] : memref<9x16x24xf32, #tpu.memory_space<vmem>>, vector<1x16x24xf32>
    %352 = vector.shape_cast %351 : vector<1x16x24xf32> to vector<16x24xf32>
    %cst_167 = arith.constant dense<0.000000e+00> : vector<16x256xf32>
    %353 = tpu.matmul %352, %237, %cst_167 {dimension_numbers = #tpu.dot_dimension_numbers<[1], [0], [0], [1], [0, 0, 1, 1], [], []>} : vector<16x24xf32>, vector<24x256xf32>, vector<16x256xf32> -> vector<16x256xf32>
    %354 = arith.addf %350, %353 : vector<16x256xf32>
    %c255_i32_168 = arith.constant 255 : i32
    %355 = tpu.dynamic_rotate %237 by %c255_i32_168 dim 1 : vector<24x256xf32>, i32 -> vector<24x256xf32>
    %c0_i32_169 = arith.constant 0 : i32
    %356 = vector.broadcast %c0_i32_169 : i32 to vector<1x256xi32>
    %357 = arith.addi %0, %356 : vector<1x256xi32>
    %c0_i32_170 = arith.constant 0 : i32
    %358 = vector.broadcast %c0_i32_170 : i32 to vector<1x256xi32>
    %359 = arith.cmpi sge, %357, %358 : vector<1x256xi32>
    %c0_i32_171 = arith.constant 0 : i32
    %360 = vector.broadcast %c0_i32_171 : i32 to vector<1x256xi32>
    %361 = arith.addi %0, %360 : vector<1x256xi32>
    %c16_i32_172 = arith.constant 16 : i32
    %362 = vector.broadcast %c16_i32_172 : i32 to vector<1x256xi32>
    %363 = arith.cmpi slt, %361, %362 : vector<1x256xi32>
    %364 = arith.andi %359, %363 : vector<1x256xi1>
    %c1_i32_173 = arith.constant 1 : i32
    %365 = vector.broadcast %c1_i32_173 : i32 to vector<1x256xi32>
    %366 = arith.addi %1, %365 : vector<1x256xi32>
    %c0_i32_174 = arith.constant 0 : i32
    %367 = vector.broadcast %c0_i32_174 : i32 to vector<1x256xi32>
    %368 = arith.cmpi sge, %366, %367 : vector<1x256xi32>
    %369 = arith.andi %364, %368 : vector<1x256xi1>
    %c1_i32_175 = arith.constant 1 : i32
    %370 = vector.broadcast %c1_i32_175 : i32 to vector<1x256xi32>
    %371 = arith.addi %1, %370 : vector<1x256xi32>
    %c16_i32_176 = arith.constant 16 : i32
    %372 = vector.broadcast %c16_i32_176 : i32 to vector<1x256xi32>
    %373 = arith.cmpi slt, %371, %372 : vector<1x256xi32>
    %374 = arith.andi %369, %373 : vector<1x256xi1>
    %cst_177 = arith.constant 0.000000e+00 : f32
    %375 = vector.shape_cast %374 : vector<1x256xi1> to vector<1x256xi1>
    %376 = vector.broadcast %375 : vector<1x256xi1> to vector<24x256xi1>
    %377 = vector.broadcast %cst_177 : f32 to vector<24x256xf32>
    %378 = arith.select %376, %355, %377 : vector<24x256xi1>, vector<24x256xf32>
    %c5_178 = arith.constant 5 : index
    %c0_179 = arith.constant 0 : index
    %c0_180 = arith.constant 0 : index
    %379 = vector.load %arg6[%c5_178, %c0_179, %c0_180] : memref<9x16x24xf32, #tpu.memory_space<vmem>>, vector<1x16x24xf32>
    %380 = vector.shape_cast %379 : vector<1x16x24xf32> to vector<16x24xf32>
    %cst_181 = arith.constant dense<0.000000e+00> : vector<16x256xf32>
    %381 = tpu.matmul %380, %378, %cst_181 {dimension_numbers = #tpu.dot_dimension_numbers<[1], [0], [0], [1], [0, 0, 1, 1], [], []>} : vector<16x24xf32>, vector<24x256xf32>, vector<16x256xf32> -> vector<16x256xf32>
    %382 = arith.addf %354, %381 : vector<16x256xf32>
    %c241_i32_182 = arith.constant 241 : i32
    %383 = tpu.dynamic_rotate %237 by %c241_i32_182 dim 1 : vector<24x256xf32>, i32 -> vector<24x256xf32>
    %c1_i32_183 = arith.constant 1 : i32
    %384 = vector.broadcast %c1_i32_183 : i32 to vector<1x256xi32>
    %385 = arith.addi %0, %384 : vector<1x256xi32>
    %c0_i32_184 = arith.constant 0 : i32
    %386 = vector.broadcast %c0_i32_184 : i32 to vector<1x256xi32>
    %387 = arith.cmpi sge, %385, %386 : vector<1x256xi32>
    %c1_i32_185 = arith.constant 1 : i32
    %388 = vector.broadcast %c1_i32_185 : i32 to vector<1x256xi32>
    %389 = arith.addi %0, %388 : vector<1x256xi32>
    %c16_i32_186 = arith.constant 16 : i32
    %390 = vector.broadcast %c16_i32_186 : i32 to vector<1x256xi32>
    %391 = arith.cmpi slt, %389, %390 : vector<1x256xi32>
    %392 = arith.andi %387, %391 : vector<1x256xi1>
    %c-1_i32_187 = arith.constant -1 : i32
    %393 = vector.broadcast %c-1_i32_187 : i32 to vector<1x256xi32>
    %394 = arith.addi %1, %393 : vector<1x256xi32>
    %c0_i32_188 = arith.constant 0 : i32
    %395 = vector.broadcast %c0_i32_188 : i32 to vector<1x256xi32>
    %396 = arith.cmpi sge, %394, %395 : vector<1x256xi32>
    %397 = arith.andi %392, %396 : vector<1x256xi1>
    %c-1_i32_189 = arith.constant -1 : i32
    %398 = vector.broadcast %c-1_i32_189 : i32 to vector<1x256xi32>
    %399 = arith.addi %1, %398 : vector<1x256xi32>
    %c16_i32_190 = arith.constant 16 : i32
    %400 = vector.broadcast %c16_i32_190 : i32 to vector<1x256xi32>
    %401 = arith.cmpi slt, %399, %400 : vector<1x256xi32>
    %402 = arith.andi %397, %401 : vector<1x256xi1>
    %cst_191 = arith.constant 0.000000e+00 : f32
    %403 = vector.shape_cast %402 : vector<1x256xi1> to vector<1x256xi1>
    %404 = vector.broadcast %403 : vector<1x256xi1> to vector<24x256xi1>
    %405 = vector.broadcast %cst_191 : f32 to vector<24x256xf32>
    %406 = arith.select %404, %383, %405 : vector<24x256xi1>, vector<24x256xf32>
    %c6_192 = arith.constant 6 : index
    %c0_193 = arith.constant 0 : index
    %c0_194 = arith.constant 0 : index
    %407 = vector.load %arg6[%c6_192, %c0_193, %c0_194] : memref<9x16x24xf32, #tpu.memory_space<vmem>>, vector<1x16x24xf32>
    %408 = vector.shape_cast %407 : vector<1x16x24xf32> to vector<16x24xf32>
    %cst_195 = arith.constant dense<0.000000e+00> : vector<16x256xf32>
    %409 = tpu.matmul %408, %406, %cst_195 {dimension_numbers = #tpu.dot_dimension_numbers<[1], [0], [0], [1], [0, 0, 1, 1], [], []>} : vector<16x24xf32>, vector<24x256xf32>, vector<16x256xf32> -> vector<16x256xf32>
    %410 = arith.addf %382, %409 : vector<16x256xf32>
    %c240_i32_196 = arith.constant 240 : i32
    %411 = tpu.dynamic_rotate %237 by %c240_i32_196 dim 1 : vector<24x256xf32>, i32 -> vector<24x256xf32>
    %c1_i32_197 = arith.constant 1 : i32
    %412 = vector.broadcast %c1_i32_197 : i32 to vector<1x256xi32>
    %413 = arith.addi %0, %412 : vector<1x256xi32>
    %c0_i32_198 = arith.constant 0 : i32
    %414 = vector.broadcast %c0_i32_198 : i32 to vector<1x256xi32>
    %415 = arith.cmpi sge, %413, %414 : vector<1x256xi32>
    %c1_i32_199 = arith.constant 1 : i32
    %416 = vector.broadcast %c1_i32_199 : i32 to vector<1x256xi32>
    %417 = arith.addi %0, %416 : vector<1x256xi32>
    %c16_i32_200 = arith.constant 16 : i32
    %418 = vector.broadcast %c16_i32_200 : i32 to vector<1x256xi32>
    %419 = arith.cmpi slt, %417, %418 : vector<1x256xi32>
    %420 = arith.andi %415, %419 : vector<1x256xi1>
    %c0_i32_201 = arith.constant 0 : i32
    %421 = vector.broadcast %c0_i32_201 : i32 to vector<1x256xi32>
    %422 = arith.addi %1, %421 : vector<1x256xi32>
    %c0_i32_202 = arith.constant 0 : i32
    %423 = vector.broadcast %c0_i32_202 : i32 to vector<1x256xi32>
    %424 = arith.cmpi sge, %422, %423 : vector<1x256xi32>
    %425 = arith.andi %420, %424 : vector<1x256xi1>
    %c0_i32_203 = arith.constant 0 : i32
    %426 = vector.broadcast %c0_i32_203 : i32 to vector<1x256xi32>
    %427 = arith.addi %1, %426 : vector<1x256xi32>
    %c16_i32_204 = arith.constant 16 : i32
    %428 = vector.broadcast %c16_i32_204 : i32 to vector<1x256xi32>
    %429 = arith.cmpi slt, %427, %428 : vector<1x256xi32>
    %430 = arith.andi %425, %429 : vector<1x256xi1>
    %cst_205 = arith.constant 0.000000e+00 : f32
    %431 = vector.shape_cast %430 : vector<1x256xi1> to vector<1x256xi1>
    %432 = vector.broadcast %431 : vector<1x256xi1> to vector<24x256xi1>
    %433 = vector.broadcast %cst_205 : f32 to vector<24x256xf32>
    %434 = arith.select %432, %411, %433 : vector<24x256xi1>, vector<24x256xf32>
    %c7_206 = arith.constant 7 : index
    %c0_207 = arith.constant 0 : index
    %c0_208 = arith.constant 0 : index
    %435 = vector.load %arg6[%c7_206, %c0_207, %c0_208] : memref<9x16x24xf32, #tpu.memory_space<vmem>>, vector<1x16x24xf32>
    %436 = vector.shape_cast %435 : vector<1x16x24xf32> to vector<16x24xf32>
    %cst_209 = arith.constant dense<0.000000e+00> : vector<16x256xf32>
    %437 = tpu.matmul %436, %434, %cst_209 {dimension_numbers = #tpu.dot_dimension_numbers<[1], [0], [0], [1], [0, 0, 1, 1], [], []>} : vector<16x24xf32>, vector<24x256xf32>, vector<16x256xf32> -> vector<16x256xf32>
    %438 = arith.addf %410, %437 : vector<16x256xf32>
    %c239_i32_210 = arith.constant 239 : i32
    %439 = tpu.dynamic_rotate %237 by %c239_i32_210 dim 1 : vector<24x256xf32>, i32 -> vector<24x256xf32>
    %c1_i32_211 = arith.constant 1 : i32
    %440 = vector.broadcast %c1_i32_211 : i32 to vector<1x256xi32>
    %441 = arith.addi %0, %440 : vector<1x256xi32>
    %c0_i32_212 = arith.constant 0 : i32
    %442 = vector.broadcast %c0_i32_212 : i32 to vector<1x256xi32>
    %443 = arith.cmpi sge, %441, %442 : vector<1x256xi32>
    %c1_i32_213 = arith.constant 1 : i32
    %444 = vector.broadcast %c1_i32_213 : i32 to vector<1x256xi32>
    %445 = arith.addi %0, %444 : vector<1x256xi32>
    %c16_i32_214 = arith.constant 16 : i32
    %446 = vector.broadcast %c16_i32_214 : i32 to vector<1x256xi32>
    %447 = arith.cmpi slt, %445, %446 : vector<1x256xi32>
    %448 = arith.andi %443, %447 : vector<1x256xi1>
    %c1_i32_215 = arith.constant 1 : i32
    %449 = vector.broadcast %c1_i32_215 : i32 to vector<1x256xi32>
    %450 = arith.addi %1, %449 : vector<1x256xi32>
    %c0_i32_216 = arith.constant 0 : i32
    %451 = vector.broadcast %c0_i32_216 : i32 to vector<1x256xi32>
    %452 = arith.cmpi sge, %450, %451 : vector<1x256xi32>
    %453 = arith.andi %448, %452 : vector<1x256xi1>
    %c1_i32_217 = arith.constant 1 : i32
    %454 = vector.broadcast %c1_i32_217 : i32 to vector<1x256xi32>
    %455 = arith.addi %1, %454 : vector<1x256xi32>
    %c16_i32_218 = arith.constant 16 : i32
    %456 = vector.broadcast %c16_i32_218 : i32 to vector<1x256xi32>
    %457 = arith.cmpi slt, %455, %456 : vector<1x256xi32>
    %458 = arith.andi %453, %457 : vector<1x256xi1>
    %cst_219 = arith.constant 0.000000e+00 : f32
    %459 = vector.shape_cast %458 : vector<1x256xi1> to vector<1x256xi1>
    %460 = vector.broadcast %459 : vector<1x256xi1> to vector<24x256xi1>
    %461 = vector.broadcast %cst_219 : f32 to vector<24x256xf32>
    %462 = arith.select %460, %439, %461 : vector<24x256xi1>, vector<24x256xf32>
    %c8_220 = arith.constant 8 : index
    %c0_221 = arith.constant 0 : index
    %c0_222 = arith.constant 0 : index
    %463 = vector.load %arg6[%c8_220, %c0_221, %c0_222] : memref<9x16x24xf32, #tpu.memory_space<vmem>>, vector<1x16x24xf32>
    %464 = vector.shape_cast %463 : vector<1x16x24xf32> to vector<16x24xf32>
    %cst_223 = arith.constant dense<0.000000e+00> : vector<16x256xf32>
    %465 = tpu.matmul %464, %462, %cst_223 {dimension_numbers = #tpu.dot_dimension_numbers<[1], [0], [0], [1], [0, 0, 1, 1], [], []>} : vector<16x24xf32>, vector<24x256xf32>, vector<16x256xf32> -> vector<16x256xf32>
    %466 = arith.addf %438, %465 : vector<16x256xf32>
    %c0_224 = arith.constant 0 : index
    %c0_225 = arith.constant 0 : index
    %467 = vector.load %arg7[%c0_224, %c0_225] : memref<16x1xf32, #tpu.memory_space<vmem>>, vector<16x1xf32>
    %468 = vector.broadcast %467 : vector<16x1xf32> to vector<16x256xf32>
    %469 = arith.addf %466, %468 : vector<16x256xf32>
    %470 = math.tanh %469 : vector<16x256xf32>
    %c0_226 = arith.constant 0 : index
    %c0_227 = arith.constant 0 : index
    %c0_228 = arith.constant 0 : index
    %471 = vector.load %arg8[%c0_226, %c0_227, %c0_228] : memref<1x40x256xf32, #tpu.memory_space<vmem>>, vector<1x24x256xf32>
    %472 = vector.shape_cast %471 : vector<1x24x256xf32> to vector<24x256xf32>
    %473 = vector.shape_cast %237 : vector<24x256xf32> to vector<1x24x256xf32>
    tpu.vector_store %arg8[%c0_226, %c0_227, %c0_228], %473 {strides = array<i32>} : memref<1x40x256xf32, #tpu.memory_space<vmem>>, vector<1x24x256xf32>,
    %c0_229 = arith.constant 0 : index
    %c24 = arith.constant 24 : index
    %c0_230 = arith.constant 0 : index
    %474 = vector.load %arg8[%c0_229, %c24, %c0_230] : memref<1x40x256xf32, #tpu.memory_space<vmem>>, vector<1x16x256xf32>
    %475 = vector.shape_cast %474 : vector<1x16x256xf32> to vector<16x256xf32>
    %476 = vector.shape_cast %470 : vector<16x256xf32> to vector<1x16x256xf32>
    tpu.vector_store %arg8[%c0_229, %c24, %c0_230], %476 {strides = array<i32>} : memref<1x40x256xf32, #tpu.memory_space<vmem>>, vector<1x16x256xf32>,
    return
  }
  func.func @transform_0(%arg0: i32) -> (i32, i32) {
    %c0_i32 = arith.constant 0 : i32
    %c0_i32_0 = arith.constant 0 : i32
    %c0_i32_1 = arith.constant 0 : i32
    return %c0_i32, %c0_i32_0 : i32, i32
  }
  func.func @transform_1(%arg0: i32) -> (i32, i32) {
    %c0_i32 = arith.constant 0 : i32
    %c0_i32_0 = arith.constant 0 : i32
    %c0_i32_1 = arith.constant 0 : i32
    return %c0_i32, %c0_i32_0 : i32, i32
  }
  func.func @transform_2(%arg0: i32) -> (i32, i32, i32) {
    %c0_i32 = arith.constant 0 : i32
    %c0_i32_0 = arith.constant 0 : i32
    %c0_i32_1 = arith.constant 0 : i32
    return %arg0, %c0_i32, %c0_i32_0 : i32, i32, i32
  }
  func.func @transform_3(%arg0: i32) -> (i32, i32, i32) {
    %c0_i32 = arith.constant 0 : i32
    %c0_i32_0 = arith.constant 0 : i32
    %c0_i32_1 = arith.constant 0 : i32
    %c0_i32_2 = arith.constant 0 : i32
    return %c0_i32, %c0_i32_0, %c0_i32_1 : i32, i32, i32
  }
  func.func @transform_4(%arg0: i32) -> (i32, i32) {
    %c0_i32 = arith.constant 0 : i32
    %c0_i32_0 = arith.constant 0 : i32
    %c0_i32_1 = arith.constant 0 : i32
    return %c0_i32, %c0_i32_0 : i32, i32
  }
  func.func @transform_5(%arg0: i32) -> (i32, i32, i32) {
    %c0_i32 = arith.constant 0 : i32
    %c0_i32_0 = arith.constant 0 : i32
    %c0_i32_1 = arith.constant 0 : i32
    %c0_i32_2 = arith.constant 0 : i32
    return %c0_i32, %c0_i32_0, %c0_i32_1 : i32, i32, i32
  }
  func.func @transform_6(%arg0: i32) -> (i32, i32) {
    %c0_i32 = arith.constant 0 : i32
    %c0_i32_0 = arith.constant 0 : i32
    %c0_i32_1 = arith.constant 0 : i32
    return %c0_i32, %c0_i32_0 : i32, i32
  }
  func.func @transform_7(%arg0: i32) -> (i32, i32, i32) {
    %c0_i32 = arith.constant 0 : i32
    %c0_i32_0 = arith.constant 0 : i32
    %c0_i32_1 = arith.constant 0 : i32
    return %arg0, %c0_i32, %c0_i32_0 : i32, i32, i32
  }
}

module attributes {stable_mosaic.version = 11 : i64} {
  func.func @_spp_znorm_kernel(%arg0: i32, %arg1: memref<1x256xi32, #tpu.memory_space<vmem>>, %arg2: memref<1x256xi32, #tpu.memory_space<vmem>>, %arg3: memref<2x8x256xf32, #tpu.memory_space<vmem>>, %arg4: memref<2x8x14xf32, #tpu.memory_space<vmem>>) attributes {dimension_semantics = [#tpu.dimension_semantics<parallel>], iteration_bounds = array<i64: 5>, scalar_prefetch = 0 : i64, scratch_operands = 0 : i64, tpu.core_type = #tpu.core_type<tc>, window_params = [{pipeline_mode = #tpu.pipeline_mode<synchronous>, transform_indices = @transform_0, window_bounds = array<i64: 1, 256>}, {pipeline_mode = #tpu.pipeline_mode<synchronous>, transform_indices = @transform_1, window_bounds = array<i64: 1, 256>}, {transform_indices = @transform_2, window_bounds = array<i64: 2, 8, 256>}, {transform_indices = @transform_3, window_bounds = array<i64: 2, 8, 14>}]} {
    %c0 = arith.constant 0 : index
    %c0_0 = arith.constant 0 : index
    %c0_1 = arith.constant 0 : index
    %0 = vector.load %arg3[%c0, %c0_0, %c0_1] : memref<2x8x256xf32, #tpu.memory_space<vmem>>, vector<2x8x256xf32>
    %c0_2 = arith.constant 0 : index
    %c0_3 = arith.constant 0 : index
    %1 = vector.load %arg1[%c0_2, %c0_3] : memref<1x256xi32, #tpu.memory_space<vmem>>, vector<1x256xi32>
    %c0_4 = arith.constant 0 : index
    %c0_5 = arith.constant 0 : index
    %2 = vector.load %arg2[%c0_4, %c0_5] : memref<1x256xi32, #tpu.memory_space<vmem>>, vector<1x256xi32>
    %3 = tpu.iota {dimensions = array<i32: 2>} : vector<1x1x14xi32>
    %cst = arith.constant 0.000000e+00 : f32
    %4 = vector.broadcast %cst : f32 to vector<2x8x14xf32>
    %c0_i32 = arith.constant 0 : i32
    %5 = vector.broadcast %c0_i32 : i32 to vector<1x256xi32>
    %6 = arith.cmpi sge, %1, %5 : vector<1x256xi32>
    %c16_i32 = arith.constant 16 : i32
    %7 = vector.broadcast %c16_i32 : i32 to vector<1x256xi32>
    %8 = arith.cmpi slt, %1, %7 : vector<1x256xi32>
    %9 = arith.andi %6, %8 : vector<1x256xi1>
    %c0_i32_6 = arith.constant 0 : i32
    %10 = vector.broadcast %c0_i32_6 : i32 to vector<1x256xi32>
    %11 = arith.cmpi sge, %2, %10 : vector<1x256xi32>
    %12 = arith.andi %9, %11 : vector<1x256xi1>
    %c16_i32_7 = arith.constant 16 : i32
    %13 = vector.broadcast %c16_i32_7 : i32 to vector<1x256xi32>
    %14 = arith.cmpi slt, %2, %13 : vector<1x256xi32>
    %15 = arith.andi %12, %14 : vector<1x256xi1>
    %cst_8 = arith.constant 0xFF800000 : f32
    %16 = vector.shape_cast %15 : vector<1x256xi1> to vector<1x1x256xi1>
    %17 = vector.broadcast %16 : vector<1x1x256xi1> to vector<2x8x256xi1>
    %18 = vector.broadcast %cst_8 : f32 to vector<2x8x256xf32>
    %19 = arith.select %17, %0, %18 : vector<2x8x256xi1>, vector<2x8x256xf32>
    %cst_9 = arith.constant dense<0xFF800000> : vector<2x8xf32>
    %20 = vector.multi_reduction <maximumf>, %19, %cst_9 [2] : vector<2x8x256xf32> to vector<2x8xf32>
    %21 = vector.shape_cast %20 : vector<2x8xf32> to vector<2x8x1xf32>
    %c0_i32_10 = arith.constant 0 : i32
    %22 = vector.broadcast %c0_i32_10 : i32 to vector<1x1x14xi32>
    %23 = arith.cmpi eq, %3, %22 : vector<1x1x14xi32>
    %24 = vector.shape_cast %23 : vector<1x1x14xi1> to vector<1x1x14xi1>
    %25 = vector.broadcast %24 : vector<1x1x14xi1> to vector<2x8x14xi1>
    %26 = vector.shape_cast %21 : vector<2x8x1xf32> to vector<2x8x1xf32>
    %27 = vector.broadcast %26 : vector<2x8x1xf32> to vector<2x8x14xf32>
    %28 = arith.select %25, %27, %4 : vector<2x8x14xi1>, vector<2x8x14xf32>
    %c0_i32_11 = arith.constant 0 : i32
    %29 = vector.broadcast %c0_i32_11 : i32 to vector<1x256xi32>
    %30 = arith.cmpi sge, %1, %29 : vector<1x256xi32>
    %c8_i32 = arith.constant 8 : i32
    %31 = vector.broadcast %c8_i32 : i32 to vector<1x256xi32>
    %32 = arith.cmpi slt, %1, %31 : vector<1x256xi32>
    %33 = arith.andi %30, %32 : vector<1x256xi1>
    %c0_i32_12 = arith.constant 0 : i32
    %34 = vector.broadcast %c0_i32_12 : i32 to vector<1x256xi32>
    %35 = arith.cmpi sge, %2, %34 : vector<1x256xi32>
    %36 = arith.andi %33, %35 : vector<1x256xi1>
    %c8_i32_13 = arith.constant 8 : i32
    %37 = vector.broadcast %c8_i32_13 : i32 to vector<1x256xi32>
    %38 = arith.cmpi slt, %2, %37 : vector<1x256xi32>
    %39 = arith.andi %36, %38 : vector<1x256xi1>
    %cst_14 = arith.constant 0xFF800000 : f32
    %40 = vector.shape_cast %39 : vector<1x256xi1> to vector<1x1x256xi1>
    %41 = vector.broadcast %40 : vector<1x1x256xi1> to vector<2x8x256xi1>
    %42 = vector.broadcast %cst_14 : f32 to vector<2x8x256xf32>
    %43 = arith.select %41, %0, %42 : vector<2x8x256xi1>, vector<2x8x256xf32>
    %cst_15 = arith.constant dense<0xFF800000> : vector<2x8xf32>
    %44 = vector.multi_reduction <maximumf>, %43, %cst_15 [2] : vector<2x8x256xf32> to vector<2x8xf32>
    %45 = vector.shape_cast %44 : vector<2x8xf32> to vector<2x8x1xf32>
    %c1_i32 = arith.constant 1 : i32
    %46 = vector.broadcast %c1_i32 : i32 to vector<1x1x14xi32>
    %47 = arith.cmpi eq, %3, %46 : vector<1x1x14xi32>
    %48 = vector.shape_cast %47 : vector<1x1x14xi1> to vector<1x1x14xi1>
    %49 = vector.broadcast %48 : vector<1x1x14xi1> to vector<2x8x14xi1>
    %50 = vector.shape_cast %45 : vector<2x8x1xf32> to vector<2x8x1xf32>
    %51 = vector.broadcast %50 : vector<2x8x1xf32> to vector<2x8x14xf32>
    %52 = arith.select %49, %51, %28 : vector<2x8x14xi1>, vector<2x8x14xf32>
    %c0_i32_16 = arith.constant 0 : i32
    %53 = vector.broadcast %c0_i32_16 : i32 to vector<1x256xi32>
    %54 = arith.cmpi sge, %1, %53 : vector<1x256xi32>
    %c8_i32_17 = arith.constant 8 : i32
    %55 = vector.broadcast %c8_i32_17 : i32 to vector<1x256xi32>
    %56 = arith.cmpi slt, %1, %55 : vector<1x256xi32>
    %57 = arith.andi %54, %56 : vector<1x256xi1>
    %c8_i32_18 = arith.constant 8 : i32
    %58 = vector.broadcast %c8_i32_18 : i32 to vector<1x256xi32>
    %59 = arith.cmpi sge, %2, %58 : vector<1x256xi32>
    %60 = arith.andi %57, %59 : vector<1x256xi1>
    %c16_i32_19 = arith.constant 16 : i32
    %61 = vector.broadcast %c16_i32_19 : i32 to vector<1x256xi32>
    %62 = arith.cmpi slt, %2, %61 : vector<1x256xi32>
    %63 = arith.andi %60, %62 : vector<1x256xi1>
    %cst_20 = arith.constant 0xFF800000 : f32
    %64 = vector.shape_cast %63 : vector<1x256xi1> to vector<1x1x256xi1>
    %65 = vector.broadcast %64 : vector<1x1x256xi1> to vector<2x8x256xi1>
    %66 = vector.broadcast %cst_20 : f32 to vector<2x8x256xf32>
    %67 = arith.select %65, %0, %66 : vector<2x8x256xi1>, vector<2x8x256xf32>
    %cst_21 = arith.constant dense<0xFF800000> : vector<2x8xf32>
    %68 = vector.multi_reduction <maximumf>, %67, %cst_21 [2] : vector<2x8x256xf32> to vector<2x8xf32>
    %69 = vector.shape_cast %68 : vector<2x8xf32> to vector<2x8x1xf32>
    %c2_i32 = arith.constant 2 : i32
    %70 = vector.broadcast %c2_i32 : i32 to vector<1x1x14xi32>
    %71 = arith.cmpi eq, %3, %70 : vector<1x1x14xi32>
    %72 = vector.shape_cast %71 : vector<1x1x14xi1> to vector<1x1x14xi1>
    %73 = vector.broadcast %72 : vector<1x1x14xi1> to vector<2x8x14xi1>
    %74 = vector.shape_cast %69 : vector<2x8x1xf32> to vector<2x8x1xf32>
    %75 = vector.broadcast %74 : vector<2x8x1xf32> to vector<2x8x14xf32>
    %76 = arith.select %73, %75, %52 : vector<2x8x14xi1>, vector<2x8x14xf32>
    %c8_i32_22 = arith.constant 8 : i32
    %77 = vector.broadcast %c8_i32_22 : i32 to vector<1x256xi32>
    %78 = arith.cmpi sge, %1, %77 : vector<1x256xi32>
    %c16_i32_23 = arith.constant 16 : i32
    %79 = vector.broadcast %c16_i32_23 : i32 to vector<1x256xi32>
    %80 = arith.cmpi slt, %1, %79 : vector<1x256xi32>
    %81 = arith.andi %78, %80 : vector<1x256xi1>
    %c0_i32_24 = arith.constant 0 : i32
    %82 = vector.broadcast %c0_i32_24 : i32 to vector<1x256xi32>
    %83 = arith.cmpi sge, %2, %82 : vector<1x256xi32>
    %84 = arith.andi %81, %83 : vector<1x256xi1>
    %c8_i32_25 = arith.constant 8 : i32
    %85 = vector.broadcast %c8_i32_25 : i32 to vector<1x256xi32>
    %86 = arith.cmpi slt, %2, %85 : vector<1x256xi32>
    %87 = arith.andi %84, %86 : vector<1x256xi1>
    %cst_26 = arith.constant 0xFF800000 : f32
    %88 = vector.shape_cast %87 : vector<1x256xi1> to vector<1x1x256xi1>
    %89 = vector.broadcast %88 : vector<1x1x256xi1> to vector<2x8x256xi1>
    %90 = vector.broadcast %cst_26 : f32 to vector<2x8x256xf32>
    %91 = arith.select %89, %0, %90 : vector<2x8x256xi1>, vector<2x8x256xf32>
    %cst_27 = arith.constant dense<0xFF800000> : vector<2x8xf32>
    %92 = vector.multi_reduction <maximumf>, %91, %cst_27 [2] : vector<2x8x256xf32> to vector<2x8xf32>
    %93 = vector.shape_cast %92 : vector<2x8xf32> to vector<2x8x1xf32>
    %c3_i32 = arith.constant 3 : i32
    %94 = vector.broadcast %c3_i32 : i32 to vector<1x1x14xi32>
    %95 = arith.cmpi eq, %3, %94 : vector<1x1x14xi32>
    %96 = vector.shape_cast %95 : vector<1x1x14xi1> to vector<1x1x14xi1>
    %97 = vector.broadcast %96 : vector<1x1x14xi1> to vector<2x8x14xi1>
    %98 = vector.shape_cast %93 : vector<2x8x1xf32> to vector<2x8x1xf32>
    %99 = vector.broadcast %98 : vector<2x8x1xf32> to vector<2x8x14xf32>
    %100 = arith.select %97, %99, %76 : vector<2x8x14xi1>, vector<2x8x14xf32>
    %c8_i32_28 = arith.constant 8 : i32
    %101 = vector.broadcast %c8_i32_28 : i32 to vector<1x256xi32>
    %102 = arith.cmpi sge, %1, %101 : vector<1x256xi32>
    %c16_i32_29 = arith.constant 16 : i32
    %103 = vector.broadcast %c16_i32_29 : i32 to vector<1x256xi32>
    %104 = arith.cmpi slt, %1, %103 : vector<1x256xi32>
    %105 = arith.andi %102, %104 : vector<1x256xi1>
    %c8_i32_30 = arith.constant 8 : i32
    %106 = vector.broadcast %c8_i32_30 : i32 to vector<1x256xi32>
    %107 = arith.cmpi sge, %2, %106 : vector<1x256xi32>
    %108 = arith.andi %105, %107 : vector<1x256xi1>
    %c16_i32_31 = arith.constant 16 : i32
    %109 = vector.broadcast %c16_i32_31 : i32 to vector<1x256xi32>
    %110 = arith.cmpi slt, %2, %109 : vector<1x256xi32>
    %111 = arith.andi %108, %110 : vector<1x256xi1>
    %cst_32 = arith.constant 0xFF800000 : f32
    %112 = vector.shape_cast %111 : vector<1x256xi1> to vector<1x1x256xi1>
    %113 = vector.broadcast %112 : vector<1x1x256xi1> to vector<2x8x256xi1>
    %114 = vector.broadcast %cst_32 : f32 to vector<2x8x256xf32>
    %115 = arith.select %113, %0, %114 : vector<2x8x256xi1>, vector<2x8x256xf32>
    %cst_33 = arith.constant dense<0xFF800000> : vector<2x8xf32>
    %116 = vector.multi_reduction <maximumf>, %115, %cst_33 [2] : vector<2x8x256xf32> to vector<2x8xf32>
    %117 = vector.shape_cast %116 : vector<2x8xf32> to vector<2x8x1xf32>
    %c4_i32 = arith.constant 4 : i32
    %118 = vector.broadcast %c4_i32 : i32 to vector<1x1x14xi32>
    %119 = arith.cmpi eq, %3, %118 : vector<1x1x14xi32>
    %120 = vector.shape_cast %119 : vector<1x1x14xi1> to vector<1x1x14xi1>
    %121 = vector.broadcast %120 : vector<1x1x14xi1> to vector<2x8x14xi1>
    %122 = vector.shape_cast %117 : vector<2x8x1xf32> to vector<2x8x1xf32>
    %123 = vector.broadcast %122 : vector<2x8x1xf32> to vector<2x8x14xf32>
    %124 = arith.select %121, %123, %100 : vector<2x8x14xi1>, vector<2x8x14xf32>
    %c0_i32_34 = arith.constant 0 : i32
    %125 = vector.broadcast %c0_i32_34 : i32 to vector<1x256xi32>
    %126 = arith.cmpi sge, %1, %125 : vector<1x256xi32>
    %c6_i32 = arith.constant 6 : i32
    %127 = vector.broadcast %c6_i32 : i32 to vector<1x256xi32>
    %128 = arith.cmpi slt, %1, %127 : vector<1x256xi32>
    %129 = arith.andi %126, %128 : vector<1x256xi1>
    %c0_i32_35 = arith.constant 0 : i32
    %130 = vector.broadcast %c0_i32_35 : i32 to vector<1x256xi32>
    %131 = arith.cmpi sge, %2, %130 : vector<1x256xi32>
    %132 = arith.andi %129, %131 : vector<1x256xi1>
    %c6_i32_36 = arith.constant 6 : i32
    %133 = vector.broadcast %c6_i32_36 : i32 to vector<1x256xi32>
    %134 = arith.cmpi slt, %2, %133 : vector<1x256xi32>
    %135 = arith.andi %132, %134 : vector<1x256xi1>
    %cst_37 = arith.constant 0xFF800000 : f32
    %136 = vector.shape_cast %135 : vector<1x256xi1> to vector<1x1x256xi1>
    %137 = vector.broadcast %136 : vector<1x1x256xi1> to vector<2x8x256xi1>
    %138 = vector.broadcast %cst_37 : f32 to vector<2x8x256xf32>
    %139 = arith.select %137, %0, %138 : vector<2x8x256xi1>, vector<2x8x256xf32>
    %cst_38 = arith.constant dense<0xFF800000> : vector<2x8xf32>
    %140 = vector.multi_reduction <maximumf>, %139, %cst_38 [2] : vector<2x8x256xf32> to vector<2x8xf32>
    %141 = vector.shape_cast %140 : vector<2x8xf32> to vector<2x8x1xf32>
    %c5_i32 = arith.constant 5 : i32
    %142 = vector.broadcast %c5_i32 : i32 to vector<1x1x14xi32>
    %143 = arith.cmpi eq, %3, %142 : vector<1x1x14xi32>
    %144 = vector.shape_cast %143 : vector<1x1x14xi1> to vector<1x1x14xi1>
    %145 = vector.broadcast %144 : vector<1x1x14xi1> to vector<2x8x14xi1>
    %146 = vector.shape_cast %141 : vector<2x8x1xf32> to vector<2x8x1xf32>
    %147 = vector.broadcast %146 : vector<2x8x1xf32> to vector<2x8x14xf32>
    %148 = arith.select %145, %147, %124 : vector<2x8x14xi1>, vector<2x8x14xf32>
    %c0_i32_39 = arith.constant 0 : i32
    %149 = vector.broadcast %c0_i32_39 : i32 to vector<1x256xi32>
    %150 = arith.cmpi sge, %1, %149 : vector<1x256xi32>
    %c6_i32_40 = arith.constant 6 : i32
    %151 = vector.broadcast %c6_i32_40 : i32 to vector<1x256xi32>
    %152 = arith.cmpi slt, %1, %151 : vector<1x256xi32>
    %153 = arith.andi %150, %152 : vector<1x256xi1>
    %c5_i32_41 = arith.constant 5 : i32
    %154 = vector.broadcast %c5_i32_41 : i32 to vector<1x256xi32>
    %155 = arith.cmpi sge, %2, %154 : vector<1x256xi32>
    %156 = arith.andi %153, %155 : vector<1x256xi1>
    %c11_i32 = arith.constant 11 : i32
    %157 = vector.broadcast %c11_i32 : i32 to vector<1x256xi32>
    %158 = arith.cmpi slt, %2, %157 : vector<1x256xi32>
    %159 = arith.andi %156, %158 : vector<1x256xi1>
    %cst_42 = arith.constant 0xFF800000 : f32
    %160 = vector.shape_cast %159 : vector<1x256xi1> to vector<1x1x256xi1>
    %161 = vector.broadcast %160 : vector<1x1x256xi1> to vector<2x8x256xi1>
    %162 = vector.broadcast %cst_42 : f32 to vector<2x8x256xf32>
    %163 = arith.select %161, %0, %162 : vector<2x8x256xi1>, vector<2x8x256xf32>
    %cst_43 = arith.constant dense<0xFF800000> : vector<2x8xf32>
    %164 = vector.multi_reduction <maximumf>, %163, %cst_43 [2] : vector<2x8x256xf32> to vector<2x8xf32>
    %165 = vector.shape_cast %164 : vector<2x8xf32> to vector<2x8x1xf32>
    %c6_i32_44 = arith.constant 6 : i32
    %166 = vector.broadcast %c6_i32_44 : i32 to vector<1x1x14xi32>
    %167 = arith.cmpi eq, %3, %166 : vector<1x1x14xi32>
    %168 = vector.shape_cast %167 : vector<1x1x14xi1> to vector<1x1x14xi1>
    %169 = vector.broadcast %168 : vector<1x1x14xi1> to vector<2x8x14xi1>
    %170 = vector.shape_cast %165 : vector<2x8x1xf32> to vector<2x8x1xf32>
    %171 = vector.broadcast %170 : vector<2x8x1xf32> to vector<2x8x14xf32>
    %172 = arith.select %169, %171, %148 : vector<2x8x14xi1>, vector<2x8x14xf32>
    %c0_i32_45 = arith.constant 0 : i32
    %173 = vector.broadcast %c0_i32_45 : i32 to vector<1x256xi32>
    %174 = arith.cmpi sge, %1, %173 : vector<1x256xi32>
    %c6_i32_46 = arith.constant 6 : i32
    %175 = vector.broadcast %c6_i32_46 : i32 to vector<1x256xi32>
    %176 = arith.cmpi slt, %1, %175 : vector<1x256xi32>
    %177 = arith.andi %174, %176 : vector<1x256xi1>
    %c10_i32 = arith.constant 10 : i32
    %178 = vector.broadcast %c10_i32 : i32 to vector<1x256xi32>
    %179 = arith.cmpi sge, %2, %178 : vector<1x256xi32>
    %180 = arith.andi %177, %179 : vector<1x256xi1>
    %c16_i32_47 = arith.constant 16 : i32
    %181 = vector.broadcast %c16_i32_47 : i32 to vector<1x256xi32>
    %182 = arith.cmpi slt, %2, %181 : vector<1x256xi32>
    %183 = arith.andi %180, %182 : vector<1x256xi1>
    %cst_48 = arith.constant 0xFF800000 : f32
    %184 = vector.shape_cast %183 : vector<1x256xi1> to vector<1x1x256xi1>
    %185 = vector.broadcast %184 : vector<1x1x256xi1> to vector<2x8x256xi1>
    %186 = vector.broadcast %cst_48 : f32 to vector<2x8x256xf32>
    %187 = arith.select %185, %0, %186 : vector<2x8x256xi1>, vector<2x8x256xf32>
    %cst_49 = arith.constant dense<0xFF800000> : vector<2x8xf32>
    %188 = vector.multi_reduction <maximumf>, %187, %cst_49 [2] : vector<2x8x256xf32> to vector<2x8xf32>
    %189 = vector.shape_cast %188 : vector<2x8xf32> to vector<2x8x1xf32>
    %c7_i32 = arith.constant 7 : i32
    %190 = vector.broadcast %c7_i32 : i32 to vector<1x1x14xi32>
    %191 = arith.cmpi eq, %3, %190 : vector<1x1x14xi32>
    %192 = vector.shape_cast %191 : vector<1x1x14xi1> to vector<1x1x14xi1>
    %193 = vector.broadcast %192 : vector<1x1x14xi1> to vector<2x8x14xi1>
    %194 = vector.shape_cast %189 : vector<2x8x1xf32> to vector<2x8x1xf32>
    %195 = vector.broadcast %194 : vector<2x8x1xf32> to vector<2x8x14xf32>
    %196 = arith.select %193, %195, %172 : vector<2x8x14xi1>, vector<2x8x14xf32>
    %c5_i32_50 = arith.constant 5 : i32
    %197 = vector.broadcast %c5_i32_50 : i32 to vector<1x256xi32>
    %198 = arith.cmpi sge, %1, %197 : vector<1x256xi32>
    %c11_i32_51 = arith.constant 11 : i32
    %199 = vector.broadcast %c11_i32_51 : i32 to vector<1x256xi32>
    %200 = arith.cmpi slt, %1, %199 : vector<1x256xi32>
    %201 = arith.andi %198, %200 : vector<1x256xi1>
    %c0_i32_52 = arith.constant 0 : i32
    %202 = vector.broadcast %c0_i32_52 : i32 to vector<1x256xi32>
    %203 = arith.cmpi sge, %2, %202 : vector<1x256xi32>
    %204 = arith.andi %201, %203 : vector<1x256xi1>
    %c6_i32_53 = arith.constant 6 : i32
    %205 = vector.broadcast %c6_i32_53 : i32 to vector<1x256xi32>
    %206 = arith.cmpi slt, %2, %205 : vector<1x256xi32>
    %207 = arith.andi %204, %206 : vector<1x256xi1>
    %cst_54 = arith.constant 0xFF800000 : f32
    %208 = vector.shape_cast %207 : vector<1x256xi1> to vector<1x1x256xi1>
    %209 = vector.broadcast %208 : vector<1x1x256xi1> to vector<2x8x256xi1>
    %210 = vector.broadcast %cst_54 : f32 to vector<2x8x256xf32>
    %211 = arith.select %209, %0, %210 : vector<2x8x256xi1>, vector<2x8x256xf32>
    %cst_55 = arith.constant dense<0xFF800000> : vector<2x8xf32>
    %212 = vector.multi_reduction <maximumf>, %211, %cst_55 [2] : vector<2x8x256xf32> to vector<2x8xf32>
    %213 = vector.shape_cast %212 : vector<2x8xf32> to vector<2x8x1xf32>
    %c8_i32_56 = arith.constant 8 : i32
    %214 = vector.broadcast %c8_i32_56 : i32 to vector<1x1x14xi32>
    %215 = arith.cmpi eq, %3, %214 : vector<1x1x14xi32>
    %216 = vector.shape_cast %215 : vector<1x1x14xi1> to vector<1x1x14xi1>
    %217 = vector.broadcast %216 : vector<1x1x14xi1> to vector<2x8x14xi1>
    %218 = vector.shape_cast %213 : vector<2x8x1xf32> to vector<2x8x1xf32>
    %219 = vector.broadcast %218 : vector<2x8x1xf32> to vector<2x8x14xf32>
    %220 = arith.select %217, %219, %196 : vector<2x8x14xi1>, vector<2x8x14xf32>
    %c5_i32_57 = arith.constant 5 : i32
    %221 = vector.broadcast %c5_i32_57 : i32 to vector<1x256xi32>
    %222 = arith.cmpi sge, %1, %221 : vector<1x256xi32>
    %c11_i32_58 = arith.constant 11 : i32
    %223 = vector.broadcast %c11_i32_58 : i32 to vector<1x256xi32>
    %224 = arith.cmpi slt, %1, %223 : vector<1x256xi32>
    %225 = arith.andi %222, %224 : vector<1x256xi1>
    %c5_i32_59 = arith.constant 5 : i32
    %226 = vector.broadcast %c5_i32_59 : i32 to vector<1x256xi32>
    %227 = arith.cmpi sge, %2, %226 : vector<1x256xi32>
    %228 = arith.andi %225, %227 : vector<1x256xi1>
    %c11_i32_60 = arith.constant 11 : i32
    %229 = vector.broadcast %c11_i32_60 : i32 to vector<1x256xi32>
    %230 = arith.cmpi slt, %2, %229 : vector<1x256xi32>
    %231 = arith.andi %228, %230 : vector<1x256xi1>
    %cst_61 = arith.constant 0xFF800000 : f32
    %232 = vector.shape_cast %231 : vector<1x256xi1> to vector<1x1x256xi1>
    %233 = vector.broadcast %232 : vector<1x1x256xi1> to vector<2x8x256xi1>
    %234 = vector.broadcast %cst_61 : f32 to vector<2x8x256xf32>
    %235 = arith.select %233, %0, %234 : vector<2x8x256xi1>, vector<2x8x256xf32>
    %cst_62 = arith.constant dense<0xFF800000> : vector<2x8xf32>
    %236 = vector.multi_reduction <maximumf>, %235, %cst_62 [2] : vector<2x8x256xf32> to vector<2x8xf32>
    %237 = vector.shape_cast %236 : vector<2x8xf32> to vector<2x8x1xf32>
    %c9_i32 = arith.constant 9 : i32
    %238 = vector.broadcast %c9_i32 : i32 to vector<1x1x14xi32>
    %239 = arith.cmpi eq, %3, %238 : vector<1x1x14xi32>
    %240 = vector.shape_cast %239 : vector<1x1x14xi1> to vector<1x1x14xi1>
    %241 = vector.broadcast %240 : vector<1x1x14xi1> to vector<2x8x14xi1>
    %242 = vector.shape_cast %237 : vector<2x8x1xf32> to vector<2x8x1xf32>
    %243 = vector.broadcast %242 : vector<2x8x1xf32> to vector<2x8x14xf32>
    %244 = arith.select %241, %243, %220 : vector<2x8x14xi1>, vector<2x8x14xf32>
    %c5_i32_63 = arith.constant 5 : i32
    %245 = vector.broadcast %c5_i32_63 : i32 to vector<1x256xi32>
    %246 = arith.cmpi sge, %1, %245 : vector<1x256xi32>
    %c11_i32_64 = arith.constant 11 : i32
    %247 = vector.broadcast %c11_i32_64 : i32 to vector<1x256xi32>
    %248 = arith.cmpi slt, %1, %247 : vector<1x256xi32>
    %249 = arith.andi %246, %248 : vector<1x256xi1>
    %c10_i32_65 = arith.constant 10 : i32
    %250 = vector.broadcast %c10_i32_65 : i32 to vector<1x256xi32>
    %251 = arith.cmpi sge, %2, %250 : vector<1x256xi32>
    %252 = arith.andi %249, %251 : vector<1x256xi1>
    %c16_i32_66 = arith.constant 16 : i32
    %253 = vector.broadcast %c16_i32_66 : i32 to vector<1x256xi32>
    %254 = arith.cmpi slt, %2, %253 : vector<1x256xi32>
    %255 = arith.andi %252, %254 : vector<1x256xi1>
    %cst_67 = arith.constant 0xFF800000 : f32
    %256 = vector.shape_cast %255 : vector<1x256xi1> to vector<1x1x256xi1>
    %257 = vector.broadcast %256 : vector<1x1x256xi1> to vector<2x8x256xi1>
    %258 = vector.broadcast %cst_67 : f32 to vector<2x8x256xf32>
    %259 = arith.select %257, %0, %258 : vector<2x8x256xi1>, vector<2x8x256xf32>
    %cst_68 = arith.constant dense<0xFF800000> : vector<2x8xf32>
    %260 = vector.multi_reduction <maximumf>, %259, %cst_68 [2] : vector<2x8x256xf32> to vector<2x8xf32>
    %261 = vector.shape_cast %260 : vector<2x8xf32> to vector<2x8x1xf32>
    %c10_i32_69 = arith.constant 10 : i32
    %262 = vector.broadcast %c10_i32_69 : i32 to vector<1x1x14xi32>
    %263 = arith.cmpi eq, %3, %262 : vector<1x1x14xi32>
    %264 = vector.shape_cast %263 : vector<1x1x14xi1> to vector<1x1x14xi1>
    %265 = vector.broadcast %264 : vector<1x1x14xi1> to vector<2x8x14xi1>
    %266 = vector.shape_cast %261 : vector<2x8x1xf32> to vector<2x8x1xf32>
    %267 = vector.broadcast %266 : vector<2x8x1xf32> to vector<2x8x14xf32>
    %268 = arith.select %265, %267, %244 : vector<2x8x14xi1>, vector<2x8x14xf32>
    %c10_i32_70 = arith.constant 10 : i32
    %269 = vector.broadcast %c10_i32_70 : i32 to vector<1x256xi32>
    %270 = arith.cmpi sge, %1, %269 : vector<1x256xi32>
    %c16_i32_71 = arith.constant 16 : i32
    %271 = vector.broadcast %c16_i32_71 : i32 to vector<1x256xi32>
    %272 = arith.cmpi slt, %1, %271 : vector<1x256xi32>
    %273 = arith.andi %270, %272 : vector<1x256xi1>
    %c0_i32_72 = arith.constant 0 : i32
    %274 = vector.broadcast %c0_i32_72 : i32 to vector<1x256xi32>
    %275 = arith.cmpi sge, %2, %274 : vector<1x256xi32>
    %276 = arith.andi %273, %275 : vector<1x256xi1>
    %c6_i32_73 = arith.constant 6 : i32
    %277 = vector.broadcast %c6_i32_73 : i32 to vector<1x256xi32>
    %278 = arith.cmpi slt, %2, %277 : vector<1x256xi32>
    %279 = arith.andi %276, %278 : vector<1x256xi1>
    %cst_74 = arith.constant 0xFF800000 : f32
    %280 = vector.shape_cast %279 : vector<1x256xi1> to vector<1x1x256xi1>
    %281 = vector.broadcast %280 : vector<1x1x256xi1> to vector<2x8x256xi1>
    %282 = vector.broadcast %cst_74 : f32 to vector<2x8x256xf32>
    %283 = arith.select %281, %0, %282 : vector<2x8x256xi1>, vector<2x8x256xf32>
    %cst_75 = arith.constant dense<0xFF800000> : vector<2x8xf32>
    %284 = vector.multi_reduction <maximumf>, %283, %cst_75 [2] : vector<2x8x256xf32> to vector<2x8xf32>
    %285 = vector.shape_cast %284 : vector<2x8xf32> to vector<2x8x1xf32>
    %c11_i32_76 = arith.constant 11 : i32
    %286 = vector.broadcast %c11_i32_76 : i32 to vector<1x1x14xi32>
    %287 = arith.cmpi eq, %3, %286 : vector<1x1x14xi32>
    %288 = vector.shape_cast %287 : vector<1x1x14xi1> to vector<1x1x14xi1>
    %289 = vector.broadcast %288 : vector<1x1x14xi1> to vector<2x8x14xi1>
    %290 = vector.shape_cast %285 : vector<2x8x1xf32> to vector<2x8x1xf32>
    %291 = vector.broadcast %290 : vector<2x8x1xf32> to vector<2x8x14xf32>
    %292 = arith.select %289, %291, %268 : vector<2x8x14xi1>, vector<2x8x14xf32>
    %c10_i32_77 = arith.constant 10 : i32
    %293 = vector.broadcast %c10_i32_77 : i32 to vector<1x256xi32>
    %294 = arith.cmpi sge, %1, %293 : vector<1x256xi32>
    %c16_i32_78 = arith.constant 16 : i32
    %295 = vector.broadcast %c16_i32_78 : i32 to vector<1x256xi32>
    %296 = arith.cmpi slt, %1, %295 : vector<1x256xi32>
    %297 = arith.andi %294, %296 : vector<1x256xi1>
    %c5_i32_79 = arith.constant 5 : i32
    %298 = vector.broadcast %c5_i32_79 : i32 to vector<1x256xi32>
    %299 = arith.cmpi sge, %2, %298 : vector<1x256xi32>
    %300 = arith.andi %297, %299 : vector<1x256xi1>
    %c11_i32_80 = arith.constant 11 : i32
    %301 = vector.broadcast %c11_i32_80 : i32 to vector<1x256xi32>
    %302 = arith.cmpi slt, %2, %301 : vector<1x256xi32>
    %303 = arith.andi %300, %302 : vector<1x256xi1>
    %cst_81 = arith.constant 0xFF800000 : f32
    %304 = vector.shape_cast %303 : vector<1x256xi1> to vector<1x1x256xi1>
    %305 = vector.broadcast %304 : vector<1x1x256xi1> to vector<2x8x256xi1>
    %306 = vector.broadcast %cst_81 : f32 to vector<2x8x256xf32>
    %307 = arith.select %305, %0, %306 : vector<2x8x256xi1>, vector<2x8x256xf32>
    %cst_82 = arith.constant dense<0xFF800000> : vector<2x8xf32>
    %308 = vector.multi_reduction <maximumf>, %307, %cst_82 [2] : vector<2x8x256xf32> to vector<2x8xf32>
    %309 = vector.shape_cast %308 : vector<2x8xf32> to vector<2x8x1xf32>
    %c12_i32 = arith.constant 12 : i32
    %310 = vector.broadcast %c12_i32 : i32 to vector<1x1x14xi32>
    %311 = arith.cmpi eq, %3, %310 : vector<1x1x14xi32>
    %312 = vector.shape_cast %311 : vector<1x1x14xi1> to vector<1x1x14xi1>
    %313 = vector.broadcast %312 : vector<1x1x14xi1> to vector<2x8x14xi1>
    %314 = vector.shape_cast %309 : vector<2x8x1xf32> to vector<2x8x1xf32>
    %315 = vector.broadcast %314 : vector<2x8x1xf32> to vector<2x8x14xf32>
    %316 = arith.select %313, %315, %292 : vector<2x8x14xi1>, vector<2x8x14xf32>
    %c10_i32_83 = arith.constant 10 : i32
    %317 = vector.broadcast %c10_i32_83 : i32 to vector<1x256xi32>
    %318 = arith.cmpi sge, %1, %317 : vector<1x256xi32>
    %c16_i32_84 = arith.constant 16 : i32
    %319 = vector.broadcast %c16_i32_84 : i32 to vector<1x256xi32>
    %320 = arith.cmpi slt, %1, %319 : vector<1x256xi32>
    %321 = arith.andi %318, %320 : vector<1x256xi1>
    %c10_i32_85 = arith.constant 10 : i32
    %322 = vector.broadcast %c10_i32_85 : i32 to vector<1x256xi32>
    %323 = arith.cmpi sge, %2, %322 : vector<1x256xi32>
    %324 = arith.andi %321, %323 : vector<1x256xi1>
    %c16_i32_86 = arith.constant 16 : i32
    %325 = vector.broadcast %c16_i32_86 : i32 to vector<1x256xi32>
    %326 = arith.cmpi slt, %2, %325 : vector<1x256xi32>
    %327 = arith.andi %324, %326 : vector<1x256xi1>
    %cst_87 = arith.constant 0xFF800000 : f32
    %328 = vector.shape_cast %327 : vector<1x256xi1> to vector<1x1x256xi1>
    %329 = vector.broadcast %328 : vector<1x1x256xi1> to vector<2x8x256xi1>
    %330 = vector.broadcast %cst_87 : f32 to vector<2x8x256xf32>
    %331 = arith.select %329, %0, %330 : vector<2x8x256xi1>, vector<2x8x256xf32>
    %cst_88 = arith.constant dense<0xFF800000> : vector<2x8xf32>
    %332 = vector.multi_reduction <maximumf>, %331, %cst_88 [2] : vector<2x8x256xf32> to vector<2x8xf32>
    %333 = vector.shape_cast %332 : vector<2x8xf32> to vector<2x8x1xf32>
    %c13_i32 = arith.constant 13 : i32
    %334 = vector.broadcast %c13_i32 : i32 to vector<1x1x14xi32>
    %335 = arith.cmpi eq, %3, %334 : vector<1x1x14xi32>
    %336 = vector.shape_cast %335 : vector<1x1x14xi1> to vector<1x1x14xi1>
    %337 = vector.broadcast %336 : vector<1x1x14xi1> to vector<2x8x14xi1>
    %338 = vector.shape_cast %333 : vector<2x8x1xf32> to vector<2x8x1xf32>
    %339 = vector.broadcast %338 : vector<2x8x1xf32> to vector<2x8x14xf32>
    %340 = arith.select %337, %339, %316 : vector<2x8x14xi1>, vector<2x8x14xf32>
    %cst_89 = arith.constant dense<0.000000e+00> : vector<8x14xf32>
    %341 = vector.multi_reduction <add>, %340, %cst_89 [0] : vector<2x8x14xf32> to vector<8x14xf32>
    %342 = vector.shape_cast %341 : vector<8x14xf32> to vector<1x8x14xf32>
    %cst_90 = arith.constant 2.000000e+00 : f32
    %343 = vector.broadcast %cst_90 : f32 to vector<1x8x14xf32>
    %344 = arith.divf %342, %343 : vector<1x8x14xf32>
    %345 = vector.broadcast %344 : vector<1x8x14xf32> to vector<2x8x14xf32>
    %346 = arith.subf %340, %345 : vector<2x8x14xf32>
    %347 = arith.mulf %346, %346 : vector<2x8x14xf32>
    %cst_91 = arith.constant dense<0.000000e+00> : vector<8x14xf32>
    %348 = vector.multi_reduction <add>, %347, %cst_91 [0] : vector<2x8x14xf32> to vector<8x14xf32>
    %349 = vector.shape_cast %348 : vector<8x14xf32> to vector<1x8x14xf32>
    %cst_92 = arith.constant 1.000000e+00 : f32
    %350 = vector.broadcast %cst_92 : f32 to vector<1x8x14xf32>
    %351 = arith.mulf %349, %350 : vector<1x8x14xf32>
    %352 = math.sqrt %351 : vector<1x8x14xf32>
    %cst_93 = arith.constant 0.00999999977 : f32
    %353 = vector.broadcast %cst_93 : f32 to vector<1x8x14xf32>
    %354 = arith.addf %352, %353 : vector<1x8x14xf32>
    %355 = tpu.reciprocal %354 {approx = true} : vector<1x8x14xf32> -> vector<1x8x14xf32>
    %356 = vector.broadcast %355 : vector<1x8x14xf32> to vector<2x8x14xf32>
    %357 = arith.mulf %346, %356 : vector<2x8x14xf32>
    %c0_94 = arith.constant 0 : index
    %c0_95 = arith.constant 0 : index
    %c0_96 = arith.constant 0 : index
    %358 = vector.load %arg4[%c0_94, %c0_95, %c0_96] : memref<2x8x14xf32, #tpu.memory_space<vmem>>, vector<2x8x14xf32>
    tpu.vector_store %arg4[%c0_94, %c0_95, %c0_96], %357 {strides = array<i32>} : memref<2x8x14xf32, #tpu.memory_space<vmem>>, vector<2x8x14xf32>,
    return
  }
  func.func @transform_0(%arg0: i32) -> (i32, i32) {
    %c0_i32 = arith.constant 0 : i32
    %c0_i32_0 = arith.constant 0 : i32
    %c0_i32_1 = arith.constant 0 : i32
    return %c0_i32, %c0_i32_0 : i32, i32
  }
  func.func @transform_1(%arg0: i32) -> (i32, i32) {
    %c0_i32 = arith.constant 0 : i32
    %c0_i32_0 = arith.constant 0 : i32
    %c0_i32_1 = arith.constant 0 : i32
    return %c0_i32, %c0_i32_0 : i32, i32
  }
  func.func @transform_2(%arg0: i32) -> (i32, i32, i32) {
    %c0_i32 = arith.constant 0 : i32
    %c0_i32_0 = arith.constant 0 : i32
    %c0_i32_1 = arith.constant 0 : i32
    return %c0_i32, %arg0, %c0_i32_0 : i32, i32, i32
  }
  func.func @transform_3(%arg0: i32) -> (i32, i32, i32) {
    %c0_i32 = arith.constant 0 : i32
    %c0_i32_0 = arith.constant 0 : i32
    %c0_i32_1 = arith.constant 0 : i32
    return %c0_i32, %arg0, %c0_i32_0 : i32, i32, i32
  }
}

</mosaic_0001>

<llo_original>
// kernel: fe_spp_sfl_parallel.3
$region0: #{fe_spp_sfl_parallel.3}
  #allocation0 [shape = 'u32[]', space=smem, size = 0x4, offset = 0x4, fixed_abs, tag = 'smem constant byte address 0x4 - core index']
  #allocation1 [shape = 'u32[144,128]{1,0:T(1,128)}', space=vmem, size = 0x12000, scoped, tag = 'internal scratch']
  %s0 = inlined_call_operand.vmem [shape: s32[1,256], index: 0, kind: input, shape index: {}]
  %s1 = inlined_call_operand.vmem [shape: s32[1,256], index: 1, kind: input, shape index: {}]
  %s2 = inlined_call_operand.vmem [shape: f32[2,40,256], index: 2, kind: input, shape index: {}]
  %s3 = inlined_call_operand.vmem [shape: f32[2,40,14], index: 3, kind: output, shape index: {}]
  %s4 = sld [smem:[#allocation0]]
  $region102: #{fe_spp_sfl_parallel.3} parent=0
    _
  %s6 = ssub.s32 1, %s4
  %s7 = scalar_select 0, %s6, %s4
  $region1: #{fe_spp_sfl_parallel.3} parent=0
    #allocation2 [shape = 'u8[32768]{0}', space=vmem, size = 0x8000, scoped, tag = 'input window, operand 2']
    #allocation3 [shape = 'u8[16384]{0}', space=vmem, size = 0x4000, scoped, tag = 'output window, operand 0']
    loop: start=0, step=1, limit=7
    $region2: #{fe_spp_sfl_parallel.3} parent=1 // loop_pre_header
      _
    $region3: #{fe_spp_sfl_parallel.3} parent=1 // loop_header
      %s9 = sphi 0, %s13
      %p10 = scmp.ge.s32.totalorder %s9, 7
      %s17 = sphi 0, %s17
      %s19 = sphi 0, %s17
      %s20 = sphi 0, %s19
      %s34 = sphi 0, %s20
      %s38 = sphi 0, %s38
      %s40 = sphi 0, %s38
      %s41 = sphi 0, %s40
      %s55 = sphi 0, %s41
      %s61 = sphi 0, %s63
      %s64 = sphi 0, %s61
      %s65 = sphi 0, %s64
      %s81 = sphi 0, %s65
      %s87 = sphi 0, %s89
      %s90 = sphi 0, %s87
      %s91 = sphi 0, %s90
      %s107 = sphi 0, %s91
    $region4: #{fe_spp_sfl_parallel.3} parent=1 // loop_header_branch
      %12 = sbr.rel (%p10) target = $region8
    $region5: #{fe_spp_sfl_parallel.3} parent=1 // loop_body
      %s14 = ssub.s32 %s9, 1
      %s15 = ssub.s32 %s9, 2
      %s16 = sadd.s32 %s9, 1
      %s18 = sadd.s32 %s17, 1
      %p21 = scmp.eq.s32.totalorder %s9, 4
      %p22 = scmp.ne.s32.totalorder %s17, %s19
      %p23 = scmp.eq.s32.totalorder %s9, 0
      %p24 = por %p22, %p23
      %p25 = scmp.ne.s32.totalorder %s17, %s19
      %p26 = scmp.eq.s32.totalorder %s14, 4
      %p27 = por %p25, %p26
      %p28 = scmp.ne.s32.totalorder %s19, %s20
      %p29 = scmp.eq.s32.totalorder %s14, 0
      %p30 = por %p28, %p29
      %p31 = scmp.ne.s32.totalorder %s19, %s20
      %p32 = scmp.eq.s32.totalorder %s15, 4
      %p33 = por %p31, %p32
      %p35 = scmp.ne.s32.totalorder %s20, %s34
      %p36 = scmp.eq.s32.totalorder %s15, 0
      %p37 = por %p35, %p36
      %s39 = sadd.s32 %s38, 1
      %p42 = scmp.eq.s32.totalorder %s9, 4
      %p43 = scmp.ne.s32.totalorder %s38, %s40
      %p44 = scmp.eq.s32.totalorder %s9, 0
      %p45 = por %p43, %p44
      %p46 = scmp.ne.s32.totalorder %s38, %s40
      %p47 = scmp.eq.s32.totalorder %s14, 4
      %p48 = por %p46, %p47
      %p49 = scmp.ne.s32.totalorder %s40, %s41
      %p50 = scmp.eq.s32.totalorder %s14, 0
      %p51 = por %p49, %p50
      %p52 = scmp.ne.s32.totalorder %s40, %s41
      %p53 = scmp.eq.s32.totalorder %s15, 4
      %p54 = por %p52, %p53
      %p56 = scmp.ne.s32.totalorder %s41, %s55
      %p57 = scmp.eq.s32.totalorder %s15, 0
      %p58 = por %p56, %p57
      %s59 = ssub.s32 %s9, %s16
      %p60 = scmp.eq.s32.totalorder %s59, 0
      %s62 = sadd.s32 %s61, 1
      %s63 = scalar_select %p60, %s61, %s62
      %p66 = pneg %p60
      %p67 = scmp.eq.s32.totalorder %s9, 4
      %p68 = por %p66, %p67
      %p69 = scmp.ne.s32.totalorder %s61, %s64
      %p70 = scmp.eq.s32.totalorder %s9, 0
      %p71 = por %p69, %p70
      %p72 = scmp.ne.s32.totalorder %s61, %s64
      %p73 = scmp.eq.s32.totalorder %s14, 4
      %p74 = por %p72, %p73
      %p75 = scmp.ne.s32.totalorder %s64, %s65
      %p76 = scmp.eq.s32.totalorder %s14, 0
      %p77 = por %p75, %p76
      %p78 = scmp.ne.s32.totalorder %s64, %s65
      %p79 = scmp.eq.s32.totalorder %s15, 4
      %p80 = por %p78, %p79
      %p82 = scmp.ne.s32.totalorder %s65, %s81
      %p83 = scmp.eq.s32.totalorder %s15, 0
      %p84 = por %p82, %p83
      %s85 = ssub.s32 %s9, %s16
      %p86 = scmp.eq.s32.totalorder %s85, 0
      %s88 = sadd.s32 %s87, 1
      %s89 = scalar_select %p86, %s87, %s88
      %p92 = pneg %p86
      %p93 = scmp.eq.s32.totalorder %s9, 4
      %p94 = por %p92, %p93
      %p95 = scmp.ne.s32.totalorder %s87, %s90
      %p96 = scmp.eq.s32.totalorder %s9, 0
      %p97 = por %p95, %p96
      %p98 = scmp.ne.s32.totalorder %s87, %s90
      %p99 = scmp.eq.s32.totalorder %s14, 4
      %p100 = por %p98, %p99
      %p101 = scmp.ne.s32.totalorder %s90, %s91
      %p102 = scmp.eq.s32.totalorder %s14, 0
      %p103 = por %p101, %p102
      %p104 = scmp.ne.s32.totalorder %s90, %s91
      %p105 = scmp.eq.s32.totalorder %s15, 4
      %p106 = por %p104, %p105
      %p108 = scmp.ne.s32.totalorder %s91, %s107
      %p109 = scmp.eq.s32.totalorder %s15, 0
      %p110 = por %p108, %p109
      %p111 = scmp.le.s32.totalorder 1, %s9
      %p112 = scmp.lt.s32.totalorder %s9, 6
      %p113 = pnand %p111, %p112
      %p114 = pneg %p113
      // Predicated region
      $region9: #{fe_spp_sfl_parallel.3} parent=5 // pred_check
        _
      $region10: #{fe_spp_sfl_parallel.3} parent=5 // pred_check_branch
        %116 = sbr.rel (%p113) target = $region12
      $region11: #{fe_spp_sfl_parallel.3} parent=5 // pred_region
        %s117 = ssub.s32 %s9, 1
        // Predicated region
        $region13: #{fe_spp_sfl_parallel.3} parent=11 // pred_check
          %p118 = pneg %p30
        $region14: #{fe_spp_sfl_parallel.3} parent=11 // pred_check_branch
          %120 = sbr.rel (%p118) target = $region16
        $region15: #{fe_spp_sfl_parallel.3} parent=11 // pred_region
          _
        $region16: #{fe_spp_sfl_parallel.3} parent=11 // pred_fallthru
          _
        // Predicated region
        $region17: #{fe_spp_sfl_parallel.3} parent=11 // pred_check
          %p121 = pneg %p51
        $region18: #{fe_spp_sfl_parallel.3} parent=11 // pred_check_branch
          %123 = sbr.rel (%p121) target = $region20
        $region19: #{fe_spp_sfl_parallel.3} parent=11 // pred_region
          _
        $region20: #{fe_spp_sfl_parallel.3} parent=11 // pred_fallthru
          _
      $region12: #{fe_spp_sfl_parallel.3} parent=5 // pred_fallthru
        _
      %p124 = scmp.lt.s32.totalorder %s9, 5
      // Predicated region
      $region21: #{fe_spp_sfl_parallel.3} parent=5 // pred_check
        %p125 = pneg %p124
      $region22: #{fe_spp_sfl_parallel.3} parent=5 // pred_check_branch
        %127 = sbr.rel (%p125) target = $region24
      $region23: #{fe_spp_sfl_parallel.3} parent=5 // pred_region
        // Predicated region
        $region25: #{fe_spp_sfl_parallel.3} parent=23 // pred_check
          %p128 = pneg %p71
        $region26: #{fe_spp_sfl_parallel.3} parent=23 // pred_check_branch
          %130 = sbr.rel (%p128) target = $region28
        $region27: #{fe_spp_sfl_parallel.3} parent=23 // pred_region
          %s131 = sand.u32 %s61, 1
          %s132 = sand.u32 %s61, 1
          %s133 = smul.addr %s132, 32
          %s134 = scalar_lea.vmem [#allocation2], %s133
          %s135 = smul.addr %s9, 2
          %s136 = smul.addr %s135, 8
          %s137 = scalar_lea.vmem %s2, %s136
          // Predicated region
          $region29: #{fe_spp_sfl_parallel.3} parent=27 // pred_check
            _
          $region30: #{fe_spp_sfl_parallel.3} parent=27 // pred_check_branch
            %139 = sbr.rel (0) target = $region32
          $region31: #{fe_spp_sfl_parallel.3} parent=27 // pred_region
            // Predicated region
            $region33: #{fe_spp_sfl_parallel.3} parent=31 // pred_check
              _
            $region34: #{fe_spp_sfl_parallel.3} parent=31 // pred_check_branch
              %141 = sbr.rel (0) target = $region36
            $region35: #{fe_spp_sfl_parallel.3} parent=31 // pred_region
              loop: start=0, step=1, limit=1
              $region37: #{fe_spp_sfl_parallel.3} parent=35 // loop_pre_header
                _
              $region38: #{fe_spp_sfl_parallel.3} parent=35 // loop_header
                %s143 = sphi 0, %s147
                %p144 = scmp.ge.s32.totalorder %s143, 1
                %s148 = sphi %s137, %s137
                %s149 = sphi %s134, %s134
              $region39: #{fe_spp_sfl_parallel.3} parent=35 // loop_header_branch
                %146 = sbr.rel (%p144) target = $region43
              $region40: #{fe_spp_sfl_parallel.3} parent=35 // loop_body
                %v150 = vld [vmem:[%s148] sm:$0xff]
                %151 = vst [vmem:[%s149] sm:$0xff] %v150
                %v152 = vld [vmem:[%s148 + $0x8] sm:$0xff]
                %153 = vst [vmem:[%s149 + $0x8] sm:$0xff] %v152
                %v154 = vld [vmem:[%s148 + $0x50] sm:$0xff]
                %155 = vst [vmem:[%s149 + $0x10] sm:$0xff] %v154
                %v156 = vld [vmem:[%s148 + $0x58] sm:$0xff]
                %157 = vst [vmem:[%s149 + $0x18] sm:$0xff] %v156
              $region41: #{fe_spp_sfl_parallel.3} parent=35 // loop_footer
                %s147 = sadd.s32 1, %s143
              $region42: #{fe_spp_sfl_parallel.3} parent=35 // loop_footer_branch
                %142 = sbr.rel target = $region38
              $region43: #{fe_spp_sfl_parallel.3} parent=35 // loop_exit
                _
            $region36: #{fe_spp_sfl_parallel.3} parent=31 // pred_fallthru
              _
            // Predicated region
            $region44: #{fe_spp_sfl_parallel.3} parent=31 // pred_check
              _
            $region45: #{fe_spp_sfl_parallel.3} parent=31 // pred_check_branch
              %159 = sbr.rel target = $region47
            $region46: #{fe_spp_sfl_parallel.3} parent=31 // pred_region
              _
            $region47: #{fe_spp_sfl_parallel.3} parent=31 // pred_fallthru
              _
          $region32: #{fe_spp_sfl_parallel.3} parent=27 // pred_fallthru
            _
          %160 = vnop
        $region28: #{fe_spp_sfl_parallel.3} parent=23 // pred_fallthru
          _
      $region24: #{fe_spp_sfl_parallel.3} parent=5 // pred_fallthru
        _
      %p161 = scmp.le.s32.totalorder 1, %s9
      %p162 = scmp.lt.s32.totalorder %s9, 6
      %p163 = pnand %p161, %p162
      %p164 = pneg %p163
      // Predicated region
      $region48: #{fe_spp_sfl_parallel.3} parent=5 // pred_check
        _
      $region49: #{fe_spp_sfl_parallel.3} parent=5 // pred_check_branch
        %166 = sbr.rel (%p163) target = $region51
      $region50: #{fe_spp_sfl_parallel.3} parent=5 // pred_region
        %s167 = ssub.s32 %s9, 1
        %s168 = sand.u32 %s64, 1
        %s169 = sand.u32 %s64, 1
        %s170 = smul.addr %s169, 32
        %s171 = scalar_lea.vmem [#allocation2], %s170
        // Predicated region
        $region52: #{fe_spp_sfl_parallel.3} parent=50 // pred_check
          %p172 = pneg %p77
        $region53: #{fe_spp_sfl_parallel.3} parent=50 // pred_check_branch
          %174 = sbr.rel (%p172) target = $region55
        $region54: #{fe_spp_sfl_parallel.3} parent=50 // pred_region
          _
        $region55: #{fe_spp_sfl_parallel.3} parent=50 // pred_fallthru
          _
        %p175 = pneg %p30
        %p176 = pneg %p27
        %p177 = pneg %p51
        %p178 = pneg %p48
        %s179 = sand.u32 %s64, 1
        %s180 = sand.u32 %s64, 1
        %s181 = smul.addr %s180, 32
        %s182 = scalar_lea.vmem [#allocation2], %s181
        %p183 = pneg %p77
        %p184 = pneg %p74
        %p185 = pneg %p103
        %p186 = pneg %p100
        %s187 = sand.u32 %s90, 1
        %s188 = sand.u32 %s90, 1
        %s189 = smul.addr %s188, 16
        %s190 = scalar_lea.vmem [#allocation3], %s189
        %v191 = vld [vmem:[%s171] sm:$0xff]
        %v192 = vld [vmem:[%s171 + $0x8] sm:$0xff]
        %v193 = vld [vmem:[%s171 + $0x10] sm:$0xff]
        %v194 = vld [vmem:[%s171 + $0x18] sm:$0xff]
        %v195 = vld [vmem:[%s0] sm:$0x3]
        %v196 = vld [vmem:[%s1] sm:$0x3]
        %v197 = vlaneseq
        %v198 = vand.u32 %v197, 127
        %vm199 = vcmp.ge.s32.totalorder %v195, 0
        %vm200 = vcmp.lt.s32.totalorder %v195, 16
        %vm201 = vmand %vm199, %vm200
        %vm202 = vcmp.ge.s32.totalorder %v196, 0
        %vm203 = vmand %vm201, %vm202
        %vm204 = vcmp.lt.s32.totalorder %v196, 16
        %vm205 = vmand %vm203, %vm204
        %v206 = vsel %vm205, 1, 0
        %v207 = vlaneseq
        %v208 = vshrl.u32 %v207, 7
        %v209 = vsub.s32 0, %v208
        %v210 = vrot.slane %v206, %v209
        %v211 = vlaneseq
        %v212 = vshrl.u32 %v211, 7
        %v213 = vsub.s32 1, %v212
        %v214 = vrot.slane %v206, %v213
        %vm215 = vcmp.eq.s32.totalorder %v210, 1
        %vm216 = vcmp.eq.s32.totalorder %v214, 1
        %v217 = vsel %vm215, %v191, -inf
        %v218 = vsel %vm216, %v192, -inf
        %v219 = vsel %vm215, %v193, -inf
        %v220 = vsel %vm216, %v194, -inf
        %v221 = vmax.f32 %v217, %v218
        %222 = vmax.xlane.f32.xlu0 %v221
        %v223 = vpop.xlane.xlu0 %222
        %v224 = vmax.f32 %v219, %v220
        %225 = vmax.xlane.f32.xlu0 %v224
        %v226 = vpop.xlane.xlu0 %225
        %vm227 = vcmp.eq.s32.totalorder %v198, 0
        %v228 = vsel %vm227, 1, 0
        %vm229 = vcmp.eq.s32.totalorder %v228, 1
        %v230 = vsel %vm229, %v223, 0.0
        %v231 = vsel %vm229, %v226, 0.0
        %vm232 = vcmp.lt.s32.totalorder %v195, 8
        %vm233 = vmand %vm199, %vm232
        %vm234 = vmand %vm233, %vm202
        %vm235 = vcmp.lt.s32.totalorder %v196, 8
        %vm236 = vmand %vm234, %vm235
        %v237 = vsel %vm236, 1, 0
        %v238 = vlaneseq
        %v239 = vshrl.u32 %v238, 7
        %v240 = vsub.s32 0, %v239
        %v241 = vrot.slane %v237, %v240
        %v242 = vlaneseq
        %v243 = vshrl.u32 %v242, 7
        %v244 = vsub.s32 1, %v243
        %v245 = vrot.slane %v237, %v244
        %vm246 = vcmp.eq.s32.totalorder %v241, 1
        %vm247 = vcmp.eq.s32.totalorder %v245, 1
        %v248 = vsel %vm246, %v191, -inf
        %v249 = vsel %vm247, %v192, -inf
        %v250 = vsel %vm246, %v193, -inf
        %v251 = vsel %vm247, %v194, -inf
        %v252 = vmax.f32 %v248, %v249
        %253 = vmax.xlane.f32.xlu0 %v252
        %v254 = vpop.xlane.xlu0 %253
        %v255 = vmax.f32 %v250, %v251
        %256 = vmax.xlane.f32.xlu0 %v255
        %v257 = vpop.xlane.xlu0 %256
        %vm258 = vcmp.eq.s32.totalorder %v198, 1
        %v259 = vsel %vm258, 1, 0
        %vm260 = vcmp.eq.s32.totalorder %v259, 1
        %v261 = vsel %vm260, %v254, %v230
        %v262 = vsel %vm260, %v257, %v231
        %vm263 = vcmp.ge.s32.totalorder %v196, 8
        %vm264 = vmand %vm233, %vm263
        %vm265 = vmand %vm264, %vm204
        %v266 = vsel %vm265, 1, 0
        %v267 = vlaneseq
        %v268 = vshrl.u32 %v267, 7
        %v269 = vsub.s32 0, %v268
        %v270 = vrot.slane %v266, %v269
        %v271 = vlaneseq
        %v272 = vshrl.u32 %v271, 7
        %v273 = vsub.s32 1, %v272
        %v274 = vrot.slane %v266, %v273
        %vm275 = vcmp.eq.s32.totalorder %v270, 1
        %vm276 = vcmp.eq.s32.totalorder %v274, 1
        %v277 = vsel %vm275, %v191, -inf
        %v278 = vsel %vm276, %v192, -inf
        %v279 = vsel %vm275, %v193, -inf
        %v280 = vsel %vm276, %v194, -inf
        %v281 = vmax.f32 %v277, %v278
        %282 = vmax.xlane.f32.xlu0 %v281
        %v283 = vpop.xlane.xlu0 %282
        %v284 = vmax.f32 %v279, %v280
        %285 = vmax.xlane.f32.xlu0 %v284
        %v286 = vpop.xlane.xlu0 %285
        %vm287 = vcmp.eq.s32.totalorder %v198, 2
        %v288 = vsel %vm287, 1, 0
        %vm289 = vcmp.eq.s32.totalorder %v288, 1
        %v290 = vsel %vm289, %v283, %v261
        %v291 = vsel %vm289, %v286, %v262
        %vm292 = vcmp.ge.s32.totalorder %v195, 8
        %vm293 = vmand %vm292, %vm200
        %vm294 = vmand %vm293, %vm202
        %vm295 = vmand %vm294, %vm235
        %v296 = vsel %vm295, 1, 0
        %v297 = vlaneseq
        %v298 = vshrl.u32 %v297, 7
        %v299 = vsub.s32 0, %v298
        %v300 = vrot.slane %v296, %v299
        %v301 = vlaneseq
        %v302 = vshrl.u32 %v301, 7
        %v303 = vsub.s32 1, %v302
        %v304 = vrot.slane %v296, %v303
        %vm305 = vcmp.eq.s32.totalorder %v300, 1
        %vm306 = vcmp.eq.s32.totalorder %v304, 1
        %v307 = vsel %vm305, %v191, -inf
        %v308 = vsel %vm306, %v192, -inf
        %v309 = vsel %vm305, %v193, -inf
        %v310 = vsel %vm306, %v194, -inf
        %v311 = vmax.f32 %v307, %v308
        %312 = vmax.xlane.f32.xlu0 %v311
        %v313 = vpop.xlane.xlu0 %312
        %v314 = vmax.f32 %v309, %v310
        %315 = vmax.xlane.f32.xlu0 %v314
        %v316 = vpop.xlane.xlu0 %315
        %vm317 = vcmp.eq.s32.totalorder %v198, 3
        %v318 = vsel %vm317, 1, 0
        %vm319 = vcmp.eq.s32.totalorder %v318, 1
        %v320 = vsel %vm319, %v313, %v290
        %v321 = vsel %vm319, %v316, %v291
        %vm322 = vmand %vm293, %vm263
        %vm323 = vmand %vm322, %vm204
        %v324 = vsel %vm323, 1, 0
        %v325 = vlaneseq
        %v326 = vshrl.u32 %v325, 7
        %v327 = vsub.s32 0, %v326
        %v328 = vrot.slane %v324, %v327
        %v329 = vlaneseq
        %v330 = vshrl.u32 %v329, 7
        %v331 = vsub.s32 1, %v330
        %v332 = vrot.slane %v324, %v331
        %vm333 = vcmp.eq.s32.totalorder %v328, 1
        %vm334 = vcmp.eq.s32.totalorder %v332, 1
        %v335 = vsel %vm333, %v191, -inf
        %v336 = vsel %vm334, %v192, -inf
        %v337 = vsel %vm333, %v193, -inf
        %v338 = vsel %vm334, %v194, -inf
        %v339 = vmax.f32 %v335, %v336
        %340 = vmax.xlane.f32.xlu0 %v339
        %v341 = vpop.xlane.xlu0 %340
        %v342 = vmax.f32 %v337, %v338
        %343 = vmax.xlane.f32.xlu0 %v342
        %v344 = vpop.xlane.xlu0 %343
        %vm345 = vcmp.eq.s32.totalorder %v198, 4
        %v346 = vsel %vm345, 1, 0
        %vm347 = vcmp.eq.s32.totalorder %v346, 1
        %v348 = vsel %vm347, %v341, %v320
        %v349 = vsel %vm347, %v344, %v321
        %vm350 = vcmp.lt.s32.totalorder %v195, 6
        %vm351 = vmand %vm199, %vm350
        %vm352 = vmand %vm351, %vm202
        %vm353 = vcmp.lt.s32.totalorder %v196, 6
        %vm354 = vmand %vm352, %vm353
        %v355 = vsel %vm354, 1, 0
        %v356 = vlaneseq
        %v357 = vshrl.u32 %v356, 7
        %v358 = vsub.s32 0, %v357
        %v359 = vrot.slane %v355, %v358
        %v360 = vlaneseq
        %v361 = vshrl.u32 %v360, 7
        %v362 = vsub.s32 1, %v361
        %v363 = vrot.slane %v355, %v362
        %vm364 = vcmp.eq.s32.totalorder %v359, 1
        %vm365 = vcmp.eq.s32.totalorder %v363, 1
        %v366 = vsel %vm364, %v191, -inf
        %v367 = vsel %vm365, %v192, -inf
        %v368 = vsel %vm364, %v193, -inf
        %v369 = vsel %vm365, %v194, -inf
        %v370 = vmax.f32 %v366, %v367
        %371 = vmax.xlane.f32.xlu0 %v370
        %v372 = vpop.xlane.xlu0 %371
        %v373 = vmax.f32 %v368, %v369
        %374 = vmax.xlane.f32.xlu0 %v373
        %v375 = vpop.xlane.xlu0 %374
        %vm376 = vcmp.eq.s32.totalorder %v198, 5
        %v377 = vsel %vm376, 1, 0
        %vm378 = vcmp.eq.s32.totalorder %v377, 1
        %v379 = vsel %vm378, %v372, %v348
        %v380 = vsel %vm378, %v375, %v349
        %vm381 = vcmp.ge.s32.totalorder %v196, 5
        %vm382 = vmand %vm351, %vm381
        %vm383 = vcmp.lt.s32.totalorder %v196, 11
        %vm384 = vmand %vm382, %vm383
        %v385 = vsel %vm384, 1, 0
        %v386 = vlaneseq
        %v387 = vshrl.u32 %v386, 7
        %v388 = vsub.s32 0, %v387
        %v389 = vrot.slane %v385, %v388
        %v390 = vlaneseq
        %v391 = vshrl.u32 %v390, 7
        %v392 = vsub.s32 1, %v391
        %v393 = vrot.slane %v385, %v392
        %vm394 = vcmp.eq.s32.totalorder %v389, 1
        %vm395 = vcmp.eq.s32.totalorder %v393, 1
        %v396 = vsel %vm394, %v191, -inf
        %v397 = vsel %vm395, %v192, -inf
        %v398 = vsel %vm394, %v193, -inf
        %v399 = vsel %vm395, %v194, -inf
        %v400 = vmax.f32 %v396, %v397
        %401 = vmax.xlane.f32.xlu0 %v400
        %v402 = vpop.xlane.xlu0 %401
        %v403 = vmax.f32 %v398, %v399
        %404 = vmax.xlane.f32.xlu0 %v403
        %v405 = vpop.xlane.xlu0 %404
        %vm406 = vcmp.eq.s32.totalorder %v198, 6
        %v407 = vsel %vm406, 1, 0
        %vm408 = vcmp.eq.s32.totalorder %v407, 1
        %v409 = vsel %vm408, %v402, %v379
        %v410 = vsel %vm408, %v405, %v380
        %vm411 = vcmp.ge.s32.totalorder %v196, 10
        %vm412 = vmand %vm351, %vm411
        %vm413 = vmand %vm412, %vm204
        %v414 = vsel %vm413, 1, 0
        %v415 = vlaneseq
        %v416 = vshrl.u32 %v415, 7
        %v417 = vsub.s32 0, %v416
        %v418 = vrot.slane %v414, %v417
        %v419 = vlaneseq
        %v420 = vshrl.u32 %v419, 7
        %v421 = vsub.s32 1, %v420
        %v422 = vrot.slane %v414, %v421
        %vm423 = vcmp.eq.s32.totalorder %v418, 1
        %vm424 = vcmp.eq.s32.totalorder %v422, 1
        %v425 = vsel %vm423, %v191, -inf
        %v426 = vsel %vm424, %v192, -inf
        %v427 = vsel %vm423, %v193, -inf
        %v428 = vsel %vm424, %v194, -inf
        %v429 = vmax.f32 %v425, %v426
        %430 = vmax.xlane.f32.xlu0 %v429
        %v431 = vpop.xlane.xlu0 %430
        %v432 = vmax.f32 %v427, %v428
        %433 = vmax.xlane.f32.xlu0 %v432
        %v434 = vpop.xlane.xlu0 %433
        %vm435 = vcmp.eq.s32.totalorder %v198, 7
        %v436 = vsel %vm435, 1, 0
        %vm437 = vcmp.eq.s32.totalorder %v436, 1
        %v438 = vsel %vm437, %v431, %v409
        %v439 = vsel %vm437, %v434, %v410
        %vm440 = vcmp.ge.s32.totalorder %v195, 5
        %vm441 = vcmp.lt.s32.totalorder %v195, 11
        %vm442 = vmand %vm440, %vm441
        %vm443 = vmand %vm442, %vm202
        %vm444 = vmand %vm443, %vm353
        %v445 = vsel %vm444, 1, 0
        %v446 = vlaneseq
        %v447 = vshrl.u32 %v446, 7
        %v448 = vsub.s32 0, %v447
        %v449 = vrot.slane %v445, %v448
        %v450 = vlaneseq
        %v451 = vshrl.u32 %v450, 7
        %v452 = vsub.s32 1, %v451
        %v453 = vrot.slane %v445, %v452
        %vm454 = vcmp.eq.s32.totalorder %v449, 1
        %vm455 = vcmp.eq.s32.totalorder %v453, 1
        %v456 = vsel %vm454, %v191, -inf
        %v457 = vsel %vm455, %v192, -inf
        %v458 = vsel %vm454, %v193, -inf
        %v459 = vsel %vm455, %v194, -inf
        %v460 = vmax.f32 %v456, %v457
        %461 = vmax.xlane.f32.xlu0 %v460
        %v462 = vpop.xlane.xlu0 %461
        %v463 = vmax.f32 %v458, %v459
        %464 = vmax.xlane.f32.xlu0 %v463
        %v465 = vpop.xlane.xlu0 %464
        %vm466 = vcmp.eq.s32.totalorder %v198, 8
        %v467 = vsel %vm466, 1, 0
        %vm468 = vcmp.eq.s32.totalorder %v467, 1
        %v469 = vsel %vm468, %v462, %v438
        %v470 = vsel %vm468, %v465, %v439
        %vm471 = vmand %vm442, %vm381
        %vm472 = vmand %vm471, %vm383
        %v473 = vsel %vm472, 1, 0
        %v474 = vlaneseq
        %v475 = vshrl.u32 %v474, 7
        %v476 = vsub.s32 0, %v475
        %v477 = vrot.slane %v473, %v476
        %v478 = vlaneseq
        %v479 = vshrl.u32 %v478, 7
        %v480 = vsub.s32 1, %v479
        %v481 = vrot.slane %v473, %v480
        %vm482 = vcmp.eq.s32.totalorder %v477, 1
        %vm483 = vcmp.eq.s32.totalorder %v481, 1
        %v484 = vsel %vm482, %v191, -inf
        %v485 = vsel %vm483, %v192, -inf
        %v486 = vsel %vm482, %v193, -inf
        %v487 = vsel %vm483, %v194, -inf
        %v488 = vmax.f32 %v484, %v485
        %489 = vmax.xlane.f32.xlu0 %v488
        %v490 = vpop.xlane.xlu0 %489
        %v491 = vmax.f32 %v486, %v487
        %492 = vmax.xlane.f32.xlu0 %v491
        %v493 = vpop.xlane.xlu0 %492
        %vm494 = vcmp.eq.s32.totalorder %v198, 9
        %v495 = vsel %vm494, 1, 0
        %vm496 = vcmp.eq.s32.totalorder %v495, 1
        %v497 = vsel %vm496, %v490, %v469
        %v498 = vsel %vm496, %v493, %v470
        %vm499 = vmand %vm442, %vm411
        %vm500 = vmand %vm499, %vm204
        %v501 = vsel %vm500, 1, 0
        %v502 = vlaneseq
        %v503 = vshrl.u32 %v502, 7
        %v504 = vsub.s32 0, %v503
        %v505 = vrot.slane %v501, %v504
        %v506 = vlaneseq
        %v507 = vshrl.u32 %v506, 7
        %v508 = vsub.s32 1, %v507
        %v509 = vrot.slane %v501, %v508
        %vm510 = vcmp.eq.s32.totalorder %v505, 1
        %vm511 = vcmp.eq.s32.totalorder %v509, 1
        %v512 = vsel %vm510, %v191, -inf
        %v513 = vsel %vm511, %v192, -inf
        %v514 = vsel %vm510, %v193, -inf
        %v515 = vsel %vm511, %v194, -inf
        %v516 = vmax.f32 %v512, %v513
        %517 = vmax.xlane.f32.xlu0 %v516
        %v518 = vpop.xlane.xlu0 %517
        %v519 = vmax.f32 %v514, %v515
        %520 = vmax.xlane.f32.xlu0 %v519
        %v521 = vpop.xlane.xlu0 %520
        %vm522 = vcmp.eq.s32.totalorder %v198, 10
        %v523 = vsel %vm522, 1, 0
        %vm524 = vcmp.eq.s32.totalorder %v523, 1
        %v525 = vsel %vm524, %v518, %v497
        %v526 = vsel %vm524, %v521, %v498
        %vm527 = vcmp.ge.s32.totalorder %v195, 10
        %vm528 = vmand %vm527, %vm200
        %vm529 = vmand %vm528, %vm202
        %vm530 = vmand %vm529, %vm353
        %v531 = vsel %vm530, 1, 0
        %v532 = vlaneseq
        %v533 = vshrl.u32 %v532, 7
        %v534 = vsub.s32 0, %v533
        %v535 = vrot.slane %v531, %v534
        %v536 = vlaneseq
        %v537 = vshrl.u32 %v536, 7
        %v538 = vsub.s32 1, %v537
        %v539 = vrot.slane %v531, %v538
        %vm540 = vcmp.eq.s32.totalorder %v535, 1
        %vm541 = vcmp.eq.s32.totalorder %v539, 1
        %v542 = vsel %vm540, %v191, -inf
        %v543 = vsel %vm541, %v192, -inf
        %v544 = vsel %vm540, %v193, -inf
        %v545 = vsel %vm541, %v194, -inf
        %v546 = vmax.f32 %v542, %v543
        %547 = vmax.xlane.f32.xlu0 %v546
        %v548 = vpop.xlane.xlu0 %547
        %v549 = vmax.f32 %v544, %v545
        %550 = vmax.xlane.f32.xlu0 %v549
        %v551 = vpop.xlane.xlu0 %550
        %vm552 = vcmp.eq.s32.totalorder %v198, 11
        %v553 = vsel %vm552, 1, 0
        %vm554 = vcmp.eq.s32.totalorder %v553, 1
        %v555 = vsel %vm554, %v548, %v525
        %v556 = vsel %vm554, %v551, %v526
        %vm557 = vmand %vm528, %vm381
        %vm558 = vmand %vm557, %vm383
        %v559 = vsel %vm558, 1, 0
        %v560 = vlaneseq
        %v561 = vshrl.u32 %v560, 7
        %v562 = vsub.s32 0, %v561
        %v563 = vrot.slane %v559, %v562
        %v564 = vlaneseq
        %v565 = vshrl.u32 %v564, 7
        %v566 = vsub.s32 1, %v565
        %v567 = vrot.slane %v559, %v566
        %vm568 = vcmp.eq.s32.totalorder %v563, 1
        %vm569 = vcmp.eq.s32.totalorder %v567, 1
        %v570 = vsel %vm568, %v191, -inf
        %v571 = vsel %vm569, %v192, -inf
        %v572 = vsel %vm568, %v193, -inf
        %v573 = vsel %vm569, %v194, -inf
        %v574 = vmax.f32 %v570, %v571
        %575 = vmax.xlane.f32.xlu0 %v574
        %v576 = vpop.xlane.xlu0 %575
        %v577 = vmax.f32 %v572, %v573
        %578 = vmax.xlane.f32.xlu0 %v577
        %v579 = vpop.xlane.xlu0 %578
        %vm580 = vcmp.eq.s32.totalorder %v198, 12
        %v581 = vsel %vm580, 1, 0
        %vm582 = vcmp.eq.s32.totalorder %v581, 1
        %v583 = vsel %vm582, %v576, %v555
        %v584 = vsel %vm582, %v579, %v556
        %vm585 = vmand %vm528, %vm411
        %vm586 = vmand %vm585, %vm204
        %v587 = vsel %vm586, 1, 0
        %v588 = vlaneseq
        %v589 = vshrl.u32 %v588, 7
        %v590 = vsub.s32 0, %v589
        %v591 = vrot.slane %v587, %v590
        %v592 = vlaneseq
        %v593 = vshrl.u32 %v592, 7
        %v594 = vsub.s32 1, %v593
        %v595 = vrot.slane %v587, %v594
        %vm596 = vcmp.eq.s32.totalorder %v591, 1
        %vm597 = vcmp.eq.s32.totalorder %v595, 1
        %v598 = vsel %vm596, %v191, -inf
        %v599 = vsel %vm597, %v192, -inf
        %v600 = vsel %vm596, %v193, -inf
        %v601 = vsel %vm597, %v194, -inf
        %v602 = vmax.f32 %v598, %v599
        %603 = vmax.xlane.f32.xlu0 %v602
        %v604 = vpop.xlane.xlu0 %603
        %v605 = vmax.f32 %v600, %v601
        %606 = vmax.xlane.f32.xlu0 %v605
        %v607 = vpop.xlane.xlu0 %606
        %vm608 = vcmp.eq.s32.totalorder %v198, 13
        %v609 = vsel %vm608, 1, 0
        %vm610 = vcmp.eq.s32.totalorder %v609, 1
        %v611 = vsel %vm610, %v604, %v583
        %v612 = vsel %vm610, %v607, %v584
        %vm613 = vcmask 113664
        %v614 = vsel %vm613, %v611, 0.0
        %v615 = vsel %vm613, %v612, 0.0
        %v616 = vadd.f32 %v614, %v615
        %v617 = vrcp.pop 2.0
        %v618 = vmul.f32 %v616, %v617
        %v619 = vsub.f32 %v611, %v618
        %v620 = vsub.f32 %v612, %v618
        %v621 = vmul.f32 %v619, %v619
        %v622 = vmul.f32 %v620, %v620
        %v623 = vsel %vm613, %v621, 0.0
        %v624 = vsel %vm613, %v622, 0.0
        %v625 = vadd.f32 %v623, %v624
        %v626 = vrsqrt.pop %v625
        %v627 = vmul.f32 %v625, %v626
        %vm628 = vcmp.eq.f32.partialorder %v625, inf
        %v629 = vsel %vm628, %v625, %v627
        %vm630 = vcmp.eq.f32.partialorder %v625, 0.0
        %v631 = vand.u32 %v625, 2147483648
        %v632 = vsel %vm630, %v631, %v629
        %v633 = vadd.f32 %v632, 0.01
        %v634 = vrcp.pop %v633
        %v635 = vmul.f32 %v619, %v634
        %v636 = vmul.f32 %v620, %v634
        %637 = vst.msk [vmem:[%s190] sm:$0xff] %vm613, %v635
        %638 = vst.msk [vmem:[%s190 + $0x8] sm:$0xff] %vm613, %v636
        %s639 = sand.u32 %s90, 1
        %s640 = sand.u32 %s90, 1
        %s641 = smul.addr %s640, 16
        %s642 = scalar_lea.vmem [#allocation3], %s641
        // Predicated region
        $region56: #{fe_spp_sfl_parallel.3} parent=50 // pred_check
          %p643 = pneg %p100
        $region57: #{fe_spp_sfl_parallel.3} parent=50 // pred_check_branch
          %645 = sbr.rel (%p643) target = $region59
        $region58: #{fe_spp_sfl_parallel.3} parent=50 // pred_region
          %s646 = smul.addr %s14, 8
          %s647 = scalar_lea.vmem %s3, %s646
          // Predicated region
          $region60: #{fe_spp_sfl_parallel.3} parent=58 // pred_check
            _
          $region61: #{fe_spp_sfl_parallel.3} parent=58 // pred_check_branch
            %649 = sbr.rel (0) target = $region63
          $region62: #{fe_spp_sfl_parallel.3} parent=58 // pred_region
            // Predicated region
            $region64: #{fe_spp_sfl_parallel.3} parent=62 // pred_check
              _
            $region65: #{fe_spp_sfl_parallel.3} parent=62 // pred_check_branch
              %651 = sbr.rel (0) target = $region67
            $region66: #{fe_spp_sfl_parallel.3} parent=62 // pred_region
              // Predicated region
              $region79: #{fe_spp_sfl_parallel.3} parent=66 // pred_check
                _
              $region80: #{fe_spp_sfl_parallel.3} parent=66 // pred_check_branch
                %668 = sbr.rel (0) target = $region82
              $region81: #{fe_spp_sfl_parallel.3} parent=66 // pred_region
                loop: start=0, step=1, limit=1
                $region83: #{fe_spp_sfl_parallel.3} parent=81 // loop_pre_header
                  _
                $region84: #{fe_spp_sfl_parallel.3} parent=81 // loop_header
                  %s670 = sphi 0, %s674
                  %p671 = scmp.ge.s32.totalorder %s670, 1
                  %s675 = sphi %s642, %s642
                  %s676 = sphi %s647, %s647
                $region85: #{fe_spp_sfl_parallel.3} parent=81 // loop_header_branch
                  %673 = sbr.rel (%p671) target = $region89
                $region86: #{fe_spp_sfl_parallel.3} parent=81 // loop_body
                  %v677 = vld [vmem:[%s675] sm:$0xff]
                  %678 = vst [vmem:[%s676] sm:$0xff] %v677
                  %v679 = vld [vmem:[%s675 + $0x8] sm:$0xff]
                  %680 = vst [vmem:[%s676 + $0x28] sm:$0xff] %v679
                $region87: #{fe_spp_sfl_parallel.3} parent=81 // loop_footer
                  %s674 = sadd.s32 1, %s670
                $region88: #{fe_spp_sfl_parallel.3} parent=81 // loop_footer_branch
                  %669 = sbr.rel target = $region84
                $region89: #{fe_spp_sfl_parallel.3} parent=81 // loop_exit
                  _
              $region82: #{fe_spp_sfl_parallel.3} parent=66 // pred_fallthru
                _
              // Predicated region
              $region90: #{fe_spp_sfl_parallel.3} parent=66 // pred_check
                _
              $region91: #{fe_spp_sfl_parallel.3} parent=66 // pred_check_branch
                %682 = sbr.rel target = $region93
              $region92: #{fe_spp_sfl_parallel.3} parent=66 // pred_region
                _
              $region93: #{fe_spp_sfl_parallel.3} parent=66 // pred_fallthru
                _
            $region67: #{fe_spp_sfl_parallel.3} parent=62 // pred_fallthru
              _
            // Predicated region
            $region68: #{fe_spp_sfl_parallel.3} parent=62 // pred_check
              _
            $region69: #{fe_spp_sfl_parallel.3} parent=62 // pred_check_branch
              %653 = sbr.rel target = $region71
            $region70: #{fe_spp_sfl_parallel.3} parent=62 // pred_region
              loop: start=0, step=1, limit=1
              $region72: #{fe_spp_sfl_parallel.3} parent=70 // loop_pre_header
                _
              $region73: #{fe_spp_sfl_parallel.3} parent=70 // loop_header
                %s656 = sphi 0, %s660
                %p657 = scmp.ge.s32.totalorder %s656, 1
                %s661 = sphi %s642, %s642
                %s662 = sphi %s647, %s647
              $region74: #{fe_spp_sfl_parallel.3} parent=70 // loop_header_branch
                %659 = sbr.rel (%p657) target = $region78
              $region75: #{fe_spp_sfl_parallel.3} parent=70 // loop_body
                %v663 = vld [vmem:[%s661] sm:$0xff]
                %664 = vst [vmem:[%s662] sm:$0xff] %v663
                %v665 = vld [vmem:[%s661 + $0x8] sm:$0xff]
                %666 = vst [vmem:[%s662 + $0x28] sm:$0xff] %v665
              $region76: #{fe_spp_sfl_parallel.3} parent=70 // loop_footer
                %s660 = sadd.s32 1, %s656
              $region77: #{fe_spp_sfl_parallel.3} parent=70 // loop_footer_branch
                %655 = sbr.rel target = $region73
              $region78: #{fe_spp_sfl_parallel.3} parent=70 // loop_exit
                _
            $region71: #{fe_spp_sfl_parallel.3} parent=62 // pred_fallthru
              _
          $region63: #{fe_spp_sfl_parallel.3} parent=58 // pred_fallthru
            _
          %683 = vnop
        $region59: #{fe_spp_sfl_parallel.3} parent=50 // pred_fallthru
          _
      $region51: #{fe_spp_sfl_parallel.3} parent=5 // pred_fallthru
        _
      %p684 = scmp.le.s32.totalorder 2, %s9
      // Predicated region
      $region94: #{fe_spp_sfl_parallel.3} parent=5 // pred_check
        %p685 = pneg %p684
      $region95: #{fe_spp_sfl_parallel.3} parent=5 // pred_check_branch
        %687 = sbr.rel (%p685) target = $region97
      $region96: #{fe_spp_sfl_parallel.3} parent=5 // pred_region
        %s688 = ssub.s32 %s9, 2
        // Predicated region
        $region98: #{fe_spp_sfl_parallel.3} parent=96 // pred_check
          %p689 = pneg %p106
        $region99: #{fe_spp_sfl_parallel.3} parent=96 // pred_check_branch
          %691 = sbr.rel (%p689) target = $region101
        $region100: #{fe_spp_sfl_parallel.3} parent=96 // pred_region
          %s692 = sand.u32 %s91, 1
          %s693 = sand.u32 %s91, 1
          %s694 = smul.addr %s693, 16
          %s695 = scalar_lea.vmem [#allocation3], %s694
        $region101: #{fe_spp_sfl_parallel.3} parent=96 // pred_fallthru
          _
      $region97: #{fe_spp_sfl_parallel.3} parent=5 // pred_fallthru
        _
    $region6: #{fe_spp_sfl_parallel.3} parent=1 // loop_footer
      %s13 = sadd.s32 1, %s9
    $region7: #{fe_spp_sfl_parallel.3} parent=1 // loop_footer_branch
      %8 = sbr.rel target = $region3
    $region8: #{fe_spp_sfl_parallel.3} parent=1 // loop_exit
      _

// kernel: fe_spp_sfl_parallel.2
$region0: #{fe_spp_sfl_parallel.2}
  #allocation0 [shape = 'u32[]', space=smem, size = 0x4, offset = 0x4, fixed_abs, tag = 'smem constant byte address 0x4 - core index']
  #allocation1 [shape = 'u32[144,128]{1,0:T(1,128)}', space=vmem, size = 0x12000, scoped, tag = 'internal scratch']
  %s0 = inlined_call_operand.vmem [shape: s32[1,256], index: 0, kind: input, shape index: {}]
  %s1 = inlined_call_operand.vmem [shape: s32[1,256], index: 1, kind: input, shape index: {}]
  %s2 = inlined_call_operand.vmem [shape: f32[2,4,256], index: 2, kind: input, shape index: {}]
  %s3 = inlined_call_operand.vmem [shape: f32[9,24,4], index: 3, kind: input, shape index: {}]
  %s4 = inlined_call_operand.vmem [shape: f32[24,1], index: 4, kind: input, shape index: {}]
  %s5 = inlined_call_operand.vmem [shape: f32[9,16,24], index: 5, kind: input, shape index: {}]
  %s6 = inlined_call_operand.vmem [shape: f32[16,1], index: 6, kind: input, shape index: {}]
  %s7 = inlined_call_operand.vmem [shape: f32[2,40,256], index: 7, kind: output, shape index: {}]
  %s8 = sld [smem:[#allocation0]]
  $region61: #{fe_spp_sfl_parallel.2} parent=0
    _
  %s10 = ssub.s32 1, %s8
  %s11 = scalar_select 0, %s10, %s8
  loop: start=0, step=1, limit=4
  $region2: #{fe_spp_sfl_parallel.2} parent=0 // loop_pre_header
    _
  $region3: #{fe_spp_sfl_parallel.2} parent=0 // loop_header
    %s13 = sphi 0, %s17
    %p14 = scmp.ge.s32.totalorder %s13, 4
    %s21 = sphi 0, %s21
    %s23 = sphi 0, %s21
    %s24 = sphi 0, %s23
    %s38 = sphi 0, %s24
    %s42 = sphi 0, %s42
    %s44 = sphi 0, %s42
    %s45 = sphi 0, %s44
    %s59 = sphi 0, %s45
    %s65 = sphi 0, %s67
    %s68 = sphi 0, %s65
    %s69 = sphi 0, %s68
    %s85 = sphi 0, %s69
    %s89 = sphi 0, %s89
    %s91 = sphi 0, %s89
    %s92 = sphi 0, %s91
    %s106 = sphi 0, %s92
    %s110 = sphi 0, %s110
    %s112 = sphi 0, %s110
    %s113 = sphi 0, %s112
    %s127 = sphi 0, %s113
    %s131 = sphi 0, %s131
    %s133 = sphi 0, %s131
    %s134 = sphi 0, %s133
    %s148 = sphi 0, %s134
    %s152 = sphi 0, %s152
    %s154 = sphi 0, %s152
    %s155 = sphi 0, %s154
    %s169 = sphi 0, %s155
    %s175 = sphi 0, %s177
    %s178 = sphi 0, %s175
    %s179 = sphi 0, %s178
    %s195 = sphi 0, %s179
  $region4: #{fe_spp_sfl_parallel.2} parent=0 // loop_header_branch
    %16 = sbr.rel (%p14) target = $region8
  $region5: #{fe_spp_sfl_parallel.2} parent=0 // loop_body
    %s18 = ssub.s32 %s13, 1
    %s19 = ssub.s32 %s13, 2
    %s20 = sadd.s32 %s13, 1
    %s22 = sadd.s32 %s21, 1
    %p25 = scmp.eq.s32.totalorder %s13, 1
    %p26 = scmp.ne.s32.totalorder %s21, %s23
    %p27 = scmp.eq.s32.totalorder %s13, 0
    %p28 = por %p26, %p27
    %p29 = scmp.ne.s32.totalorder %s21, %s23
    %p30 = scmp.eq.s32.totalorder %s18, 1
    %p31 = por %p29, %p30
    %p32 = scmp.ne.s32.totalorder %s23, %s24
    %p33 = scmp.eq.s32.totalorder %s18, 0
    %p34 = por %p32, %p33
    %p35 = scmp.ne.s32.totalorder %s23, %s24
    %p36 = scmp.eq.s32.totalorder %s19, 1
    %p37 = por %p35, %p36
    %p39 = scmp.ne.s32.totalorder %s24, %s38
    %p40 = scmp.eq.s32.totalorder %s19, 0
    %p41 = por %p39, %p40
    %s43 = sadd.s32 %s42, 1
    %p46 = scmp.eq.s32.totalorder %s13, 1
    %p47 = scmp.ne.s32.totalorder %s42, %s44
    %p48 = scmp.eq.s32.totalorder %s13, 0
    %p49 = por %p47, %p48
    %p50 = scmp.ne.s32.totalorder %s42, %s44
    %p51 = scmp.eq.s32.totalorder %s18, 1
    %p52 = por %p50, %p51
    %p53 = scmp.ne.s32.totalorder %s44, %s45
    %p54 = scmp.eq.s32.totalorder %s18, 0
    %p55 = por %p53, %p54
    %p56 = scmp.ne.s32.totalorder %s44, %s45
    %p57 = scmp.eq.s32.totalorder %s19, 1
    %p58 = por %p56, %p57
    %p60 = scmp.ne.s32.totalorder %s45, %s59
    %p61 = scmp.eq.s32.totalorder %s19, 0
    %p62 = por %p60, %p61
    %s63 = ssub.s32 %s13, %s20
    %p64 = scmp.eq.s32.totalorder %s63, 0
    %s66 = sadd.s32 %s65, 1
    %s67 = scalar_select %p64, %s65, %s66
    %p70 = pneg %p64
    %p71 = scmp.eq.s32.totalorder %s13, 1
    %p72 = por %p70, %p71
    %p73 = scmp.ne.s32.totalorder %s65, %s68
    %p74 = scmp.eq.s32.totalorder %s13, 0
    %p75 = por %p73, %p74
    %p76 = scmp.ne.s32.totalorder %s65, %s68
    %p77 = scmp.eq.s32.totalorder %s18, 1
    %p78 = por %p76, %p77
    %p79 = scmp.ne.s32.totalorder %s68, %s69
    %p80 = scmp.eq.s32.totalorder %s18, 0
    %p81 = por %p79, %p80
    %p82 = scmp.ne.s32.totalorder %s68, %s69
    %p83 = scmp.eq.s32.totalorder %s19, 1
    %p84 = por %p82, %p83
    %p86 = scmp.ne.s32.totalorder %s69, %s85
    %p87 = scmp.eq.s32.totalorder %s19, 0
    %p88 = por %p86, %p87
    %s90 = sadd.s32 %s89, 1
    %p93 = scmp.eq.s32.totalorder %s13, 1
    %p94 = scmp.ne.s32.totalorder %s89, %s91
    %p95 = scmp.eq.s32.totalorder %s13, 0
    %p96 = por %p94, %p95
    %p97 = scmp.ne.s32.totalorder %s89, %s91
    %p98 = scmp.eq.s32.totalorder %s18, 1
    %p99 = por %p97, %p98
    %p100 = scmp.ne.s32.totalorder %s91, %s92
    %p101 = scmp.eq.s32.totalorder %s18, 0
    %p102 = por %p100, %p101
    %p103 = scmp.ne.s32.totalorder %s91, %s92
    %p104 = scmp.eq.s32.totalorder %s19, 1
    %p105 = por %p103, %p104
    %p107 = scmp.ne.s32.totalorder %s92, %s106
    %p108 = scmp.eq.s32.totalorder %s19, 0
    %p109 = por %p107, %p108
    %s111 = sadd.s32 %s110, 1
    %p114 = scmp.eq.s32.totalorder %s13, 1
    %p115 = scmp.ne.s32.totalorder %s110, %s112
    %p116 = scmp.eq.s32.totalorder %s13, 0
    %p117 = por %p115, %p116
    %p118 = scmp.ne.s32.totalorder %s110, %s112
    %p119 = scmp.eq.s32.totalorder %s18, 1
    %p120 = por %p118, %p119
    %p121 = scmp.ne.s32.totalorder %s112, %s113
    %p122 = scmp.eq.s32.totalorder %s18, 0
    %p123 = por %p121, %p122
    %p124 = scmp.ne.s32.totalorder %s112, %s113
    %p125 = scmp.eq.s32.totalorder %s19, 1
    %p126 = por %p124, %p125
    %p128 = scmp.ne.s32.totalorder %s113, %s127
    %p129 = scmp.eq.s32.totalorder %s19, 0
    %p130 = por %p128, %p129
    %s132 = sadd.s32 %s131, 1
    %p135 = scmp.eq.s32.totalorder %s13, 1
    %p136 = scmp.ne.s32.totalorder %s131, %s133
    %p137 = scmp.eq.s32.totalorder %s13, 0
    %p138 = por %p136, %p137
    %p139 = scmp.ne.s32.totalorder %s131, %s133
    %p140 = scmp.eq.s32.totalorder %s18, 1
    %p141 = por %p139, %p140
    %p142 = scmp.ne.s32.totalorder %s133, %s134
    %p143 = scmp.eq.s32.totalorder %s18, 0
    %p144 = por %p142, %p143
    %p145 = scmp.ne.s32.totalorder %s133, %s134
    %p146 = scmp.eq.s32.totalorder %s19, 1
    %p147 = por %p145, %p146
    %p149 = scmp.ne.s32.totalorder %s134, %s148
    %p150 = scmp.eq.s32.totalorder %s19, 0
    %p151 = por %p149, %p150
    %s153 = sadd.s32 %s152, 1
    %p156 = scmp.eq.s32.totalorder %s13, 1
    %p157 = scmp.ne.s32.totalorder %s152, %s154
    %p158 = scmp.eq.s32.totalorder %s13, 0
    %p159 = por %p157, %p158
    %p160 = scmp.ne.s32.totalorder %s152, %s154
    %p161 = scmp.eq.s32.totalorder %s18, 1
    %p162 = por %p160, %p161
    %p163 = scmp.ne.s32.totalorder %s154, %s155
    %p164 = scmp.eq.s32.totalorder %s18, 0
    %p165 = por %p163, %p164
    %p166 = scmp.ne.s32.totalorder %s154, %s155
    %p167 = scmp.eq.s32.totalorder %s19, 1
    %p168 = por %p166, %p167
    %p170 = scmp.ne.s32.totalorder %s155, %s169
    %p171 = scmp.eq.s32.totalorder %s19, 0
    %p172 = por %p170, %p171
    %s173 = ssub.s32 %s13, %s20
    %p174 = scmp.eq.s32.totalorder %s173, 0
    %s176 = sadd.s32 %s175, 1
    %s177 = scalar_select %p174, %s175, %s176
    %p180 = pneg %p174
    %p181 = scmp.eq.s32.totalorder %s13, 1
    %p182 = por %p180, %p181
    %p183 = scmp.ne.s32.totalorder %s175, %s178
    %p184 = scmp.eq.s32.totalorder %s13, 0
    %p185 = por %p183, %p184
    %p186 = scmp.ne.s32.totalorder %s175, %s178
    %p187 = scmp.eq.s32.totalorder %s18, 1
    %p188 = por %p186, %p187
    %p189 = scmp.ne.s32.totalorder %s178, %s179
    %p190 = scmp.eq.s32.totalorder %s18, 0
    %p191 = por %p189, %p190
    %p192 = scmp.ne.s32.totalorder %s178, %s179
    %p193 = scmp.eq.s32.totalorder %s19, 1
    %p194 = por %p192, %p193
    %p196 = scmp.ne.s32.totalorder %s179, %s195
    %p197 = scmp.eq.s32.totalorder %s19, 0
    %p198 = por %p196, %p197
    %p199 = scmp.le.s32.totalorder 1, %s13
    %p200 = scmp.lt.s32.totalorder %s13, 3
    %p201 = pnand %p199, %p200
    %p202 = pneg %p201
    // Predicated region
    $region9: #{fe_spp_sfl_parallel.2} parent=5 // pred_check
      _
    $region10: #{fe_spp_sfl_parallel.2} parent=5 // pred_check_branch
      %204 = sbr.rel (%p201) target = $region12
    $region11: #{fe_spp_sfl_parallel.2} parent=5 // pred_region
      %s205 = ssub.s32 %s13, 1
      // Predicated region
      $region13: #{fe_spp_sfl_parallel.2} parent=11 // pred_check
        %p206 = pneg %p34
      $region14: #{fe_spp_sfl_parallel.2} parent=11 // pred_check_branch
        %208 = sbr.rel (%p206) target = $region16
      $region15: #{fe_spp_sfl_parallel.2} parent=11 // pred_region
        _
      $region16: #{fe_spp_sfl_parallel.2} parent=11 // pred_fallthru
        _
      // Predicated region
      $region17: #{fe_spp_sfl_parallel.2} parent=11 // pred_check
        %p209 = pneg %p55
      $region18: #{fe_spp_sfl_parallel.2} parent=11 // pred_check_branch
        %211 = sbr.rel (%p209) target = $region20
      $region19: #{fe_spp_sfl_parallel.2} parent=11 // pred_region
        _
      $region20: #{fe_spp_sfl_parallel.2} parent=11 // pred_fallthru
        _
      // Predicated region
      $region21: #{fe_spp_sfl_parallel.2} parent=11 // pred_check
        %p212 = pneg %p102
      $region22: #{fe_spp_sfl_parallel.2} parent=11 // pred_check_branch
        %214 = sbr.rel (%p212) target = $region24
      $region23: #{fe_spp_sfl_parallel.2} parent=11 // pred_region
        _
      $region24: #{fe_spp_sfl_parallel.2} parent=11 // pred_fallthru
        _
      // Predicated region
      $region25: #{fe_spp_sfl_parallel.2} parent=11 // pred_check
        %p215 = pneg %p123
      $region26: #{fe_spp_sfl_parallel.2} parent=11 // pred_check_branch
        %217 = sbr.rel (%p215) target = $region28
      $region27: #{fe_spp_sfl_parallel.2} parent=11 // pred_region
        _
      $region28: #{fe_spp_sfl_parallel.2} parent=11 // pred_fallthru
        _
      // Predicated region
      $region29: #{fe_spp_sfl_parallel.2} parent=11 // pred_check
        %p218 = pneg %p144
      $region30: #{fe_spp_sfl_parallel.2} parent=11 // pred_check_branch
        %220 = sbr.rel (%p218) target = $region32
      $region31: #{fe_spp_sfl_parallel.2} parent=11 // pred_region
        _
      $region32: #{fe_spp_sfl_parallel.2} parent=11 // pred_fallthru
        _
      // Predicated region
      $region33: #{fe_spp_sfl_parallel.2} parent=11 // pred_check
        %p221 = pneg %p165
      $region34: #{fe_spp_sfl_parallel.2} parent=11 // pred_check_branch
        %223 = sbr.rel (%p221) target = $region36
      $region35: #{fe_spp_sfl_parallel.2} parent=11 // pred_region
        _
      $region36: #{fe_spp_sfl_parallel.2} parent=11 // pred_fallthru
        _
    $region12: #{fe_spp_sfl_parallel.2} parent=5 // pred_fallthru
      _
    %p224 = scmp.lt.s32.totalorder %s13, 2
    // Predicated region
    $region37: #{fe_spp_sfl_parallel.2} parent=5 // pred_check
      %p225 = pneg %p224
    $region38: #{fe_spp_sfl_parallel.2} parent=5 // pred_check_branch
      %227 = sbr.rel (%p225) target = $region40
    $region39: #{fe_spp_sfl_parallel.2} parent=5 // pred_region
      // Predicated region
      $region41: #{fe_spp_sfl_parallel.2} parent=39 // pred_check
        %p228 = pneg %p75
      $region42: #{fe_spp_sfl_parallel.2} parent=39 // pred_check_branch
        %230 = sbr.rel (%p228) target = $region44
      $region43: #{fe_spp_sfl_parallel.2} parent=39 // pred_region
        %p231 = scmp.lt.s32.totalorder %s13, 1
        %s232 = scalar_select %p231, %s13, 1
        %s233 = smul.addr %s232, 2
        %s234 = smul.addr %s233, 4
        %s235 = scalar_lea.vmem %s2, %s234
      $region44: #{fe_spp_sfl_parallel.2} parent=39 // pred_fallthru
        _
    $region40: #{fe_spp_sfl_parallel.2} parent=5 // pred_fallthru
      _
    %p236 = scmp.le.s32.totalorder 1, %s13
    %p237 = scmp.lt.s32.totalorder %s13, 3
    %p238 = pnand %p236, %p237
    %p239 = pneg %p238
    // Predicated region
    $region45: #{fe_spp_sfl_parallel.2} parent=5 // pred_check
      _
    $region46: #{fe_spp_sfl_parallel.2} parent=5 // pred_check_branch
      %241 = sbr.rel (%p238) target = $region48
    $region47: #{fe_spp_sfl_parallel.2} parent=5 // pred_region
      %s242 = ssub.s32 %s13, 1
      %p243 = pneg %p34
      %p244 = pneg %p31
      %p245 = pneg %p55
      %p246 = pneg %p52
      %p247 = scmp.lt.s32.totalorder %s18, 1
      %s248 = scalar_select %p247, %s18, 1
      %s249 = smul.addr %s248, 2
      %s250 = smul.addr %s249, 4
      %s251 = scalar_lea.vmem %s2, %s250
      %p252 = pneg %p81
      %p253 = pneg %p78
      %p254 = pneg %p102
      %p255 = pneg %p99
      %p256 = pneg %p123
      %p257 = pneg %p120
      %p258 = pneg %p144
      %p259 = pneg %p141
      %p260 = pneg %p165
      %p261 = pneg %p162
      %p262 = pneg %p191
      %p263 = pneg %p188
      %p264 = scmp.lt.s32.totalorder %s18, 1
      %s265 = scalar_select %p264, %s18, 1
      %s266 = smul.addr %s265, 10
      %s267 = smul.addr %s266, 8
      %s268 = scalar_lea.vmem %s7, %s267
      %p269 = scmp.lt.s32.totalorder %s18, 1
      %s270 = scalar_select %p269, %s18, 1
      %s271 = smul.addr %s270, 2
      %s272 = smul.addr %s271, 4
      %s273 = scalar_lea.vmem %s2, %s272
      %p274 = scmp.lt.s32.totalorder %s18, 1
      %s275 = scalar_select %p274, %s18, 1
      %s276 = smul.addr %s275, 10
      %s277 = smul.addr %s276, 8
      %s278 = scalar_lea.vmem %s7, %s277
      %v279 = vld [vmem:[%s0] sm:$0x3]
      %v280 = vld [vmem:[%s1] sm:$0x3]
      %v281 = vld [vmem:[%s273] sm:$0xff]
      %v283 = vcombine.high %v281, %v281
      %285 = vrot.lane.b32.xlu0 %v281, 17
      %v286 = vpop.permute.xlu0 %285
      %287 = vrot.lane.b32.xlu0 %v283, 17
      %v288 = vpop.permute.xlu0 %287
      %v289 = vlaneseq
      %v290 = vand.u32 %v289, 127
      %vm291 = vcmp.lt.s32.totalorder %v290, 17
      %v292 = vsel %vm291, %v286, %v288
      %v293 = vsel %vm291, %v288, %v286
      %v294 = vadd.s32 %v279, 4294967295
      %vm295 = vcmp.ge.s32.totalorder %v294, 0
      %vm296 = vcmp.lt.s32.totalorder %v294, 16
      %vm297 = vmand %vm295, %vm296
      %v298 = vadd.s32 %v280, 4294967295
      %vm299 = vcmp.ge.s32.totalorder %v298, 0
      %vm300 = vmand %vm297, %vm299
      %vm301 = vcmp.lt.s32.totalorder %v298, 16
      %vm302 = vmand %vm300, %vm301
      %v303 = vsel %vm302, 1, 0
      %v304 = vlaneseq
      %v305 = vshrl.u32 %v304, 7
      %v306 = vsub.s32 0, %v305
      %v307 = vrot.slane %v303, %v306
      %v308 = vlaneseq
      %v309 = vshrl.u32 %v308, 7
      %v310 = vsub.s32 1, %v309
      %v311 = vrot.slane %v303, %v310
      %vm312 = vcmp.eq.s32.totalorder %v307, 1
      %vm313 = vcmp.eq.s32.totalorder %v311, 1
      %v314 = vsel %vm312, %v293, 0.0
      %v315 = vsel %vm313, %v292, 0.0
      %v316 = vld [vmem:[%s3] sm:$0xff]
      %v317 = vld [vmem:[%s3 + $0x8] sm:$0xff]
      %v318 = vld [vmem:[%s3 + $0x10] sm:$0xff]
      %319 = vrot.lane.b32.xlu0 %v281, 16
      %v320 = vpop.permute.xlu0 %319
      %321 = vrot.lane.b32.xlu0 %v283, 16
      %v322 = vpop.permute.xlu0 %321
      %vm323 = vcmp.lt.s32.totalorder %v290, 16
      %v324 = vsel %vm323, %v320, %v322
      %v325 = vsel %vm323, %v322, %v320
      %vm326 = vcmp.ge.s32.totalorder %v280, 0
      %vm327 = vmand %vm297, %vm326
      %vm328 = vcmp.lt.s32.totalorder %v280, 16
      %vm329 = vmand %vm327, %vm328
      %v330 = vsel %vm329, 1, 0
      %v331 = vlaneseq
      %v332 = vshrl.u32 %v331, 7
      %v333 = vsub.s32 0, %v332
      %v334 = vrot.slane %v330, %v333
      %v335 = vlaneseq
      %v336 = vshrl.u32 %v335, 7
      %v337 = vsub.s32 1, %v336
      %v338 = vrot.slane %v330, %v337
      %vm339 = vcmp.eq.s32.totalorder %v334, 1
      %vm340 = vcmp.eq.s32.totalorder %v338, 1
      %v341 = vsel %vm339, %v325, 0.0
      %v342 = vsel %vm340, %v324, 0.0
      %s343 = scalar_lea.vmem %s3, 24
      %v344 = vld [vmem:[%s343] sm:$0xff]
      %v345 = vld [vmem:[%s343 + $0x8] sm:$0xff]
      %v346 = vld [vmem:[%s343 + $0x10] sm:$0xff]
      %vm347 = vcmask 31744
      %v349 = vsel %vm347, %v344, 0
      %v352 = vsel %vm347, %v345, 0
      %v355 = vsel %vm347, %v346, 0
      %vm357 = vcmask 1043456
      %v359 = vsel %vm357, %v341, 0
      %v362 = vsel %vm357, %v342, 0
      %364 = vmatprep.subr.mxu0 %v362
      %365 = vmatpush1.msra.mxu0 %v359
      %366 = vmatprep.subr.mxu0 0.0
      %367 = vmatpush1.msra.mxu0 0.0
      %368 = vmatprep.subr.mxu0 0.0
      %369 = vmatpush1.msra.mxu0 0.0
      %370 = vmatprep.subr.mxu0 0.0
      %371 = vmatpush1.msra.mxu0 0.0
      %372 = vmatprep.subr.mxu0 0.0
      %373 = vmatpush1.msra.mxu0 0.0
      %374 = vmatprep.subr.mxu0 0.0
      %375 = vmatpush1.msra.mxu0 0.0
      %376 = vmatprep.subr.mxu0 0.0
      %377 = vmatpush1.msra.mxu0 0.0
      %378 = vmatprep.subr.mxu0 0.0
      %379 = vmatpush1.msra.mxu0 0.0
      %380 = vmatprep.subr.mxu0 0.0
      %381 = vmatpush1.msra.mxu0 0.0
      %382 = vmatprep.subr.mxu0 0.0
      %383 = vmatpush1.msra.mxu0 0.0
      %384 = vmatprep.subr.mxu0 0.0
      %385 = vmatpush1.msra.mxu0 0.0
      %386 = vmatprep.subr.mxu0 0.0
      %387 = vmatpush1.msra.mxu0 0.0
      %388 = vmatprep.subr.mxu0 0.0
      %389 = vmatpush1.msra.mxu0 0.0
      %390 = vmatprep.subr.mxu0 0.0
      %391 = vmatpush1.msra.mxu0 0.0
      %392 = vmatprep.subr.mxu0 0.0
      %393 = vmatpush1.msra.mxu0 0.0
      %394 = vmatprep.subr.mxu0 0.0
      %395 = vmatpush1.msra.mxu0 0.0
      %396 = vmatprep.subr.mxu0 0.0
      %397 = vmatpush1.msra.mxu0 0.0
      %398 = vmatprep.subr.mxu0 0.0
      %399 = vmatpush1.msra.mxu0 0.0
      %400 = vmatprep.subr.mxu0 0.0
      %401 = vmatpush1.msra.mxu0 0.0
      %402 = vmatprep.subr.mxu0 0.0
      %403 = vmatpush1.msra.mxu0 0.0
      %404 = vmatprep.subr.mxu0 0.0
      %405 = vmatpush1.msra.mxu0 0.0
      %406 = vmatprep.subr.mxu0 0.0
      %407 = vmatpush1.msra.mxu0 0.0
      %408 = vmatprep.subr.mxu0 0.0
      %409 = vmatpush1.msra.mxu0 0.0
      %410 = vmatprep.subr.mxu0 0.0
      %411 = vmatpush1.msra.mxu0 0.0
      %412 = vmatprep.subr.mxu0 0.0
      %413 = vmatpush1.msra.mxu0 0.0
      %414 = vmatprep.subr.mxu0 0.0
      %415 = vmatpush1.msra.mxu0 0.0
      %416 = vmatprep.subr.mxu0 0.0
      %417 = vmatpush1.msra.mxu0 0.0
      %418 = vmatprep.subr.mxu0 0.0
      %419 = vmatpush1.msra.mxu0 0.0
      %420 = vmatprep.subr.mxu0 0.0
      %421 = vmatpush1.msra.mxu0 0.0
      %422 = vmatprep.subr.mxu0 0.0
      %423 = vmatpush1.msra.mxu0 0.0
      %424 = vmatprep.subr.mxu0 0.0
      %425 = vmatpush1.msra.mxu0 0.0
      %426 = vmatprep.subr.mxu0 0.0
      %427 = vmatpush1.msra.mxu0 0.0
      %428 = vmatprep.mubr.f32.mxu0 0.0
      %429 = vmatmul.mubr.f32.gmra.mrb[0].mxu0 %v349
      %v430 = vpop.f32.mrb[0].mxu0
      %v431 = vadd.f32 0.0, %v430
      %v432 = vpop.f32.mrb[0].mxu0
      %v433 = vadd.f32 0.0, %v432
      %434 = vmatprep.mubr.f32.mxu0 0.0
      %435 = vmatmul.mubr.f32.gmra.mrb[0].mxu0 %v352
      %v436 = vpop.f32.mrb[0].mxu0
      %v437 = vadd.f32 0.0, %v436
      %v438 = vpop.f32.mrb[0].mxu0
      %v439 = vadd.f32 0.0, %v438
      %440 = vmatprep.mubr.f32.mxu0 0.0
      %441 = vmatmul.mubr.f32.gmra.mrb[0].mxu0 %v355
      %v442 = vpop.f32.mrb[0].mxu0
      %v443 = vadd.f32 0.0, %v442
      %v444 = vpop.f32.mrb[0].mxu0
      %v445 = vadd.f32 0.0, %v444
      %446 = vdwg.mxu0
      %v448 = vsel %vm347, %v316, 0
      %v451 = vsel %vm347, %v317, 0
      %v454 = vsel %vm347, %v318, 0
      %v457 = vsel %vm357, %v314, 0
      %v460 = vsel %vm357, %v315, 0
      %462 = vmatprep.subr.mxu0 %v460
      %463 = vmatpush1.msra.mxu0 %v457
      %464 = vmatprep.subr.mxu0 0.0
      %465 = vmatpush1.msra.mxu0 0.0
      %466 = vmatprep.subr.mxu0 0.0
      %467 = vmatpush1.msra.mxu0 0.0
      %468 = vmatprep.subr.mxu0 0.0
      %469 = vmatpush1.msra.mxu0 0.0
      %470 = vmatprep.subr.mxu0 0.0
      %471 = vmatpush1.msra.mxu0 0.0
      %472 = vmatprep.subr.mxu0 0.0
      %473 = vmatpush1.msra.mxu0 0.0
      %474 = vmatprep.subr.mxu0 0.0
      %475 = vmatpush1.msra.mxu0 0.0
      %476 = vmatprep.subr.mxu0 0.0
      %477 = vmatpush1.msra.mxu0 0.0
      %478 = vmatprep.subr.mxu0 0.0
      %479 = vmatpush1.msra.mxu0 0.0
      %480 = vmatprep.subr.mxu0 0.0
      %481 = vmatpush1.msra.mxu0 0.0
      %482 = vmatprep.subr.mxu0 0.0
      %483 = vmatpush1.msra.mxu0 0.0
      %484 = vmatprep.subr.mxu0 0.0
      %485 = vmatpush1.msra.mxu0 0.0
      %486 = vmatprep.subr.mxu0 0.0
      %487 = vmatpush1.msra.mxu0 0.0
      %488 = vmatprep.subr.mxu0 0.0
      %489 = vmatpush1.msra.mxu0 0.0
      %490 = vmatprep.subr.mxu0 0.0
      %491 = vmatpush1.msra.mxu0 0.0
      %492 = vmatprep.subr.mxu0 0.0
      %493 = vmatpush1.msra.mxu0 0.0
      %494 = vmatprep.subr.mxu0 0.0
      %495 = vmatpush1.msra.mxu0 0.0
      %496 = vmatprep.subr.mxu0 0.0
      %497 = vmatpush1.msra.mxu0 0.0
      %498 = vmatprep.subr.mxu0 0.0
      %499 = vmatpush1.msra.mxu0 0.0
      %500 = vmatprep.subr.mxu0 0.0
      %501 = vmatpush1.msra.mxu0 0.0
      %502 = vmatprep.subr.mxu0 0.0
      %503 = vmatpush1.msra.mxu0 0.0
      %504 = vmatprep.subr.mxu0 0.0
      %505 = vmatpush1.msra.mxu0 0.0
      %506 = vmatprep.subr.mxu0 0.0
      %507 = vmatpush1.msra.mxu0 0.0
      %508 = vmatprep.subr.mxu0 0.0
      %509 = vmatpush1.msra.mxu0 0.0
      %510 = vmatprep.subr.mxu0 0.0
      %511 = vmatpush1.msra.mxu0 0.0
      %512 = vmatprep.subr.mxu0 0.0
      %513 = vmatpush1.msra.mxu0 0.0
      %514 = vmatprep.subr.mxu0 0.0
      %515 = vmatpush1.msra.mxu0 0.0
      %516 = vmatprep.subr.mxu0 0.0
      %517 = vmatpush1.msra.mxu0 0.0
      %518 = vmatprep.subr.mxu0 0.0
      %519 = vmatpush1.msra.mxu0 0.0
      %520 = vmatprep.subr.mxu0 0.0
      %521 = vmatpush1.msra.mxu0 0.0
      %522 = vmatprep.subr.mxu0 0.0
      %523 = vmatpush1.msra.mxu0 0.0
      %524 = vmatprep.subr.mxu0 0.0
      %525 = vmatpush1.msra.mxu0 0.0
      %526 = vmatprep.mubr.f32.mxu0 0.0
      %527 = vmatmul.mubr.f32.gmra.mrb[0].mxu0 %v448
      %v528 = vpop.f32.mrb[0].mxu0
      %v529 = vadd.f32 %v431, %v528
      %v530 = vpop.f32.mrb[0].mxu0
      %v531 = vadd.f32 %v433, %v530
      %532 = vmatprep.mubr.f32.mxu0 0.0
      %533 = vmatmul.mubr.f32.gmra.mrb[0].mxu0 %v451
      %v534 = vpop.f32.mrb[0].mxu0
      %v535 = vadd.f32 %v437, %v534
      %v536 = vpop.f32.mrb[0].mxu0
      %v537 = vadd.f32 %v439, %v536
      %538 = vmatprep.mubr.f32.mxu0 0.0
      %539 = vmatmul.mubr.f32.gmra.mrb[0].mxu0 %v454
      %v540 = vpop.f32.mrb[0].mxu0
      %v541 = vadd.f32 %v443, %v540
      %v542 = vpop.f32.mrb[0].mxu0
      %v543 = vadd.f32 %v445, %v542
      %544 = vdwg.mxu0
      %545 = vrot.lane.b32.xlu0 %v281, 15
      %v546 = vpop.permute.xlu0 %545
      %547 = vrot.lane.b32.xlu0 %v283, 15
      %v548 = vpop.permute.xlu0 %547
      %vm549 = vcmp.lt.s32.totalorder %v290, 15
      %v550 = vsel %vm549, %v546, %v548
      %v551 = vsel %vm549, %v548, %v546
      %v552 = vadd.s32 %v280, 1
      %vm553 = vcmp.ge.s32.totalorder %v552, 0
      %vm554 = vmand %vm297, %vm553
      %vm555 = vcmp.lt.s32.totalorder %v552, 16
      %vm556 = vmand %vm554, %vm555
      %v557 = vsel %vm556, 1, 0
      %v558 = vlaneseq
      %v559 = vshrl.u32 %v558, 7
      %v560 = vsub.s32 0, %v559
      %v561 = vrot.slane %v557, %v560
      %v562 = vlaneseq
      %v563 = vshrl.u32 %v562, 7
      %v564 = vsub.s32 1, %v563
      %v565 = vrot.slane %v557, %v564
      %vm566 = vcmp.eq.s32.totalorder %v561, 1
      %vm567 = vcmp.eq.s32.totalorder %v565, 1
      %v568 = vsel %vm566, %v551, 0.0
      %v569 = vsel %vm567, %v550, 0.0
      %s570 = scalar_lea.vmem %s3, 48
      %v571 = vld [vmem:[%s570] sm:$0xff]
      %v572 = vld [vmem:[%s570 + $0x8] sm:$0xff]
      %v573 = vld [vmem:[%s570 + $0x10] sm:$0xff]
      %v575 = vsel %vm347, %v571, 0
      %v578 = vsel %vm347, %v572, 0
      %v581 = vsel %vm347, %v573, 0
      %v584 = vsel %vm357, %v568, 0
      %v587 = vsel %vm357, %v569, 0
      %589 = vmatprep.subr.mxu0 %v587
      %590 = vmatpush1.msra.mxu0 %v584
      %591 = vmatprep.subr.mxu0 0.0
      %592 = vmatpush1.msra.mxu0 0.0
      %593 = vmatprep.subr.mxu0 0.0
      %594 = vmatpush1.msra.mxu0 0.0
      %595 = vmatprep.subr.mxu0 0.0
      %596 = vmatpush1.msra.mxu0 0.0
      %597 = vmatprep.subr.mxu0 0.0
      %598 = vmatpush1.msra.mxu0 0.0
      %599 = vmatprep.subr.mxu0 0.0
      %600 = vmatpush1.msra.mxu0 0.0
      %601 = vmatprep.subr.mxu0 0.0
      %602 = vmatpush1.msra.mxu0 0.0
      %603 = vmatprep.subr.mxu0 0.0
      %604 = vmatpush1.msra.mxu0 0.0
      %605 = vmatprep.subr.mxu0 0.0
      %606 = vmatpush1.msra.mxu0 0.0
      %607 = vmatprep.subr.mxu0 0.0
      %608 = vmatpush1.msra.mxu0 0.0
      %609 = vmatprep.subr.mxu0 0.0
      %610 = vmatpush1.msra.mxu0 0.0
      %611 = vmatprep.subr.mxu0 0.0
      %612 = vmatpush1.msra.mxu0 0.0
      %613 = vmatprep.subr.mxu0 0.0
      %614 = vmatpush1.msra.mxu0 0.0
      %615 = vmatprep.subr.mxu0 0.0
      %616 = vmatpush1.msra.mxu0 0.0
      %617 = vmatprep.subr.mxu0 0.0
      %618 = vmatpush1.msra.mxu0 0.0
      %619 = vmatprep.subr.mxu0 0.0
      %620 = vmatpush1.msra.mxu0 0.0
      %621 = vmatprep.subr.mxu0 0.0
      %622 = vmatpush1.msra.mxu0 0.0
      %623 = vmatprep.subr.mxu0 0.0
      %624 = vmatpush1.msra.mxu0 0.0
      %625 = vmatprep.subr.mxu0 0.0
      %626 = vmatpush1.msra.mxu0 0.0
      %627 = vmatprep.subr.mxu0 0.0
      %628 = vmatpush1.msra.mxu0 0.0
      %629 = vmatprep.subr.mxu0 0.0
      %630 = vmatpush1.msra.mxu0 0.0
      %631 = vmatprep.subr.mxu0 0.0
      %632 = vmatpush1.msra.mxu0 0.0
      %633 = vmatprep.subr.mxu0 0.0
      %634 = vmatpush1.msra.mxu0 0.0
      %635 = vmatprep.subr.mxu0 0.0
      %636 = vmatpush1.msra.mxu0 0.0
      %637 = vmatprep.subr.mxu0 0.0
      %638 = vmatpush1.msra.mxu0 0.0
      %639 = vmatprep.subr.mxu0 0.0
      %640 = vmatpush1.msra.mxu0 0.0
      %641 = vmatprep.subr.mxu0 0.0
      %642 = vmatpush1.msra.mxu0 0.0
      %643 = vmatprep.subr.mxu0 0.0
      %644 = vmatpush1.msra.mxu0 0.0
      %645 = vmatprep.subr.mxu0 0.0
      %646 = vmatpush1.msra.mxu0 0.0
      %647 = vmatprep.subr.mxu0 0.0
      %648 = vmatpush1.msra.mxu0 0.0
      %649 = vmatprep.subr.mxu0 0.0
      %650 = vmatpush1.msra.mxu0 0.0
      %651 = vmatprep.subr.mxu0 0.0
      %652 = vmatpush1.msra.mxu0 0.0
      %653 = vmatprep.mubr.f32.mxu0 0.0
      %654 = vmatmul.mubr.f32.gmra.mrb[0].mxu0 %v575
      %v655 = vpop.f32.mrb[0].mxu0
      %v656 = vadd.f32 0.0, %v655
      %v657 = vpop.f32.mrb[0].mxu0
      %v658 = vadd.f32 0.0, %v657
      %659 = vmatprep.mubr.f32.mxu0 0.0
      %660 = vmatmul.mubr.f32.gmra.mrb[0].mxu0 %v578
      %v661 = vpop.f32.mrb[0].mxu0
      %v662 = vadd.f32 0.0, %v661
      %v663 = vpop.f32.mrb[0].mxu0
      %v664 = vadd.f32 0.0, %v663
      %665 = vmatprep.mubr.f32.mxu0 0.0
      %666 = vmatmul.mubr.f32.gmra.mrb[0].mxu0 %v581
      %v667 = vpop.f32.mrb[0].mxu0
      %v668 = vadd.f32 0.0, %v667
      %v669 = vpop.f32.mrb[0].mxu0
      %v670 = vadd.f32 0.0, %v669
      %671 = vdwg.mxu0
      %v672 = vadd.f32 %v529, %v656
      %v673 = vadd.f32 %v531, %v658
      %v674 = vadd.f32 %v535, %v662
      %v675 = vadd.f32 %v537, %v664
      %v676 = vadd.f32 %v541, %v668
      %v677 = vadd.f32 %v543, %v670
      %678 = vrot.lane.b32.xlu0 %v281, 1
      %v679 = vpop.permute.xlu0 %678
      %680 = vrot.lane.b32.xlu0 %v283, 1
      %v681 = vpop.permute.xlu0 %680
      %vm682 = vcmp.lt.s32.totalorder %v290, 1
      %v683 = vsel %vm682, %v679, %v681
      %v684 = vsel %vm682, %v681, %v679
      %vm685 = vcmp.ge.s32.totalorder %v279, 0
      %vm686 = vcmp.lt.s32.totalorder %v279, 16
      %vm687 = vmand %vm685, %vm686
      %vm688 = vmand %vm687, %vm299
      %vm689 = vmand %vm688, %vm301
      %v690 = vsel %vm689, 1, 0
      %v691 = vlaneseq
      %v692 = vshrl.u32 %v691, 7
      %v693 = vsub.s32 0, %v692
      %v694 = vrot.slane %v690, %v693
      %v695 = vlaneseq
      %v696 = vshrl.u32 %v695, 7
      %v697 = vsub.s32 1, %v696
      %v698 = vrot.slane %v690, %v697
      %vm699 = vcmp.eq.s32.totalorder %v694, 1
      %vm700 = vcmp.eq.s32.totalorder %v698, 1
      %v701 = vsel %vm699, %v684, 0.0
      %v702 = vsel %vm700, %v683, 0.0
      %s703 = scalar_lea.vmem %s3, 72
      %v704 = vld [vmem:[%s703] sm:$0xff]
      %v705 = vld [vmem:[%s703 + $0x8] sm:$0xff]
      %v706 = vld [vmem:[%s703 + $0x10] sm:$0xff]
      %v708 = vsel %vm347, %v704, 0
      %v711 = vsel %vm347, %v705, 0
      %v714 = vsel %vm347, %v706, 0
      %v717 = vsel %vm357, %v701, 0
      %v720 = vsel %vm357, %v702, 0
      %722 = vmatprep.subr.mxu0 %v720
      %723 = vmatpush1.msra.mxu0 %v717
      %724 = vmatprep.subr.mxu0 0.0
      %725 = vmatpush1.msra.mxu0 0.0
      %726 = vmatprep.subr.mxu0 0.0
      %727 = vmatpush1.msra.mxu0 0.0
      %728 = vmatprep.subr.mxu0 0.0
      %729 = vmatpush1.msra.mxu0 0.0
      %730 = vmatprep.subr.mxu0 0.0
      %731 = vmatpush1.msra.mxu0 0.0
      %732 = vmatprep.subr.mxu0 0.0
      %733 = vmatpush1.msra.mxu0 0.0
      %734 = vmatprep.subr.mxu0 0.0
      %735 = vmatpush1.msra.mxu0 0.0
      %736 = vmatprep.subr.mxu0 0.0
      %737 = vmatpush1.msra.mxu0 0.0
      %738 = vmatprep.subr.mxu0 0.0
      %739 = vmatpush1.msra.mxu0 0.0
      %740 = vmatprep.subr.mxu0 0.0
      %741 = vmatpush1.msra.mxu0 0.0
      %742 = vmatprep.subr.mxu0 0.0
      %743 = vmatpush1.msra.mxu0 0.0
      %744 = vmatprep.subr.mxu0 0.0
      %745 = vmatpush1.msra.mxu0 0.0
      %746 = vmatprep.subr.mxu0 0.0
      %747 = vmatpush1.msra.mxu0 0.0
      %748 = vmatprep.subr.mxu0 0.0
      %749 = vmatpush1.msra.mxu0 0.0
      %750 = vmatprep.subr.mxu0 0.0
      %751 = vmatpush1.msra.mxu0 0.0
      %752 = vmatprep.subr.mxu0 0.0
      %753 = vmatpush1.msra.mxu0 0.0
      %754 = vmatprep.subr.mxu0 0.0
      %755 = vmatpush1.msra.mxu0 0.0
      %756 = vmatprep.subr.mxu0 0.0
      %757 = vmatpush1.msra.mxu0 0.0
      %758 = vmatprep.subr.mxu0 0.0
      %759 = vmatpush1.msra.mxu0 0.0
      %760 = vmatprep.subr.mxu0 0.0
      %761 = vmatpush1.msra.mxu0 0.0
      %762 = vmatprep.subr.mxu0 0.0
      %763 = vmatpush1.msra.mxu0 0.0
      %764 = vmatprep.subr.mxu0 0.0
      %765 = vmatpush1.msra.mxu0 0.0
      %766 = vmatprep.subr.mxu0 0.0
      %767 = vmatpush1.msra.mxu0 0.0
      %768 = vmatprep.subr.mxu0 0.0
      %769 = vmatpush1.msra.mxu0 0.0
      %770 = vmatprep.subr.mxu0 0.0
      %771 = vmatpush1.msra.mxu0 0.0
      %772 = vmatprep.subr.mxu0 0.0
      %773 = vmatpush1.msra.mxu0 0.0
      %774 = vmatprep.subr.mxu0 0.0
      %775 = vmatpush1.msra.mxu0 0.0
      %776 = vmatprep.subr.mxu0 0.0
      %777 = vmatpush1.msra.mxu0 0.0
      %778 = vmatprep.subr.mxu0 0.0
      %779 = vmatpush1.msra.mxu0 0.0
      %780 = vmatprep.subr.mxu0 0.0
      %781 = vmatpush1.msra.mxu0 0.0
      %782 = vmatprep.subr.mxu0 0.0
      %783 = vmatpush1.msra.mxu0 0.0
      %784 = vmatprep.subr.mxu0 0.0
      %785 = vmatpush1.msra.mxu0 0.0
      %786 = vmatprep.mubr.f32.mxu0 0.0
      %787 = vmatmul.mubr.f32.gmra.mrb[0].mxu0 %v708
      %v788 = vpop.f32.mrb[0].mxu0
      %v789 = vadd.f32 0.0, %v788
      %v790 = vpop.f32.mrb[0].mxu0
      %v791 = vadd.f32 0.0, %v790
      %792 = vmatprep.mubr.f32.mxu0 0.0
      %793 = vmatmul.mubr.f32.gmra.mrb[0].mxu0 %v711
      %v794 = vpop.f32.mrb[0].mxu0
      %v795 = vadd.f32 0.0, %v794
      %v796 = vpop.f32.mrb[0].mxu0
      %v797 = vadd.f32 0.0, %v796
      %798 = vmatprep.mubr.f32.mxu0 0.0
      %799 = vmatmul.mubr.f32.gmra.mrb[0].mxu0 %v714
      %v800 = vpop.f32.mrb[0].mxu0
      %v801 = vadd.f32 0.0, %v800
      %v802 = vpop.f32.mrb[0].mxu0
      %v803 = vadd.f32 0.0, %v802
      %804 = vdwg.mxu0
      %v805 = vadd.f32 %v672, %v789
      %v806 = vadd.f32 %v673, %v791
      %v807 = vadd.f32 %v674, %v795
      %v808 = vadd.f32 %v675, %v797
      %v809 = vadd.f32 %v676, %v801
      %v810 = vadd.f32 %v677, %v803
      %s811 = scalar_lea.vmem %s3, 96
      %v812 = vld [vmem:[%s811] sm:$0xff]
      %v813 = vld [vmem:[%s811 + $0x8] sm:$0xff]
      %v814 = vld [vmem:[%s811 + $0x10] sm:$0xff]
      %v816 = vsel %vm347, %v812, 0
      %v819 = vsel %vm347, %v813, 0
      %v822 = vsel %vm347, %v814, 0
      %v824 = vsel %vm357, %v281, 0
      %v826 = vsel %vm357, %v283, 0
      %828 = vmatprep.subr.mxu0 %v826
      %829 = vmatpush1.msra.mxu0 %v824
      %830 = vmatprep.subr.mxu0 0.0
      %831 = vmatpush1.msra.mxu0 0.0
      %832 = vmatprep.subr.mxu0 0.0
      %833 = vmatpush1.msra.mxu0 0.0
      %834 = vmatprep.subr.mxu0 0.0
      %835 = vmatpush1.msra.mxu0 0.0
      %836 = vmatprep.subr.mxu0 0.0
      %837 = vmatpush1.msra.mxu0 0.0
      %838 = vmatprep.subr.mxu0 0.0
      %839 = vmatpush1.msra.mxu0 0.0
      %840 = vmatprep.subr.mxu0 0.0
      %841 = vmatpush1.msra.mxu0 0.0
      %842 = vmatprep.subr.mxu0 0.0
      %843 = vmatpush1.msra.mxu0 0.0
      %844 = vmatprep.subr.mxu0 0.0
      %845 = vmatpush1.msra.mxu0 0.0
      %846 = vmatprep.subr.mxu0 0.0
      %847 = vmatpush1.msra.mxu0 0.0
      %848 = vmatprep.subr.mxu0 0.0
      %849 = vmatpush1.msra.mxu0 0.0
      %850 = vmatprep.subr.mxu0 0.0
      %851 = vmatpush1.msra.mxu0 0.0
      %852 = vmatprep.subr.mxu0 0.0
      %853 = vmatpush1.msra.mxu0 0.0
      %854 = vmatprep.subr.mxu0 0.0
      %855 = vmatpush1.msra.mxu0 0.0
      %856 = vmatprep.subr.mxu0 0.0
      %857 = vmatpush1.msra.mxu0 0.0
      %858 = vmatprep.subr.mxu0 0.0
      %859 = vmatpush1.msra.mxu0 0.0
      %860 = vmatprep.subr.mxu0 0.0
      %861 = vmatpush1.msra.mxu0 0.0
      %862 = vmatprep.subr.mxu0 0.0
      %863 = vmatpush1.msra.mxu0 0.0
      %864 = vmatprep.subr.mxu0 0.0
      %865 = vmatpush1.msra.mxu0 0.0
      %866 = vmatprep.subr.mxu0 0.0
      %867 = vmatpush1.msra.mxu0 0.0
      %868 = vmatprep.subr.mxu0 0.0
      %869 = vmatpush1.msra.mxu0 0.0
      %870 = vmatprep.subr.mxu0 0.0
      %871 = vmatpush1.msra.mxu0 0.0
      %872 = vmatprep.subr.mxu0 0.0
      %873 = vmatpush1.msra.mxu0 0.0
      %874 = vmatprep.subr.mxu0 0.0
      %875 = vmatpush1.msra.mxu0 0.0
      %876 = vmatprep.subr.mxu0 0.0
      %877 = vmatpush1.msra.mxu0 0.0
      %878 = vmatprep.subr.mxu0 0.0
      %879 = vmatpush1.msra.mxu0 0.0
      %880 = vmatprep.subr.mxu0 0.0
      %881 = vmatpush1.msra.mxu0 0.0
      %882 = vmatprep.subr.mxu0 0.0
      %883 = vmatpush1.msra.mxu0 0.0
      %884 = vmatprep.subr.mxu0 0.0
      %885 = vmatpush1.msra.mxu0 0.0
      %886 = vmatprep.subr.mxu0 0.0
      %887 = vmatpush1.msra.mxu0 0.0
      %888 = vmatprep.subr.mxu0 0.0
      %889 = vmatpush1.msra.mxu0 0.0
      %890 = vmatprep.subr.mxu0 0.0
      %891 = vmatpush1.msra.mxu0 0.0
      %892 = vmatprep.mubr.f32.mxu0 0.0
      %893 = vmatmul.mubr.f32.gmra.mrb[0].mxu0 %v816
      %v894 = vpop.f32.mrb[0].mxu0
      %v895 = vadd.f32 0.0, %v894
      %v896 = vpop.f32.mrb[0].mxu0
      %v897 = vadd.f32 0.0, %v896
      %898 = vmatprep.mubr.f32.mxu0 0.0
      %899 = vmatmul.mubr.f32.gmra.mrb[0].mxu0 %v819
      %v900 = vpop.f32.mrb[0].mxu0
      %v901 = vadd.f32 0.0, %v900
      %v902 = vpop.f32.mrb[0].mxu0
      %v903 = vadd.f32 0.0, %v902
      %904 = vmatprep.mubr.f32.mxu0 0.0
      %905 = vmatmul.mubr.f32.gmra.mrb[0].mxu0 %v822
      %v906 = vpop.f32.mrb[0].mxu0
      %v907 = vadd.f32 0.0, %v906
      %v908 = vpop.f32.mrb[0].mxu0
      %v909 = vadd.f32 0.0, %v908
      %910 = vdwg.mxu0
      %v911 = vadd.f32 %v805, %v895
      %v912 = vadd.f32 %v806, %v897
      %v913 = vadd.f32 %v807, %v901
      %v914 = vadd.f32 %v808, %v903
      %v915 = vadd.f32 %v809, %v907
      %v916 = vadd.f32 %v810, %v909
      %917 = vrot.lane.b32.xlu0 %v281, 127
      %v918 = vpop.permute.xlu0 %917
      %919 = vrot.lane.b32.xlu0 %v283, 127
      %v920 = vpop.permute.xlu0 %919
      %vm921 = vcmp.lt.s32.totalorder %v290, 127
      %v922 = vsel %vm921, %v918, %v920
      %v923 = vsel %vm921, %v920, %v918
      %vm924 = vmand %vm687, %vm553
      %vm925 = vmand %vm924, %vm555
      %v926 = vsel %vm925, 1, 0
      %v927 = vlaneseq
      %v928 = vshrl.u32 %v927, 7
      %v929 = vsub.s32 0, %v928
      %v930 = vrot.slane %v926, %v929
      %v931 = vlaneseq
      %v932 = vshrl.u32 %v931, 7
      %v933 = vsub.s32 1, %v932
      %v934 = vrot.slane %v926, %v933
      %vm935 = vcmp.eq.s32.totalorder %v930, 1
      %vm936 = vcmp.eq.s32.totalorder %v934, 1
      %v937 = vsel %vm935, %v922, 0.0
      %v938 = vsel %vm936, %v923, 0.0
      %s939 = scalar_lea.vmem %s3, 120
      %v940 = vld [vmem:[%s939] sm:$0xff]
      %v941 = vld [vmem:[%s939 + $0x8] sm:$0xff]
      %v942 = vld [vmem:[%s939 + $0x10] sm:$0xff]
      %v944 = vsel %vm347, %v940, 0
      %v947 = vsel %vm347, %v941, 0
      %v950 = vsel %vm347, %v942, 0
      %v953 = vsel %vm357, %v937, 0
      %v956 = vsel %vm357, %v938, 0
      %958 = vmatprep.subr.mxu0 %v956
      %959 = vmatpush1.msra.mxu0 %v953
      %960 = vmatprep.subr.mxu0 0.0
      %961 = vmatpush1.msra.mxu0 0.0
      %962 = vmatprep.subr.mxu0 0.0
      %963 = vmatpush1.msra.mxu0 0.0
      %964 = vmatprep.subr.mxu0 0.0
      %965 = vmatpush1.msra.mxu0 0.0
      %966 = vmatprep.subr.mxu0 0.0
      %967 = vmatpush1.msra.mxu0 0.0
      %968 = vmatprep.subr.mxu0 0.0
      %969 = vmatpush1.msra.mxu0 0.0
      %970 = vmatprep.subr.mxu0 0.0
      %971 = vmatpush1.msra.mxu0 0.0
      %972 = vmatprep.subr.mxu0 0.0
      %973 = vmatpush1.msra.mxu0 0.0
      %974 = vmatprep.subr.mxu0 0.0
      %975 = vmatpush1.msra.mxu0 0.0
      %976 = vmatprep.subr.mxu0 0.0
      %977 = vmatpush1.msra.mxu0 0.0
      %978 = vmatprep.subr.mxu0 0.0
      %979 = vmatpush1.msra.mxu0 0.0
      %980 = vmatprep.subr.mxu0 0.0
      %981 = vmatpush1.msra.mxu0 0.0
      %982 = vmatprep.subr.mxu0 0.0
      %983 = vmatpush1.msra.mxu0 0.0
      %984 = vmatprep.subr.mxu0 0.0
      %985 = vmatpush1.msra.mxu0 0.0
      %986 = vmatprep.subr.mxu0 0.0
      %987 = vmatpush1.msra.mxu0 0.0
      %988 = vmatprep.subr.mxu0 0.0
      %989 = vmatpush1.msra.mxu0 0.0
      %990 = vmatprep.subr.mxu0 0.0
      %991 = vmatpush1.msra.mxu0 0.0
      %992 = vmatprep.subr.mxu0 0.0
      %993 = vmatpush1.msra.mxu0 0.0
      %994 = vmatprep.subr.mxu0 0.0
      %995 = vmatpush1.msra.mxu0 0.0
      %996 = vmatprep.subr.mxu0 0.0
      %997 = vmatpush1.msra.mxu0 0.0
      %998 = vmatprep.subr.mxu0 0.0
      %999 = vmatpush1.msra.mxu0 0.0
      %1000 = vmatprep.subr.mxu0 0.0
      %1001 = vmatpush1.msra.mxu0 0.0
      %1002 = vmatprep.subr.mxu0 0.0
      %1003 = vmatpush1.msra.mxu0 0.0
      %1004 = vmatprep.subr.mxu0 0.0
      %1005 = vmatpush1.msra.mxu0 0.0
      %1006 = vmatprep.subr.mxu0 0.0
      %1007 = vmatpush1.msra.mxu0 0.0
      %1008 = vmatprep.subr.mxu0 0.0
      %1009 = vmatpush1.msra.mxu0 0.0
      %1010 = vmatprep.subr.mxu0 0.0
      %1011 = vmatpush1.msra.mxu0 0.0
      %1012 = vmatprep.subr.mxu0 0.0
      %1013 = vmatpush1.msra.mxu0 0.0
      %1014 = vmatprep.subr.mxu0 0.0
      %1015 = vmatpush1.msra.mxu0 0.0
      %1016 = vmatprep.subr.mxu0 0.0
      %1017 = vmatpush1.msra.mxu0 0.0
      %1018 = vmatprep.subr.mxu0 0.0
      %1019 = vmatpush1.msra.mxu0 0.0
      %1020 = vmatprep.subr.mxu0 0.0
      %1021 = vmatpush1.msra.mxu0 0.0
      %1022 = vmatprep.mubr.f32.mxu0 0.0
      %1023 = vmatmul.mubr.f32.gmra.mrb[0].mxu0 %v944
      %v1024 = vpop.f32.mrb[0].mxu0
      %v1025 = vadd.f32 0.0, %v1024
      %v1026 = vpop.f32.mrb[0].mxu0
      %v1027 = vadd.f32 0.0, %v1026
      %1028 = vmatprep.mubr.f32.mxu0 0.0
      %1029 = vmatmul.mubr.f32.gmra.mrb[0].mxu0 %v947
      %v1030 = vpop.f32.mrb[0].mxu0
      %v1031 = vadd.f32 0.0, %v1030
      %v1032 = vpop.f32.mrb[0].mxu0
      %v1033 = vadd.f32 0.0, %v1032
      %1034 = vmatprep.mubr.f32.mxu0 0.0
      %1035 = vmatmul.mubr.f32.gmra.mrb[0].mxu0 %v950
      %v1036 = vpop.f32.mrb[0].mxu0
      %v1037 = vadd.f32 0.0, %v1036
      %v1038 = vpop.f32.mrb[0].mxu0
      %v1039 = vadd.f32 0.0, %v1038
      %1040 = vdwg.mxu0
      %v1041 = vadd.f32 %v911, %v1025
      %v1042 = vadd.f32 %v912, %v1027
      %v1043 = vadd.f32 %v913, %v1031
      %v1044 = vadd.f32 %v914, %v1033
      %v1045 = vadd.f32 %v915, %v1037
      %v1046 = vadd.f32 %v916, %v1039
      %1047 = vrot.lane.b32.xlu0 %v281, 113
      %v1048 = vpop.permute.xlu0 %1047
      %1049 = vrot.lane.b32.xlu0 %v283, 113
      %v1050 = vpop.permute.xlu0 %1049
      %vm1051 = vcmp.lt.s32.totalorder %v290, 113
      %v1052 = vsel %vm1051, %v1048, %v1050
      %v1053 = vsel %vm1051, %v1050, %v1048
      %v1054 = vadd.s32 %v279, 1
      %vm1055 = vcmp.ge.s32.totalorder %v1054, 0
      %vm1056 = vcmp.lt.s32.totalorder %v1054, 16
      %vm1057 = vmand %vm1055, %vm1056
      %vm1058 = vmand %vm1057, %vm299
      %vm1059 = vmand %vm1058, %vm301
      %v1060 = vsel %vm1059, 1, 0
      %v1061 = vlaneseq
      %v1062 = vshrl.u32 %v1061, 7
      %v1063 = vsub.s32 0, %v1062
      %v1064 = vrot.slane %v1060, %v1063
      %v1065 = vlaneseq
      %v1066 = vshrl.u32 %v1065, 7
      %v1067 = vsub.s32 1, %v1066
      %v1068 = vrot.slane %v1060, %v1067
      %vm1069 = vcmp.eq.s32.totalorder %v1064, 1
      %vm1070 = vcmp.eq.s32.totalorder %v1068, 1
      %v1071 = vsel %vm1069, %v1052, 0.0
      %v1072 = vsel %vm1070, %v1053, 0.0
      %s1073 = scalar_lea.vmem %s3, 144
      %v1074 = vld [vmem:[%s1073] sm:$0xff]
      %v1075 = vld [vmem:[%s1073 + $0x8] sm:$0xff]
      %v1076 = vld [vmem:[%s1073 + $0x10] sm:$0xff]
      %v1078 = vsel %vm347, %v1074, 0
      %v1081 = vsel %vm347, %v1075, 0
      %v1084 = vsel %vm347, %v1076, 0
      %v1087 = vsel %vm357, %v1071, 0
      %v1090 = vsel %vm357, %v1072, 0
      %1092 = vmatprep.subr.mxu0 %v1090
      %1093 = vmatpush1.msra.mxu0 %v1087
      %1094 = vmatprep.subr.mxu0 0.0
      %1095 = vmatpush1.msra.mxu0 0.0
      %1096 = vmatprep.subr.mxu0 0.0
      %1097 = vmatpush1.msra.mxu0 0.0
      %1098 = vmatprep.subr.mxu0 0.0
      %1099 = vmatpush1.msra.mxu0 0.0
      %1100 = vmatprep.subr.mxu0 0.0
      %1101 = vmatpush1.msra.mxu0 0.0
      %1102 = vmatprep.subr.mxu0 0.0
      %1103 = vmatpush1.msra.mxu0 0.0
      %1104 = vmatprep.subr.mxu0 0.0
      %1105 = vmatpush1.msra.mxu0 0.0
      %1106 = vmatprep.subr.mxu0 0.0
      %1107 = vmatpush1.msra.mxu0 0.0
      %1108 = vmatprep.subr.mxu0 0.0
      %1109 = vmatpush1.msra.mxu0 0.0
      %1110 = vmatprep.subr.mxu0 0.0
      %1111 = vmatpush1.msra.mxu0 0.0
      %1112 = vmatprep.subr.mxu0 0.0
      %1113 = vmatpush1.msra.mxu0 0.0
      %1114 = vmatprep.subr.mxu0 0.0
      %1115 = vmatpush1.msra.mxu0 0.0
      %1116 = vmatprep.subr.mxu0 0.0
      %1117 = vmatpush1.msra.mxu0 0.0
      %1118 = vmatprep.subr.mxu0 0.0
      %1119 = vmatpush1.msra.mxu0 0.0
      %1120 = vmatprep.subr.mxu0 0.0
      %1121 = vmatpush1.msra.mxu0 0.0
      %1122 = vmatprep.subr.mxu0 0.0
      %1123 = vmatpush1.msra.mxu0 0.0
      %1124 = vmatprep.subr.mxu0 0.0
      %1125 = vmatpush1.msra.mxu0 0.0
      %1126 = vmatprep.subr.mxu0 0.0
      %1127 = vmatpush1.msra.mxu0 0.0
      %1128 = vmatprep.subr.mxu0 0.0
      %1129 = vmatpush1.msra.mxu0 0.0
      %1130 = vmatprep.subr.mxu0 0.0
      %1131 = vmatpush1.msra.mxu0 0.0
      %1132 = vmatprep.subr.mxu0 0.0
      %1133 = vmatpush1.msra.mxu0 0.0
      %1134 = vmatprep.subr.mxu0 0.0
      %1135 = vmatpush1.msra.mxu0 0.0
      %1136 = vmatprep.subr.mxu0 0.0
      %1137 = vmatpush1.msra.mxu0 0.0
      %1138 = vmatprep.subr.mxu0 0.0
      %1139 = vmatpush1.msra.mxu0 0.0
      %1140 = vmatprep.subr.mxu0 0.0
      %1141 = vmatpush1.msra.mxu0 0.0
      %1142 = vmatprep.subr.mxu0 0.0
      %1143 = vmatpush1.msra.mxu0 0.0
      %1144 = vmatprep.subr.mxu0 0.0
      %1145 = vmatpush1.msra.mxu0 0.0
      %1146 = vmatprep.subr.mxu0 0.0
      %1147 = vmatpush1.msra.mxu0 0.0
      %1148 = vmatprep.subr.mxu0 0.0
      %1149 = vmatpush1.msra.mxu0 0.0
      %1150 = vmatprep.subr.mxu0 0.0
      %1151 = vmatpush1.msra.mxu0 0.0
      %1152 = vmatprep.subr.mxu0 0.0
      %1153 = vmatpush1.msra.mxu0 0.0
      %1154 = vmatprep.subr.mxu0 0.0
      %1155 = vmatpush1.msra.mxu0 0.0
      %1156 = vmatprep.mubr.f32.mxu0 0.0
      %1157 = vmatmul.mubr.f32.gmra.mrb[0].mxu0 %v1078
      %v1158 = vpop.f32.mrb[0].mxu0
      %v1159 = vadd.f32 0.0, %v1158
      %v1160 = vpop.f32.mrb[0].mxu0
      %v1161 = vadd.f32 0.0, %v1160
      %1162 = vmatprep.mubr.f32.mxu0 0.0
      %1163 = vmatmul.mubr.f32.gmra.mrb[0].mxu0 %v1081
      %v1164 = vpop.f32.mrb[0].mxu0
      %v1165 = vadd.f32 0.0, %v1164
      %v1166 = vpop.f32.mrb[0].mxu0
      %v1167 = vadd.f32 0.0, %v1166
      %1168 = vmatprep.mubr.f32.mxu0 0.0
      %1169 = vmatmul.mubr.f32.gmra.mrb[0].mxu0 %v1084
      %v1170 = vpop.f32.mrb[0].mxu0
      %v1171 = vadd.f32 0.0, %v1170
      %v1172 = vpop.f32.mrb[0].mxu0
      %v1173 = vadd.f32 0.0, %v1172
      %1174 = vdwg.mxu0
      %v1175 = vadd.f32 %v1041, %v1159
      %v1176 = vadd.f32 %v1042, %v1161
      %v1177 = vadd.f32 %v1043, %v1165
      %v1178 = vadd.f32 %v1044, %v1167
      %v1179 = vadd.f32 %v1045, %v1171
      %v1180 = vadd.f32 %v1046, %v1173
      %1181 = vrot.lane.b32.xlu0 %v281, 112
      %v1182 = vpop.permute.xlu0 %1181
      %1183 = vrot.lane.b32.xlu0 %v283, 112
      %v1184 = vpop.permute.xlu0 %1183
      %vm1185 = vcmp.lt.s32.totalorder %v290, 112
      %v1186 = vsel %vm1185, %v1182, %v1184
      %v1187 = vsel %vm1185, %v1184, %v1182
      %vm1188 = vmand %vm1057, %vm326
      %vm1189 = vmand %vm1188, %vm328
      %v1190 = vsel %vm1189, 1, 0
      %v1191 = vlaneseq
      %v1192 = vshrl.u32 %v1191, 7
      %v1193 = vsub.s32 0, %v1192
      %v1194 = vrot.slane %v1190, %v1193
      %v1195 = vlaneseq
      %v1196 = vshrl.u32 %v1195, 7
      %v1197 = vsub.s32 1, %v1196
      %v1198 = vrot.slane %v1190, %v1197
      %vm1199 = vcmp.eq.s32.totalorder %v1194, 1
      %vm1200 = vcmp.eq.s32.totalorder %v1198, 1
      %v1201 = vsel %vm1199, %v1186, 0.0
      %v1202 = vsel %vm1200, %v1187, 0.0
      %s1203 = scalar_lea.vmem %s3, 168
      %v1204 = vld [vmem:[%s1203] sm:$0xff]
      %v1205 = vld [vmem:[%s1203 + $0x8] sm:$0xff]
      %v1206 = vld [vmem:[%s1203 + $0x10] sm:$0xff]
      %v1208 = vsel %vm347, %v1204, 0
      %v1211 = vsel %vm347, %v1205, 0
      %v1214 = vsel %vm347, %v1206, 0
      %v1217 = vsel %vm357, %v1201, 0
      %v1220 = vsel %vm357, %v1202, 0
      %1222 = vmatprep.subr.mxu0 %v1220
      %1223 = vmatpush1.msra.mxu0 %v1217
      %1224 = vmatprep.subr.mxu0 0.0
      %1225 = vmatpush1.msra.mxu0 0.0
      %1226 = vmatprep.subr.mxu0 0.0
      %1227 = vmatpush1.msra.mxu0 0.0
      %1228 = vmatprep.subr.mxu0 0.0
      %1229 = vmatpush1.msra.mxu0 0.0
      %1230 = vmatprep.subr.mxu0 0.0
      %1231 = vmatpush1.msra.mxu0 0.0
      %1232 = vmatprep.subr.mxu0 0.0
      %1233 = vmatpush1.msra.mxu0 0.0
      %1234 = vmatprep.subr.mxu0 0.0
      %1235 = vmatpush1.msra.mxu0 0.0
      %1236 = vmatprep.subr.mxu0 0.0
      %1237 = vmatpush1.msra.mxu0 0.0
      %1238 = vmatprep.subr.mxu0 0.0
      %1239 = vmatpush1.msra.mxu0 0.0
      %1240 = vmatprep.subr.mxu0 0.0
      %1241 = vmatpush1.msra.mxu0 0.0
      %1242 = vmatprep.subr.mxu0 0.0
      %1243 = vmatpush1.msra.mxu0 0.0
      %1244 = vmatprep.subr.mxu0 0.0
      %1245 = vmatpush1.msra.mxu0 0.0
      %1246 = vmatprep.subr.mxu0 0.0
      %1247 = vmatpush1.msra.mxu0 0.0
      %1248 = vmatprep.subr.mxu0 0.0
      %1249 = vmatpush1.msra.mxu0 0.0
      %1250 = vmatprep.subr.mxu0 0.0
      %1251 = vmatpush1.msra.mxu0 0.0
      %1252 = vmatprep.subr.mxu0 0.0
      %1253 = vmatpush1.msra.mxu0 0.0
      %1254 = vmatprep.subr.mxu0 0.0
      %1255 = vmatpush1.msra.mxu0 0.0
      %1256 = vmatprep.subr.mxu0 0.0
      %1257 = vmatpush1.msra.mxu0 0.0
      %1258 = vmatprep.subr.mxu0 0.0
      %1259 = vmatpush1.msra.mxu0 0.0
      %1260 = vmatprep.subr.mxu0 0.0
      %1261 = vmatpush1.msra.mxu0 0.0
      %1262 = vmatprep.subr.mxu0 0.0
      %1263 = vmatpush1.msra.mxu0 0.0
      %1264 = vmatprep.subr.mxu0 0.0
      %1265 = vmatpush1.msra.mxu0 0.0
      %1266 = vmatprep.subr.mxu0 0.0
      %1267 = vmatpush1.msra.mxu0 0.0
      %1268 = vmatprep.subr.mxu0 0.0
      %1269 = vmatpush1.msra.mxu0 0.0
      %1270 = vmatprep.subr.mxu0 0.0
      %1271 = vmatpush1.msra.mxu0 0.0
      %1272 = vmatprep.subr.mxu0 0.0
      %1273 = vmatpush1.msra.mxu0 0.0
      %1274 = vmatprep.subr.mxu0 0.0
      %1275 = vmatpush1.msra.mxu0 0.0
      %1276 = vmatprep.subr.mxu0 0.0
      %1277 = vmatpush1.msra.mxu0 0.0
      %1278 = vmatprep.subr.mxu0 0.0
      %1279 = vmatpush1.msra.mxu0 0.0
      %1280 = vmatprep.subr.mxu0 0.0
      %1281 = vmatpush1.msra.mxu0 0.0
      %1282 = vmatprep.subr.mxu0 0.0
      %1283 = vmatpush1.msra.mxu0 0.0
      %1284 = vmatprep.subr.mxu0 0.0
      %1285 = vmatpush1.msra.mxu0 0.0
      %1286 = vmatprep.mubr.f32.mxu0 0.0
      %1287 = vmatmul.mubr.f32.gmra.mrb[0].mxu0 %v1208
      %v1288 = vpop.f32.mrb[0].mxu0
      %v1289 = vadd.f32 0.0, %v1288
      %v1290 = vpop.f32.mrb[0].mxu0
      %v1291 = vadd.f32 0.0, %v1290
      %1292 = vmatprep.mubr.f32.mxu0 0.0
      %1293 = vmatmul.mubr.f32.gmra.mrb[0].mxu0 %v1211
      %v1294 = vpop.f32.mrb[0].mxu0
      %v1295 = vadd.f32 0.0, %v1294
      %v1296 = vpop.f32.mrb[0].mxu0
      %v1297 = vadd.f32 0.0, %v1296
      %1298 = vmatprep.mubr.f32.mxu0 0.0
      %1299 = vmatmul.mubr.f32.gmra.mrb[0].mxu0 %v1214
      %v1300 = vpop.f32.mrb[0].mxu0
      %v1301 = vadd.f32 0.0, %v1300
      %v1302 = vpop.f32.mrb[0].mxu0
      %v1303 = vadd.f32 0.0, %v1302
      %1304 = vdwg.mxu0
      %v1305 = vadd.f32 %v1175, %v1289
      %v1306 = vadd.f32 %v1176, %v1291
      %v1307 = vadd.f32 %v1177, %v1295
      %v1308 = vadd.f32 %v1178, %v1297
      %v1309 = vadd.f32 %v1179, %v1301
      %v1310 = vadd.f32 %v1180, %v1303
      %1311 = vrot.lane.b32.xlu0 %v281, 111
      %v1312 = vpop.permute.xlu0 %1311
      %1313 = vrot.lane.b32.xlu0 %v283, 111
      %v1314 = vpop.permute.xlu0 %1313
      %vm1315 = vcmp.lt.s32.totalorder %v290, 111
      %v1316 = vsel %vm1315, %v1312, %v1314
      %v1317 = vsel %vm1315, %v1314, %v1312
      %vm1318 = vmand %vm1057, %vm553
      %vm1319 = vmand %vm1318, %vm555
      %v1320 = vsel %vm1319, 1, 0
      %v1321 = vlaneseq
      %v1322 = vshrl.u32 %v1321, 7
      %v1323 = vsub.s32 0, %v1322
      %v1324 = vrot.slane %v1320, %v1323
      %v1325 = vlaneseq
      %v1326 = vshrl.u32 %v1325, 7
      %v1327 = vsub.s32 1, %v1326
      %v1328 = vrot.slane %v1320, %v1327
      %vm1329 = vcmp.eq.s32.totalorder %v1324, 1
      %vm1330 = vcmp.eq.s32.totalorder %v1328, 1
      %v1331 = vsel %vm1329, %v1316, 0.0
      %v1332 = vsel %vm1330, %v1317, 0.0
      %s1333 = scalar_lea.vmem %s3, 192
      %v1334 = vld [vmem:[%s1333] sm:$0xff]
      %v1335 = vld [vmem:[%s1333 + $0x8] sm:$0xff]
      %v1336 = vld [vmem:[%s1333 + $0x10] sm:$0xff]
      %v1338 = vsel %vm347, %v1334, 0
      %v1341 = vsel %vm347, %v1335, 0
      %v1344 = vsel %vm347, %v1336, 0
      %v1347 = vsel %vm357, %v1331, 0
      %v1350 = vsel %vm357, %v1332, 0
      %1352 = vmatprep.subr.mxu0 %v1350
      %1353 = vmatpush1.msra.mxu0 %v1347
      %1354 = vmatprep.subr.mxu0 0.0
      %1355 = vmatpush1.msra.mxu0 0.0
      %1356 = vmatprep.subr.mxu0 0.0
      %1357 = vmatpush1.msra.mxu0 0.0
      %1358 = vmatprep.subr.mxu0 0.0
      %1359 = vmatpush1.msra.mxu0 0.0
      %1360 = vmatprep.subr.mxu0 0.0
      %1361 = vmatpush1.msra.mxu0 0.0
      %1362 = vmatprep.subr.mxu0 0.0
      %1363 = vmatpush1.msra.mxu0 0.0
      %1364 = vmatprep.subr.mxu0 0.0
      %1365 = vmatpush1.msra.mxu0 0.0
      %1366 = vmatprep.subr.mxu0 0.0
      %1367 = vmatpush1.msra.mxu0 0.0
      %1368 = vmatprep.subr.mxu0 0.0
      %1369 = vmatpush1.msra.mxu0 0.0
      %1370 = vmatprep.subr.mxu0 0.0
      %1371 = vmatpush1.msra.mxu0 0.0
      %1372 = vmatprep.subr.mxu0 0.0
      %1373 = vmatpush1.msra.mxu0 0.0
      %1374 = vmatprep.subr.mxu0 0.0
      %1375 = vmatpush1.msra.mxu0 0.0
      %1376 = vmatprep.subr.mxu0 0.0
      %1377 = vmatpush1.msra.mxu0 0.0
      %1378 = vmatprep.subr.mxu0 0.0
      %1379 = vmatpush1.msra.mxu0 0.0
      %1380 = vmatprep.subr.mxu0 0.0
      %1381 = vmatpush1.msra.mxu0 0.0
      %1382 = vmatprep.subr.mxu0 0.0
      %1383 = vmatpush1.msra.mxu0 0.0
      %1384 = vmatprep.subr.mxu0 0.0
      %1385 = vmatpush1.msra.mxu0 0.0
      %1386 = vmatprep.subr.mxu0 0.0
      %1387 = vmatpush1.msra.mxu0 0.0
      %1388 = vmatprep.subr.mxu0 0.0
      %1389 = vmatpush1.msra.mxu0 0.0
      %1390 = vmatprep.subr.mxu0 0.0
      %1391 = vmatpush1.msra.mxu0 0.0
      %1392 = vmatprep.subr.mxu0 0.0
      %1393 = vmatpush1.msra.mxu0 0.0
      %1394 = vmatprep.subr.mxu0 0.0
      %1395 = vmatpush1.msra.mxu0 0.0
      %1396 = vmatprep.subr.mxu0 0.0
      %1397 = vmatpush1.msra.mxu0 0.0
      %1398 = vmatprep.subr.mxu0 0.0
      %1399 = vmatpush1.msra.mxu0 0.0
      %1400 = vmatprep.subr.mxu0 0.0
      %1401 = vmatpush1.msra.mxu0 0.0
      %1402 = vmatprep.subr.mxu0 0.0
      %1403 = vmatpush1.msra.mxu0 0.0
      %1404 = vmatprep.subr.mxu0 0.0
      %1405 = vmatpush1.msra.mxu0 0.0
      %1406 = vmatprep.subr.mxu0 0.0
      %1407 = vmatpush1.msra.mxu0 0.0
      %1408 = vmatprep.subr.mxu0 0.0
      %1409 = vmatpush1.msra.mxu0 0.0
      %1410 = vmatprep.subr.mxu0 0.0
      %1411 = vmatpush1.msra.mxu0 0.0
      %1412 = vmatprep.subr.mxu0 0.0
      %1413 = vmatpush1.msra.mxu0 0.0
      %1414 = vmatprep.subr.mxu0 0.0
      %1415 = vmatpush1.msra.mxu0 0.0
      %1416 = vmatprep.mubr.f32.mxu0 0.0
      %1417 = vmatmul.mubr.f32.gmra.mrb[0].mxu0 %v1338
      %v1418 = vpop.f32.mrb[0].mxu0
      %v1419 = vadd.f32 0.0, %v1418
      %v1420 = vpop.f32.mrb[0].mxu0
      %v1421 = vadd.f32 0.0, %v1420
      %1422 = vmatprep.mubr.f32.mxu0 0.0
      %1423 = vmatmul.mubr.f32.gmra.mrb[0].mxu0 %v1341
      %v1424 = vpop.f32.mrb[0].mxu0
      %v1425 = vadd.f32 0.0, %v1424
      %v1426 = vpop.f32.mrb[0].mxu0
      %v1427 = vadd.f32 0.0, %v1426
      %1428 = vmatprep.mubr.f32.mxu0 0.0
      %1429 = vmatmul.mubr.f32.gmra.mrb[0].mxu0 %v1344
      %v1430 = vpop.f32.mrb[0].mxu0
      %v1431 = vadd.f32 0.0, %v1430
      %v1432 = vpop.f32.mrb[0].mxu0
      %v1433 = vadd.f32 0.0, %v1432
      %1434 = vdwg.mxu0
      %v1435 = vadd.f32 %v1305, %v1419
      %v1436 = vadd.f32 %v1306, %v1421
      %v1437 = vadd.f32 %v1307, %v1425
      %v1438 = vadd.f32 %v1308, %v1427
      %v1439 = vadd.f32 %v1309, %v1431
      %v1440 = vadd.f32 %v1310, %v1433
      %v1441 = vld [vmem:[%s4] sm:$0xff]
      %v1442 = vld [vmem:[%s4 + $0x8] sm:$0xff]
      %v1443 = vld [vmem:[%s4 + $0x10] sm:$0xff]
      %1445 = vset.pattern.permute.xlu0 0
      %1446 = vperm.xlu0 %1445, %v1441
      %v1447 = vpop.permute.xlu0 %1446
      %1450 = vset.pattern.permute.xlu0 0
      %1451 = vperm.xlu0 %1450, %v1442
      %v1452 = vpop.permute.xlu0 %1451
      %1455 = vset.pattern.permute.xlu0 0
      %1456 = vperm.xlu0 %1455, %v1443
      %v1457 = vpop.permute.xlu0 %1456
      %v1459 = vadd.f32 %v1435, %v1447
      %v1460 = vadd.f32 %v1436, %v1447
      %v1461 = vadd.f32 %v1437, %v1452
      %v1462 = vadd.f32 %v1438, %v1452
      %v1463 = vadd.f32 %v1439, %v1457
      %v1464 = vadd.f32 %v1440, %v1457
      %v1465 = vmax.f32 %v1459, 0.0
      %v1466 = vmax.f32 %v1460, 0.0
      %v1467 = vmax.f32 %v1461, 0.0
      %v1468 = vmax.f32 %v1462, 0.0
      %v1469 = vmax.f32 %v1463, 0.0
      %v1470 = vmax.f32 %v1464, 0.0
      %1471 = vrot.lane.b32.xlu0 %v1465, 17
      %v1472 = vpop.permute.xlu0 %1471
      %1473 = vrot.lane.b32.xlu0 %v1467, 17
      %v1474 = vpop.permute.xlu0 %1473
      %1475 = vrot.lane.b32.xlu0 %v1469, 17
      %v1476 = vpop.permute.xlu0 %1475
      %1477 = vrot.lane.b32.xlu0 %v1466, 17
      %v1478 = vpop.permute.xlu0 %1477
      %1479 = vrot.lane.b32.xlu0 %v1468, 17
      %v1480 = vpop.permute.xlu0 %1479
      %1481 = vrot.lane.b32.xlu0 %v1470, 17
      %v1482 = vpop.permute.xlu0 %1481
      %v1483 = vsel %vm291, %v1472, %v1478
      %v1484 = vsel %vm291, %v1474, %v1480
      %v1485 = vsel %vm291, %v1476, %v1482
      %v1486 = vsel %vm291, %v1478, %v1472
      %v1487 = vsel %vm291, %v1480, %v1474
      %v1488 = vsel %vm291, %v1482, %v1476
      %v1489 = vsel %vm312, %v1486, 0.0
      %v1490 = vsel %vm313, %v1483, 0.0
      %v1491 = vsel %vm312, %v1487, 0.0
      %v1492 = vsel %vm313, %v1484, 0.0
      %v1493 = vsel %vm312, %v1488, 0.0
      %v1494 = vsel %vm313, %v1485, 0.0
      %v1495 = vld [vmem:[%s5] sm:$0xff]
      %v1496 = vld [vmem:[%s5 + $0x8] sm:$0xff]
      %1497 = vrot.lane.b32.xlu0 %v1465, 16
      %v1498 = vpop.permute.xlu0 %1497
      %1499 = vrot.lane.b32.xlu0 %v1467, 16
      %v1500 = vpop.permute.xlu0 %1499
      %1501 = vrot.lane.b32.xlu0 %v1469, 16
      %v1502 = vpop.permute.xlu0 %1501
      %1503 = vrot.lane.b32.xlu0 %v1466, 16
      %v1504 = vpop.permute.xlu0 %1503
      %1505 = vrot.lane.b32.xlu0 %v1468, 16
      %v1506 = vpop.permute.xlu0 %1505
      %1507 = vrot.lane.b32.xlu0 %v1470, 16
      %v1508 = vpop.permute.xlu0 %1507
      %v1509 = vsel %vm323, %v1498, %v1504
      %v1510 = vsel %vm323, %v1500, %v1506
      %v1511 = vsel %vm323, %v1502, %v1508
      %v1512 = vsel %vm323, %v1504, %v1498
      %v1513 = vsel %vm323, %v1506, %v1500
      %v1514 = vsel %vm323, %v1508, %v1502
      %v1515 = vsel %vm339, %v1512, 0.0
      %v1516 = vsel %vm340, %v1509, 0.0
      %v1517 = vsel %vm339, %v1513, 0.0
      %v1518 = vsel %vm340, %v1510, 0.0
      %v1519 = vsel %vm339, %v1514, 0.0
      %v1520 = vsel %vm340, %v1511, 0.0
      %s1521 = scalar_lea.vmem %s5, 16
      %v1522 = vld [vmem:[%s1521] sm:$0xff]
      %v1523 = vld [vmem:[%s1521 + $0x8] sm:$0xff]
      %vm1524 = vcmask 195584
      %v1526 = vsel %vm1524, %v1522, 0
      %v1529 = vsel %vm1524, %v1523, 0
      %1531 = vmatprep.subr.mxu0 %v1516
      %1532 = vmatpush1.msra.mxu0 %v1515
      %1533 = vmatprep.subr.mxu0 %v1518
      %1534 = vmatpush1.msra.mxu0 %v1517
      %1535 = vmatprep.subr.mxu0 %v1520
      %1536 = vmatpush1.msra.mxu0 %v1519
      %1537 = vmatprep.subr.mxu0 0.0
      %1538 = vmatpush1.msra.mxu0 0.0
      %1539 = vmatprep.subr.mxu0 0.0
      %1540 = vmatpush1.msra.mxu0 0.0
      %1541 = vmatprep.subr.mxu0 0.0
      %1542 = vmatpush1.msra.mxu0 0.0
      %1543 = vmatprep.subr.mxu0 0.0
      %1544 = vmatpush1.msra.mxu0 0.0
      %1545 = vmatprep.subr.mxu0 0.0
      %1546 = vmatpush1.msra.mxu0 0.0
      %1547 = vmatprep.subr.mxu0 0.0
      %1548 = vmatpush1.msra.mxu0 0.0
      %1549 = vmatprep.subr.mxu0 0.0
      %1550 = vmatpush1.msra.mxu0 0.0
      %1551 = vmatprep.subr.mxu0 0.0
      %1552 = vmatpush1.msra.mxu0 0.0
      %1553 = vmatprep.subr.mxu0 0.0
      %1554 = vmatpush1.msra.mxu0 0.0
      %1555 = vmatprep.subr.mxu0 0.0
      %1556 = vmatpush1.msra.mxu0 0.0
      %1557 = vmatprep.subr.mxu0 0.0
      %1558 = vmatpush1.msra.mxu0 0.0
      %1559 = vmatprep.subr.mxu0 0.0
      %1560 = vmatpush1.msra.mxu0 0.0
      %1561 = vmatprep.subr.mxu0 0.0
      %1562 = vmatpush1.msra.mxu0 0.0
      %1563 = vmatprep.subr.mxu0 0.0
      %1564 = vmatpush1.msra.mxu0 0.0
      %1565 = vmatprep.subr.mxu0 0.0
      %1566 = vmatpush1.msra.mxu0 0.0
      %1567 = vmatprep.subr.mxu0 0.0
      %1568 = vmatpush1.msra.mxu0 0.0
      %1569 = vmatprep.subr.mxu0 0.0
      %1570 = vmatpush1.msra.mxu0 0.0
      %1571 = vmatprep.subr.mxu0 0.0
      %1572 = vmatpush1.msra.mxu0 0.0
      %1573 = vmatprep.subr.mxu0 0.0
      %1574 = vmatpush1.msra.mxu0 0.0
      %1575 = vmatprep.subr.mxu0 0.0
      %1576 = vmatpush1.msra.mxu0 0.0
      %1577 = vmatprep.subr.mxu0 0.0
      %1578 = vmatpush1.msra.mxu0 0.0
      %1579 = vmatprep.subr.mxu0 0.0
      %1580 = vmatpush1.msra.mxu0 0.0
      %1581 = vmatprep.subr.mxu0 0.0
      %1582 = vmatpush1.msra.mxu0 0.0
      %1583 = vmatprep.subr.mxu0 0.0
      %1584 = vmatpush1.msra.mxu0 0.0
      %1585 = vmatprep.subr.mxu0 0.0
      %1586 = vmatpush1.msra.mxu0 0.0
      %1587 = vmatprep.subr.mxu0 0.0
      %1588 = vmatpush1.msra.mxu0 0.0
      %1589 = vmatprep.subr.mxu0 0.0
      %1590 = vmatpush1.msra.mxu0 0.0
      %1591 = vmatprep.subr.mxu0 0.0
      %1592 = vmatpush1.msra.mxu0 0.0
      %1593 = vmatprep.subr.mxu0 0.0
      %1594 = vmatpush1.msra.mxu0 0.0
      %1595 = vmatprep.mubr.f32.mxu0 0.0
      %1596 = vmatmul.mubr.f32.gmra.mrb[0].mxu0 %v1526
      %v1597 = vpop.f32.mrb[0].mxu0
      %v1598 = vadd.f32 0.0, %v1597
      %v1599 = vpop.f32.mrb[0].mxu0
      %v1600 = vadd.f32 0.0, %v1599
      %1601 = vmatprep.mubr.f32.mxu0 0.0
      %1602 = vmatmul.mubr.f32.gmra.mrb[0].mxu0 %v1529
      %v1603 = vpop.f32.mrb[0].mxu0
      %v1604 = vadd.f32 0.0, %v1603
      %v1605 = vpop.f32.mrb[0].mxu0
      %v1606 = vadd.f32 0.0, %v1605
      %1607 = vdwg.mxu0
      %v1609 = vsel %vm1524, %v1495, 0
      %v1612 = vsel %vm1524, %v1496, 0
      %1614 = vmatprep.subr.mxu0 %v1490
      %1615 = vmatpush1.msra.mxu0 %v1489
      %1616 = vmatprep.subr.mxu0 %v1492
      %1617 = vmatpush1.msra.mxu0 %v1491
      %1618 = vmatprep.subr.mxu0 %v1494
      %1619 = vmatpush1.msra.mxu0 %v1493
      %1620 = vmatprep.subr.mxu0 0.0
      %1621 = vmatpush1.msra.mxu0 0.0
      %1622 = vmatprep.subr.mxu0 0.0
      %1623 = vmatpush1.msra.mxu0 0.0
      %1624 = vmatprep.subr.mxu0 0.0
      %1625 = vmatpush1.msra.mxu0 0.0
      %1626 = vmatprep.subr.mxu0 0.0
      %1627 = vmatpush1.msra.mxu0 0.0
      %1628 = vmatprep.subr.mxu0 0.0
      %1629 = vmatpush1.msra.mxu0 0.0
      %1630 = vmatprep.subr.mxu0 0.0
      %1631 = vmatpush1.msra.mxu0 0.0
      %1632 = vmatprep.subr.mxu0 0.0
      %1633 = vmatpush1.msra.mxu0 0.0
      %1634 = vmatprep.subr.mxu0 0.0
      %1635 = vmatpush1.msra.mxu0 0.0
      %1636 = vmatprep.subr.mxu0 0.0
      %1637 = vmatpush1.msra.mxu0 0.0
      %1638 = vmatprep.subr.mxu0 0.0
      %1639 = vmatpush1.msra.mxu0 0.0
      %1640 = vmatprep.subr.mxu0 0.0
      %1641 = vmatpush1.msra.mxu0 0.0
      %1642 = vmatprep.subr.mxu0 0.0
      %1643 = vmatpush1.msra.mxu0 0.0
      %1644 = vmatprep.subr.mxu0 0.0
      %1645 = vmatpush1.msra.mxu0 0.0
      %1646 = vmatprep.subr.mxu0 0.0
      %1647 = vmatpush1.msra.mxu0 0.0
      %1648 = vmatprep.subr.mxu0 0.0
      %1649 = vmatpush1.msra.mxu0 0.0
      %1650 = vmatprep.subr.mxu0 0.0
      %1651 = vmatpush1.msra.mxu0 0.0
      %1652 = vmatprep.subr.mxu0 0.0
      %1653 = vmatpush1.msra.mxu0 0.0
      %1654 = vmatprep.subr.mxu0 0.0
      %1655 = vmatpush1.msra.mxu0 0.0
      %1656 = vmatprep.subr.mxu0 0.0
      %1657 = vmatpush1.msra.mxu0 0.0
      %1658 = vmatprep.subr.mxu0 0.0
      %1659 = vmatpush1.msra.mxu0 0.0
      %1660 = vmatprep.subr.mxu0 0.0
      %1661 = vmatpush1.msra.mxu0 0.0
      %1662 = vmatprep.subr.mxu0 0.0
      %1663 = vmatpush1.msra.mxu0 0.0
      %1664 = vmatprep.subr.mxu0 0.0
      %1665 = vmatpush1.msra.mxu0 0.0
      %1666 = vmatprep.subr.mxu0 0.0
      %1667 = vmatpush1.msra.mxu0 0.0
      %1668 = vmatprep.subr.mxu0 0.0
      %1669 = vmatpush1.msra.mxu0 0.0
      %1670 = vmatprep.subr.mxu0 0.0
      %1671 = vmatpush1.msra.mxu0 0.0
      %1672 = vmatprep.subr.mxu0 0.0
      %1673 = vmatpush1.msra.mxu0 0.0
      %1674 = vmatprep.subr.mxu0 0.0
      %1675 = vmatpush1.msra.mxu0 0.0
      %1676 = vmatprep.subr.mxu0 0.0
      %1677 = vmatpush1.msra.mxu0 0.0
      %1678 = vmatprep.mubr.f32.mxu0 0.0
      %1679 = vmatmul.mubr.f32.gmra.mrb[0].mxu0 %v1609
      %v1680 = vpop.f32.mrb[0].mxu0
      %v1681 = vadd.f32 %v1598, %v1680
      %v1682 = vpop.f32.mrb[0].mxu0
      %v1683 = vadd.f32 %v1600, %v1682
      %1684 = vmatprep.mubr.f32.mxu0 0.0
      %1685 = vmatmul.mubr.f32.gmra.mrb[0].mxu0 %v1612
      %v1686 = vpop.f32.mrb[0].mxu0
      %v1687 = vadd.f32 %v1604, %v1686
      %v1688 = vpop.f32.mrb[0].mxu0
      %v1689 = vadd.f32 %v1606, %v1688
      %1690 = vdwg.mxu0
      %1691 = vrot.lane.b32.xlu0 %v1465, 15
      %v1692 = vpop.permute.xlu0 %1691
      %1693 = vrot.lane.b32.xlu0 %v1467, 15
      %v1694 = vpop.permute.xlu0 %1693
      %1695 = vrot.lane.b32.xlu0 %v1469, 15
      %v1696 = vpop.permute.xlu0 %1695
      %1697 = vrot.lane.b32.xlu0 %v1466, 15
      %v1698 = vpop.permute.xlu0 %1697
      %1699 = vrot.lane.b32.xlu0 %v1468, 15
      %v1700 = vpop.permute.xlu0 %1699
      %1701 = vrot.lane.b32.xlu0 %v1470, 15
      %v1702 = vpop.permute.xlu0 %1701
      %v1703 = vsel %vm549, %v1692, %v1698
      %v1704 = vsel %vm549, %v1694, %v1700
      %v1705 = vsel %vm549, %v1696, %v1702
      %v1706 = vsel %vm549, %v1698, %v1692
      %v1707 = vsel %vm549, %v1700, %v1694
      %v1708 = vsel %vm549, %v1702, %v1696
      %v1709 = vsel %vm566, %v1706, 0.0
      %v1710 = vsel %vm567, %v1703, 0.0
      %v1711 = vsel %vm566, %v1707, 0.0
      %v1712 = vsel %vm567, %v1704, 0.0
      %v1713 = vsel %vm566, %v1708, 0.0
      %v1714 = vsel %vm567, %v1705, 0.0
      %s1715 = scalar_lea.vmem %s5, 32
      %v1716 = vld [vmem:[%s1715] sm:$0xff]
      %v1717 = vld [vmem:[%s1715 + $0x8] sm:$0xff]
      %v1719 = vsel %vm1524, %v1716, 0
      %v1722 = vsel %vm1524, %v1717, 0
      %1724 = vmatprep.subr.mxu0 %v1710
      %1725 = vmatpush1.msra.mxu0 %v1709
      %1726 = vmatprep.subr.mxu0 %v1712
      %1727 = vmatpush1.msra.mxu0 %v1711
      %1728 = vmatprep.subr.mxu0 %v1714
      %1729 = vmatpush1.msra.mxu0 %v1713
      %1730 = vmatprep.subr.mxu0 0.0
      %1731 = vmatpush1.msra.mxu0 0.0
      %1732 = vmatprep.subr.mxu0 0.0
      %1733 = vmatpush1.msra.mxu0 0.0
      %1734 = vmatprep.subr.mxu0 0.0
      %1735 = vmatpush1.msra.mxu0 0.0
      %1736 = vmatprep.subr.mxu0 0.0
      %1737 = vmatpush1.msra.mxu0 0.0
      %1738 = vmatprep.subr.mxu0 0.0
      %1739 = vmatpush1.msra.mxu0 0.0
      %1740 = vmatprep.subr.mxu0 0.0
      %1741 = vmatpush1.msra.mxu0 0.0
      %1742 = vmatprep.subr.mxu0 0.0
      %1743 = vmatpush1.msra.mxu0 0.0
      %1744 = vmatprep.subr.mxu0 0.0
      %1745 = vmatpush1.msra.mxu0 0.0
      %1746 = vmatprep.subr.mxu0 0.0
      %1747 = vmatpush1.msra.mxu0 0.0
      %1748 = vmatprep.subr.mxu0 0.0
      %1749 = vmatpush1.msra.mxu0 0.0
      %1750 = vmatprep.subr.mxu0 0.0
      %1751 = vmatpush1.msra.mxu0 0.0
      %1752 = vmatprep.subr.mxu0 0.0
      %1753 = vmatpush1.msra.mxu0 0.0
      %1754 = vmatprep.subr.mxu0 0.0
      %1755 = vmatpush1.msra.mxu0 0.0
      %1756 = vmatprep.subr.mxu0 0.0
      %1757 = vmatpush1.msra.mxu0 0.0
      %1758 = vmatprep.subr.mxu0 0.0
      %1759 = vmatpush1.msra.mxu0 0.0
      %1760 = vmatprep.subr.mxu0 0.0
      %1761 = vmatpush1.msra.mxu0 0.0
      %1762 = vmatprep.subr.mxu0 0.0
      %1763 = vmatpush1.msra.mxu0 0.0
      %1764 = vmatprep.subr.mxu0 0.0
      %1765 = vmatpush1.msra.mxu0 0.0
      %1766 = vmatprep.subr.mxu0 0.0
      %1767 = vmatpush1.msra.mxu0 0.0
      %1768 = vmatprep.subr.mxu0 0.0
      %1769 = vmatpush1.msra.mxu0 0.0
      %1770 = vmatprep.subr.mxu0 0.0
      %1771 = vmatpush1.msra.mxu0 0.0
      %1772 = vmatprep.subr.mxu0 0.0
      %1773 = vmatpush1.msra.mxu0 0.0
      %1774 = vmatprep.subr.mxu0 0.0
      %1775 = vmatpush1.msra.mxu0 0.0
      %1776 = vmatprep.subr.mxu0 0.0
      %1777 = vmatpush1.msra.mxu0 0.0
      %1778 = vmatprep.subr.mxu0 0.0
      %1779 = vmatpush1.msra.mxu0 0.0
      %1780 = vmatprep.subr.mxu0 0.0
      %1781 = vmatpush1.msra.mxu0 0.0
      %1782 = vmatprep.subr.mxu0 0.0
      %1783 = vmatpush1.msra.mxu0 0.0
      %1784 = vmatprep.subr.mxu0 0.0
      %1785 = vmatpush1.msra.mxu0 0.0
      %1786 = vmatprep.subr.mxu0 0.0
      %1787 = vmatpush1.msra.mxu0 0.0
      %1788 = vmatprep.mubr.f32.mxu0 0.0
      %1789 = vmatmul.mubr.f32.gmra.mrb[0].mxu0 %v1719
      %v1790 = vpop.f32.mrb[0].mxu0
      %v1791 = vadd.f32 0.0, %v1790
      %v1792 = vpop.f32.mrb[0].mxu0
      %v1793 = vadd.f32 0.0, %v1792
      %1794 = vmatprep.mubr.f32.mxu0 0.0
      %1795 = vmatmul.mubr.f32.gmra.mrb[0].mxu0 %v1722
      %v1796 = vpop.f32.mrb[0].mxu0
      %v1797 = vadd.f32 0.0, %v1796
      %v1798 = vpop.f32.mrb[0].mxu0
      %v1799 = vadd.f32 0.0, %v1798
      %1800 = vdwg.mxu0
      %v1801 = vadd.f32 %v1681, %v1791
      %v1802 = vadd.f32 %v1683, %v1793
      %v1803 = vadd.f32 %v1687, %v1797
      %v1804 = vadd.f32 %v1689, %v1799
      %1805 = vrot.lane.b32.xlu0 %v1465, 1
      %v1806 = vpop.permute.xlu0 %1805
      %1807 = vrot.lane.b32.xlu0 %v1467, 1
      %v1808 = vpop.permute.xlu0 %1807
      %1809 = vrot.lane.b32.xlu0 %v1469, 1
      %v1810 = vpop.permute.xlu0 %1809
      %1811 = vrot.lane.b32.xlu0 %v1466, 1
      %v1812 = vpop.permute.xlu0 %1811
      %1813 = vrot.lane.b32.xlu0 %v1468, 1
      %v1814 = vpop.permute.xlu0 %1813
      %1815 = vrot.lane.b32.xlu0 %v1470, 1
      %v1816 = vpop.permute.xlu0 %1815
      %v1817 = vsel %vm682, %v1806, %v1812
      %v1818 = vsel %vm682, %v1808, %v1814
      %v1819 = vsel %vm682, %v1810, %v1816
      %v1820 = vsel %vm682, %v1812, %v1806
      %v1821 = vsel %vm682, %v1814, %v1808
      %v1822 = vsel %vm682, %v1816, %v1810
      %v1823 = vsel %vm699, %v1820, 0.0
      %v1824 = vsel %vm700, %v1817, 0.0
      %v1825 = vsel %vm699, %v1821, 0.0
      %v1826 = vsel %vm700, %v1818, 0.0
      %v1827 = vsel %vm699, %v1822, 0.0
      %v1828 = vsel %vm700, %v1819, 0.0
      %s1829 = scalar_lea.vmem %s5, 48
      %v1830 = vld [vmem:[%s1829] sm:$0xff]
      %v1831 = vld [vmem:[%s1829 + $0x8] sm:$0xff]
      %v1833 = vsel %vm1524, %v1830, 0
      %v1836 = vsel %vm1524, %v1831, 0
      %1838 = vmatprep.subr.mxu0 %v1824
      %1839 = vmatpush1.msra.mxu0 %v1823
      %1840 = vmatprep.subr.mxu0 %v1826
      %1841 = vmatpush1.msra.mxu0 %v1825
      %1842 = vmatprep.subr.mxu0 %v1828
      %1843 = vmatpush1.msra.mxu0 %v1827
      %1844 = vmatprep.subr.mxu0 0.0
      %1845 = vmatpush1.msra.mxu0 0.0
      %1846 = vmatprep.subr.mxu0 0.0
      %1847 = vmatpush1.msra.mxu0 0.0
      %1848 = vmatprep.subr.mxu0 0.0
      %1849 = vmatpush1.msra.mxu0 0.0
      %1850 = vmatprep.subr.mxu0 0.0
      %1851 = vmatpush1.msra.mxu0 0.0
      %1852 = vmatprep.subr.mxu0 0.0
      %1853 = vmatpush1.msra.mxu0 0.0
      %1854 = vmatprep.subr.mxu0 0.0
      %1855 = vmatpush1.msra.mxu0 0.0
      %1856 = vmatprep.subr.mxu0 0.0
      %1857 = vmatpush1.msra.mxu0 0.0
      %1858 = vmatprep.subr.mxu0 0.0
      %1859 = vmatpush1.msra.mxu0 0.0
      %1860 = vmatprep.subr.mxu0 0.0
      %1861 = vmatpush1.msra.mxu0 0.0
      %1862 = vmatprep.subr.mxu0 0.0
      %1863 = vmatpush1.msra.mxu0 0.0
      %1864 = vmatprep.subr.mxu0 0.0
      %1865 = vmatpush1.msra.mxu0 0.0
      %1866 = vmatprep.subr.mxu0 0.0
      %1867 = vmatpush1.msra.mxu0 0.0
      %1868 = vmatprep.subr.mxu0 0.0
      %1869 = vmatpush1.msra.mxu0 0.0
      %1870 = vmatprep.subr.mxu0 0.0
      %1871 = vmatpush1.msra.mxu0 0.0
      %1872 = vmatprep.subr.mxu0 0.0
      %1873 = vmatpush1.msra.mxu0 0.0
      %1874 = vmatprep.subr.mxu0 0.0
      %1875 = vmatpush1.msra.mxu0 0.0
      %1876 = vmatprep.subr.mxu0 0.0
      %1877 = vmatpush1.msra.mxu0 0.0
      %1878 = vmatprep.subr.mxu0 0.0
      %1879 = vmatpush1.msra.mxu0 0.0
      %1880 = vmatprep.subr.mxu0 0.0
      %1881 = vmatpush1.msra.mxu0 0.0
      %1882 = vmatprep.subr.mxu0 0.0
      %1883 = vmatpush1.msra.mxu0 0.0
      %1884 = vmatprep.subr.mxu0 0.0
      %1885 = vmatpush1.msra.mxu0 0.0
      %1886 = vmatprep.subr.mxu0 0.0
      %1887 = vmatpush1.msra.mxu0 0.0
      %1888 = vmatprep.subr.mxu0 0.0
      %1889 = vmatpush1.msra.mxu0 0.0
      %1890 = vmatprep.subr.mxu0 0.0
      %1891 = vmatpush1.msra.mxu0 0.0
      %1892 = vmatprep.subr.mxu0 0.0
      %1893 = vmatpush1.msra.mxu0 0.0
      %1894 = vmatprep.subr.mxu0 0.0
      %1895 = vmatpush1.msra.mxu0 0.0
      %1896 = vmatprep.subr.mxu0 0.0
      %1897 = vmatpush1.msra.mxu0 0.0
      %1898 = vmatprep.subr.mxu0 0.0
      %1899 = vmatpush1.msra.mxu0 0.0
      %1900 = vmatprep.subr.mxu0 0.0
      %1901 = vmatpush1.msra.mxu0 0.0
      %1902 = vmatprep.mubr.f32.mxu0 0.0
      %1903 = vmatmul.mubr.f32.gmra.mrb[0].mxu0 %v1833
      %v1904 = vpop.f32.mrb[0].mxu0
      %v1905 = vadd.f32 0.0, %v1904
      %v1906 = vpop.f32.mrb[0].mxu0
      %v1907 = vadd.f32 0.0, %v1906
      %1908 = vmatprep.mubr.f32.mxu0 0.0
      %1909 = vmatmul.mubr.f32.gmra.mrb[0].mxu0 %v1836
      %v1910 = vpop.f32.mrb[0].mxu0
      %v1911 = vadd.f32 0.0, %v1910
      %v1912 = vpop.f32.mrb[0].mxu0
      %v1913 = vadd.f32 0.0, %v1912
      %1914 = vdwg.mxu0
      %v1915 = vadd.f32 %v1801, %v1905
      %v1916 = vadd.f32 %v1802, %v1907
      %v1917 = vadd.f32 %v1803, %v1911
      %v1918 = vadd.f32 %v1804, %v1913
      %s1919 = scalar_lea.vmem %s5, 64
      %v1920 = vld [vmem:[%s1919] sm:$0xff]
      %v1921 = vld [vmem:[%s1919 + $0x8] sm:$0xff]
      %v1923 = vsel %vm1524, %v1920, 0
      %v1926 = vsel %vm1524, %v1921, 0
      %1928 = vmatprep.subr.mxu0 %v1466
      %1929 = vmatpush1.msra.mxu0 %v1465
      %1930 = vmatprep.subr.mxu0 %v1468
      %1931 = vmatpush1.msra.mxu0 %v1467
      %1932 = vmatprep.subr.mxu0 %v1470
      %1933 = vmatpush1.msra.mxu0 %v1469
      %1934 = vmatprep.subr.mxu0 0.0
      %1935 = vmatpush1.msra.mxu0 0.0
      %1936 = vmatprep.subr.mxu0 0.0
      %1937 = vmatpush1.msra.mxu0 0.0
      %1938 = vmatprep.subr.mxu0 0.0
      %1939 = vmatpush1.msra.mxu0 0.0
      %1940 = vmatprep.subr.mxu0 0.0
      %1941 = vmatpush1.msra.mxu0 0.0
      %1942 = vmatprep.subr.mxu0 0.0
      %1943 = vmatpush1.msra.mxu0 0.0
      %1944 = vmatprep.subr.mxu0 0.0
      %1945 = vmatpush1.msra.mxu0 0.0
      %1946 = vmatprep.subr.mxu0 0.0
      %1947 = vmatpush1.msra.mxu0 0.0
      %1948 = vmatprep.subr.mxu0 0.0
      %1949 = vmatpush1.msra.mxu0 0.0
      %1950 = vmatprep.subr.mxu0 0.0
      %1951 = vmatpush1.msra.mxu0 0.0
      %1952 = vmatprep.subr.mxu0 0.0
      %1953 = vmatpush1.msra.mxu0 0.0
      %1954 = vmatprep.subr.mxu0 0.0
      %1955 = vmatpush1.msra.mxu0 0.0
      %1956 = vmatprep.subr.mxu0 0.0
      %1957 = vmatpush1.msra.mxu0 0.0
      %1958 = vmatprep.subr.mxu0 0.0
      %1959 = vmatpush1.msra.mxu0 0.0
      %1960 = vmatprep.subr.mxu0 0.0
      %1961 = vmatpush1.msra.mxu0 0.0
      %1962 = vmatprep.subr.mxu0 0.0
      %1963 = vmatpush1.msra.mxu0 0.0
      %1964 = vmatprep.subr.mxu0 0.0
      %1965 = vmatpush1.msra.mxu0 0.0
      %1966 = vmatprep.subr.mxu0 0.0
      %1967 = vmatpush1.msra.mxu0 0.0
      %1968 = vmatprep.subr.mxu0 0.0
      %1969 = vmatpush1.msra.mxu0 0.0
      %1970 = vmatprep.subr.mxu0 0.0
      %1971 = vmatpush1.msra.mxu0 0.0
      %1972 = vmatprep.subr.mxu0 0.0
      %1973 = vmatpush1.msra.mxu0 0.0
      %1974 = vmatprep.subr.mxu0 0.0
      %1975 = vmatpush1.msra.mxu0 0.0
      %1976 = vmatprep.subr.mxu0 0.0
      %1977 = vmatpush1.msra.mxu0 0.0
      %1978 = vmatprep.subr.mxu0 0.0
      %1979 = vmatpush1.msra.mxu0 0.0
      %1980 = vmatprep.subr.mxu0 0.0
      %1981 = vmatpush1.msra.mxu0 0.0
      %1982 = vmatprep.subr.mxu0 0.0
      %1983 = vmatpush1.msra.mxu0 0.0
      %1984 = vmatprep.subr.mxu0 0.0
      %1985 = vmatpush1.msra.mxu0 0.0
      %1986 = vmatprep.subr.mxu0 0.0
      %1987 = vmatpush1.msra.mxu0 0.0
      %1988 = vmatprep.subr.mxu0 0.0
      %1989 = vmatpush1.msra.mxu0 0.0
      %1990 = vmatprep.subr.mxu0 0.0
      %1991 = vmatpush1.msra.mxu0 0.0
      %1992 = vmatprep.mubr.f32.mxu0 0.0
      %1993 = vmatmul.mubr.f32.gmra.mrb[0].mxu0 %v1923
      %v1994 = vpop.f32.mrb[0].mxu0
      %v1995 = vadd.f32 0.0, %v1994
      %v1996 = vpop.f32.mrb[0].mxu0
      %v1997 = vadd.f32 0.0, %v1996
      %1998 = vmatprep.mubr.f32.mxu0 0.0
      %1999 = vmatmul.mubr.f32.gmra.mrb[0].mxu0 %v1926
      %v2000 = vpop.f32.mrb[0].mxu0
      %v2001 = vadd.f32 0.0, %v2000
      %v2002 = vpop.f32.mrb[0].mxu0
      %v2003 = vadd.f32 0.0, %v2002
      %2004 = vdwg.mxu0
      %v2005 = vadd.f32 %v1915, %v1995
      %v2006 = vadd.f32 %v1916, %v1997
      %v2007 = vadd.f32 %v1917, %v2001
      %v2008 = vadd.f32 %v1918, %v2003
      %2009 = vrot.lane.b32.xlu0 %v1465, 127
      %v2010 = vpop.permute.xlu0 %2009
      %2011 = vrot.lane.b32.xlu0 %v1467, 127
      %v2012 = vpop.permute.xlu0 %2011
      %2013 = vrot.lane.b32.xlu0 %v1469, 127
      %v2014 = vpop.permute.xlu0 %2013
      %2015 = vrot.lane.b32.xlu0 %v1466, 127
      %v2016 = vpop.permute.xlu0 %2015
      %2017 = vrot.lane.b32.xlu0 %v1468, 127
      %v2018 = vpop.permute.xlu0 %2017
      %2019 = vrot.lane.b32.xlu0 %v1470, 127
      %v2020 = vpop.permute.xlu0 %2019
      %v2021 = vsel %vm921, %v2010, %v2016
      %v2022 = vsel %vm921, %v2012, %v2018
      %v2023 = vsel %vm921, %v2014, %v2020
      %v2024 = vsel %vm921, %v2016, %v2010
      %v2025 = vsel %vm921, %v2018, %v2012
      %v2026 = vsel %vm921, %v2020, %v2014
      %v2027 = vsel %vm935, %v2021, 0.0
      %v2028 = vsel %vm936, %v2024, 0.0
      %v2029 = vsel %vm935, %v2022, 0.0
      %v2030 = vsel %vm936, %v2025, 0.0
      %v2031 = vsel %vm935, %v2023, 0.0
      %v2032 = vsel %vm936, %v2026, 0.0
      %s2033 = scalar_lea.vmem %s5, 80
      %v2034 = vld [vmem:[%s2033] sm:$0xff]
      %v2035 = vld [vmem:[%s2033 + $0x8] sm:$0xff]
      %v2037 = vsel %vm1524, %v2034, 0
      %v2040 = vsel %vm1524, %v2035, 0
      %2042 = vmatprep.subr.mxu0 %v2028
      %2043 = vmatpush1.msra.mxu0 %v2027
      %2044 = vmatprep.subr.mxu0 %v2030
      %2045 = vmatpush1.msra.mxu0 %v2029
      %2046 = vmatprep.subr.mxu0 %v2032
      %2047 = vmatpush1.msra.mxu0 %v2031
      %2048 = vmatprep.subr.mxu0 0.0
      %2049 = vmatpush1.msra.mxu0 0.0
      %2050 = vmatprep.subr.mxu0 0.0
      %2051 = vmatpush1.msra.mxu0 0.0
      %2052 = vmatprep.subr.mxu0 0.0
      %2053 = vmatpush1.msra.mxu0 0.0
      %2054 = vmatprep.subr.mxu0 0.0
      %2055 = vmatpush1.msra.mxu0 0.0
      %2056 = vmatprep.subr.mxu0 0.0
      %2057 = vmatpush1.msra.mxu0 0.0
      %2058 = vmatprep.subr.mxu0 0.0
      %2059 = vmatpush1.msra.mxu0 0.0
      %2060 = vmatprep.subr.mxu0 0.0
      %2061 = vmatpush1.msra.mxu0 0.0
      %2062 = vmatprep.subr.mxu0 0.0
      %2063 = vmatpush1.msra.mxu0 0.0
      %2064 = vmatprep.subr.mxu0 0.0
      %2065 = vmatpush1.msra.mxu0 0.0
      %2066 = vmatprep.subr.mxu0 0.0
      %2067 = vmatpush1.msra.mxu0 0.0
      %2068 = vmatprep.subr.mxu0 0.0
      %2069 = vmatpush1.msra.mxu0 0.0
      %2070 = vmatprep.subr.mxu0 0.0
      %2071 = vmatpush1.msra.mxu0 0.0
      %2072 = vmatprep.subr.mxu0 0.0
      %2073 = vmatpush1.msra.mxu0 0.0
      %2074 = vmatprep.subr.mxu0 0.0
      %2075 = vmatpush1.msra.mxu0 0.0
      %2076 = vmatprep.subr.mxu0 0.0
      %2077 = vmatpush1.msra.mxu0 0.0
      %2078 = vmatprep.subr.mxu0 0.0
      %2079 = vmatpush1.msra.mxu0 0.0
      %2080 = vmatprep.subr.mxu0 0.0
      %2081 = vmatpush1.msra.mxu0 0.0
      %2082 = vmatprep.subr.mxu0 0.0
      %2083 = vmatpush1.msra.mxu0 0.0
      %2084 = vmatprep.subr.mxu0 0.0
      %2085 = vmatpush1.msra.mxu0 0.0
      %2086 = vmatprep.subr.mxu0 0.0
      %2087 = vmatpush1.msra.mxu0 0.0
      %2088 = vmatprep.subr.mxu0 0.0
      %2089 = vmatpush1.msra.mxu0 0.0
      %2090 = vmatprep.subr.mxu0 0.0
      %2091 = vmatpush1.msra.mxu0 0.0
      %2092 = vmatprep.subr.mxu0 0.0
      %2093 = vmatpush1.msra.mxu0 0.0
      %2094 = vmatprep.subr.mxu0 0.0
      %2095 = vmatpush1.msra.mxu0 0.0
      %2096 = vmatprep.subr.mxu0 0.0
      %2097 = vmatpush1.msra.mxu0 0.0
      %2098 = vmatprep.subr.mxu0 0.0
      %2099 = vmatpush1.msra.mxu0 0.0
      %2100 = vmatprep.subr.mxu0 0.0
      %2101 = vmatpush1.msra.mxu0 0.0
      %2102 = vmatprep.subr.mxu0 0.0
      %2103 = vmatpush1.msra.mxu0 0.0
      %2104 = vmatprep.subr.mxu0 0.0
      %2105 = vmatpush1.msra.mxu0 0.0
      %2106 = vmatprep.mubr.f32.mxu0 0.0
      %2107 = vmatmul.mubr.f32.gmra.mrb[0].mxu0 %v2037
      %v2108 = vpop.f32.mrb[0].mxu0
      %v2109 = vadd.f32 0.0, %v2108
      %v2110 = vpop.f32.mrb[0].mxu0
      %v2111 = vadd.f32 0.0, %v2110
      %2112 = vmatprep.mubr.f32.mxu0 0.0
      %2113 = vmatmul.mubr.f32.gmra.mrb[0].mxu0 %v2040
      %v2114 = vpop.f32.mrb[0].mxu0
      %v2115 = vadd.f32 0.0, %v2114
      %v2116 = vpop.f32.mrb[0].mxu0
      %v2117 = vadd.f32 0.0, %v2116
      %2118 = vdwg.mxu0
      %v2119 = vadd.f32 %v2005, %v2109
      %v2120 = vadd.f32 %v2006, %v2111
      %v2121 = vadd.f32 %v2007, %v2115
      %v2122 = vadd.f32 %v2008, %v2117
      %2123 = vrot.lane.b32.xlu0 %v1465, 113
      %v2124 = vpop.permute.xlu0 %2123
      %2125 = vrot.lane.b32.xlu0 %v1467, 113
      %v2126 = vpop.permute.xlu0 %2125
      %2127 = vrot.lane.b32.xlu0 %v1469, 113
      %v2128 = vpop.permute.xlu0 %2127
      %2129 = vrot.lane.b32.xlu0 %v1466, 113
      %v2130 = vpop.permute.xlu0 %2129
      %2131 = vrot.lane.b32.xlu0 %v1468, 113
      %v2132 = vpop.permute.xlu0 %2131
      %2133 = vrot.lane.b32.xlu0 %v1470, 113
      %v2134 = vpop.permute.xlu0 %2133
      %v2135 = vsel %vm1051, %v2124, %v2130
      %v2136 = vsel %vm1051, %v2126, %v2132
      %v2137 = vsel %vm1051, %v2128, %v2134
      %v2138 = vsel %vm1051, %v2130, %v2124
      %v2139 = vsel %vm1051, %v2132, %v2126
      %v2140 = vsel %vm1051, %v2134, %v2128
      %v2141 = vsel %vm1069, %v2135, 0.0
      %v2142 = vsel %vm1070, %v2138, 0.0
      %v2143 = vsel %vm1069, %v2136, 0.0
      %v2144 = vsel %vm1070, %v2139, 0.0
      %v2145 = vsel %vm1069, %v2137, 0.0
      %v2146 = vsel %vm1070, %v2140, 0.0
      %s2147 = scalar_lea.vmem %s5, 96
      %v2148 = vld [vmem:[%s2147] sm:$0xff]
      %v2149 = vld [vmem:[%s2147 + $0x8] sm:$0xff]
      %v2151 = vsel %vm1524, %v2148, 0
      %v2154 = vsel %vm1524, %v2149, 0
      %2156 = vmatprep.subr.mxu0 %v2142
      %2157 = vmatpush1.msra.mxu0 %v2141
      %2158 = vmatprep.subr.mxu0 %v2144
      %2159 = vmatpush1.msra.mxu0 %v2143
      %2160 = vmatprep.subr.mxu0 %v2146
      %2161 = vmatpush1.msra.mxu0 %v2145
      %2162 = vmatprep.subr.mxu0 0.0
      %2163 = vmatpush1.msra.mxu0 0.0
      %2164 = vmatprep.subr.mxu0 0.0
      %2165 = vmatpush1.msra.mxu0 0.0
      %2166 = vmatprep.subr.mxu0 0.0
      %2167 = vmatpush1.msra.mxu0 0.0
      %2168 = vmatprep.subr.mxu0 0.0
      %2169 = vmatpush1.msra.mxu0 0.0
      %2170 = vmatprep.subr.mxu0 0.0
      %2171 = vmatpush1.msra.mxu0 0.0
      %2172 = vmatprep.subr.mxu0 0.0
      %2173 = vmatpush1.msra.mxu0 0.0
      %2174 = vmatprep.subr.mxu0 0.0
      %2175 = vmatpush1.msra.mxu0 0.0
      %2176 = vmatprep.subr.mxu0 0.0
      %2177 = vmatpush1.msra.mxu0 0.0
      %2178 = vmatprep.subr.mxu0 0.0
      %2179 = vmatpush1.msra.mxu0 0.0
      %2180 = vmatprep.subr.mxu0 0.0
      %2181 = vmatpush1.msra.mxu0 0.0
      %2182 = vmatprep.subr.mxu0 0.0
      %2183 = vmatpush1.msra.mxu0 0.0
      %2184 = vmatprep.subr.mxu0 0.0
      %2185 = vmatpush1.msra.mxu0 0.0
      %2186 = vmatprep.subr.mxu0 0.0
      %2187 = vmatpush1.msra.mxu0 0.0
      %2188 = vmatprep.subr.mxu0 0.0
      %2189 = vmatpush1.msra.mxu0 0.0
      %2190 = vmatprep.subr.mxu0 0.0
      %2191 = vmatpush1.msra.mxu0 0.0
      %2192 = vmatprep.subr.mxu0 0.0
      %2193 = vmatpush1.msra.mxu0 0.0
      %2194 = vmatprep.subr.mxu0 0.0
      %2195 = vmatpush1.msra.mxu0 0.0
      %2196 = vmatprep.subr.mxu0 0.0
      %2197 = vmatpush1.msra.mxu0 0.0
      %2198 = vmatprep.subr.mxu0 0.0
      %2199 = vmatpush1.msra.mxu0 0.0
      %2200 = vmatprep.subr.mxu0 0.0
      %2201 = vmatpush1.msra.mxu0 0.0
      %2202 = vmatprep.subr.mxu0 0.0
      %2203 = vmatpush1.msra.mxu0 0.0
      %2204 = vmatprep.subr.mxu0 0.0
      %2205 = vmatpush1.msra.mxu0 0.0
      %2206 = vmatprep.subr.mxu0 0.0
      %2207 = vmatpush1.msra.mxu0 0.0
      %2208 = vmatprep.subr.mxu0 0.0
      %2209 = vmatpush1.msra.mxu0 0.0
      %2210 = vmatprep.subr.mxu0 0.0
      %2211 = vmatpush1.msra.mxu0 0.0
      %2212 = vmatprep.subr.mxu0 0.0
      %2213 = vmatpush1.msra.mxu0 0.0
      %2214 = vmatprep.subr.mxu0 0.0
      %2215 = vmatpush1.msra.mxu0 0.0
      %2216 = vmatprep.subr.mxu0 0.0
      %2217 = vmatpush1.msra.mxu0 0.0
      %2218 = vmatprep.subr.mxu0 0.0
      %2219 = vmatpush1.msra.mxu0 0.0
      %2220 = vmatprep.mubr.f32.mxu0 0.0
      %2221 = vmatmul.mubr.f32.gmra.mrb[0].mxu0 %v2151
      %v2222 = vpop.f32.mrb[0].mxu0
      %v2223 = vadd.f32 0.0, %v2222
      %v2224 = vpop.f32.mrb[0].mxu0
      %v2225 = vadd.f32 0.0, %v2224
      %2226 = vmatprep.mubr.f32.mxu0 0.0
      %2227 = vmatmul.mubr.f32.gmra.mrb[0].mxu0 %v2154
      %v2228 = vpop.f32.mrb[0].mxu0
      %v2229 = vadd.f32 0.0, %v2228
      %v2230 = vpop.f32.mrb[0].mxu0
      %v2231 = vadd.f32 0.0, %v2230
      %2232 = vdwg.mxu0
      %v2233 = vadd.f32 %v2119, %v2223
      %v2234 = vadd.f32 %v2120, %v2225
      %v2235 = vadd.f32 %v2121, %v2229
      %v2236 = vadd.f32 %v2122, %v2231
      %2237 = vrot.lane.b32.xlu0 %v1465, 112
      %v2238 = vpop.permute.xlu0 %2237
      %2239 = vrot.lane.b32.xlu0 %v1467, 112
      %v2240 = vpop.permute.xlu0 %2239
      %2241 = vrot.lane.b32.xlu0 %v1469, 112
      %v2242 = vpop.permute.xlu0 %2241
      %2243 = vrot.lane.b32.xlu0 %v1466, 112
      %v2244 = vpop.permute.xlu0 %2243
      %2245 = vrot.lane.b32.xlu0 %v1468, 112
      %v2246 = vpop.permute.xlu0 %2245
      %2247 = vrot.lane.b32.xlu0 %v1470, 112
      %v2248 = vpop.permute.xlu0 %2247
      %v2249 = vsel %vm1185, %v2238, %v2244
      %v2250 = vsel %vm1185, %v2240, %v2246
      %v2251 = vsel %vm1185, %v2242, %v2248
      %v2252 = vsel %vm1185, %v2244, %v2238
      %v2253 = vsel %vm1185, %v2246, %v2240
      %v2254 = vsel %vm1185, %v2248, %v2242
      %v2255 = vsel %vm1199, %v2249, 0.0
      %v2256 = vsel %vm1200, %v2252, 0.0
      %v2257 = vsel %vm1199, %v2250, 0.0
      %v2258 = vsel %vm1200, %v2253, 0.0
      %v2259 = vsel %vm1199, %v2251, 0.0
      %v2260 = vsel %vm1200, %v2254, 0.0
      %s2261 = scalar_lea.vmem %s5, 112
      %v2262 = vld [vmem:[%s2261] sm:$0xff]
      %v2263 = vld [vmem:[%s2261 + $0x8] sm:$0xff]
      %v2265 = vsel %vm1524, %v2262, 0
      %v2268 = vsel %vm1524, %v2263, 0
      %2270 = vmatprep.subr.mxu0 %v2256
      %2271 = vmatpush1.msra.mxu0 %v2255
      %2272 = vmatprep.subr.mxu0 %v2258
      %2273 = vmatpush1.msra.mxu0 %v2257
      %2274 = vmatprep.subr.mxu0 %v2260
      %2275 = vmatpush1.msra.mxu0 %v2259
      %2276 = vmatprep.subr.mxu0 0.0
      %2277 = vmatpush1.msra.mxu0 0.0
      %2278 = vmatprep.subr.mxu0 0.0
      %2279 = vmatpush1.msra.mxu0 0.0
      %2280 = vmatprep.subr.mxu0 0.0
      %2281 = vmatpush1.msra.mxu0 0.0
      %2282 = vmatprep.subr.mxu0 0.0
      %2283 = vmatpush1.msra.mxu0 0.0
      %2284 = vmatprep.subr.mxu0 0.0
      %2285 = vmatpush1.msra.mxu0 0.0
      %2286 = vmatprep.subr.mxu0 0.0
      %2287 = vmatpush1.msra.mxu0 0.0
      %2288 = vmatprep.subr.mxu0 0.0
      %2289 = vmatpush1.msra.mxu0 0.0
      %2290 = vmatprep.subr.mxu0 0.0
      %2291 = vmatpush1.msra.mxu0 0.0
      %2292 = vmatprep.subr.mxu0 0.0
      %2293 = vmatpush1.msra.mxu0 0.0
      %2294 = vmatprep.subr.mxu0 0.0
      %2295 = vmatpush1.msra.mxu0 0.0
      %2296 = vmatprep.subr.mxu0 0.0
      %2297 = vmatpush1.msra.mxu0 0.0
      %2298 = vmatprep.subr.mxu0 0.0
      %2299 = vmatpush1.msra.mxu0 0.0
      %2300 = vmatprep.subr.mxu0 0.0
      %2301 = vmatpush1.msra.mxu0 0.0
      %2302 = vmatprep.subr.mxu0 0.0
      %2303 = vmatpush1.msra.mxu0 0.0
      %2304 = vmatprep.subr.mxu0 0.0
      %2305 = vmatpush1.msra.mxu0 0.0
      %2306 = vmatprep.subr.mxu0 0.0
      %2307 = vmatpush1.msra.mxu0 0.0
      %2308 = vmatprep.subr.mxu0 0.0
      %2309 = vmatpush1.msra.mxu0 0.0
      %2310 = vmatprep.subr.mxu0 0.0
      %2311 = vmatpush1.msra.mxu0 0.0
      %2312 = vmatprep.subr.mxu0 0.0
      %2313 = vmatpush1.msra.mxu0 0.0
      %2314 = vmatprep.subr.mxu0 0.0
      %2315 = vmatpush1.msra.mxu0 0.0
      %2316 = vmatprep.subr.mxu0 0.0
      %2317 = vmatpush1.msra.mxu0 0.0
      %2318 = vmatprep.subr.mxu0 0.0
      %2319 = vmatpush1.msra.mxu0 0.0
      %2320 = vmatprep.subr.mxu0 0.0
      %2321 = vmatpush1.msra.mxu0 0.0
      %2322 = vmatprep.subr.mxu0 0.0
      %2323 = vmatpush1.msra.mxu0 0.0
      %2324 = vmatprep.subr.mxu0 0.0
      %2325 = vmatpush1.msra.mxu0 0.0
      %2326 = vmatprep.subr.mxu0 0.0
      %2327 = vmatpush1.msra.mxu0 0.0
      %2328 = vmatprep.subr.mxu0 0.0
      %2329 = vmatpush1.msra.mxu0 0.0
      %2330 = vmatprep.subr.mxu0 0.0
      %2331 = vmatpush1.msra.mxu0 0.0
      %2332 = vmatprep.subr.mxu0 0.0
      %2333 = vmatpush1.msra.mxu0 0.0
      %2334 = vmatprep.mubr.f32.mxu0 0.0
      %2335 = vmatmul.mubr.f32.gmra.mrb[0].mxu0 %v2265
      %v2336 = vpop.f32.mrb[0].mxu0
      %v2337 = vadd.f32 0.0, %v2336
      %v2338 = vpop.f32.mrb[0].mxu0
      %v2339 = vadd.f32 0.0, %v2338
      %2340 = vmatprep.mubr.f32.mxu0 0.0
      %2341 = vmatmul.mubr.f32.gmra.mrb[0].mxu0 %v2268
      %v2342 = vpop.f32.mrb[0].mxu0
      %v2343 = vadd.f32 0.0, %v2342
      %v2344 = vpop.f32.mrb[0].mxu0
      %v2345 = vadd.f32 0.0, %v2344
      %2346 = vdwg.mxu0
      %v2347 = vadd.f32 %v2233, %v2337
      %v2348 = vadd.f32 %v2234, %v2339
      %v2349 = vadd.f32 %v2235, %v2343
      %v2350 = vadd.f32 %v2236, %v2345
      %2351 = vrot.lane.b32.xlu0 %v1465, 111
      %v2352 = vpop.permute.xlu0 %2351
      %2353 = vrot.lane.b32.xlu0 %v1467, 111
      %v2354 = vpop.permute.xlu0 %2353
      %2355 = vrot.lane.b32.xlu0 %v1469, 111
      %v2356 = vpop.permute.xlu0 %2355
      %2357 = vrot.lane.b32.xlu0 %v1466, 111
      %v2358 = vpop.permute.xlu0 %2357
      %2359 = vrot.lane.b32.xlu0 %v1468, 111
      %v2360 = vpop.permute.xlu0 %2359
      %2361 = vrot.lane.b32.xlu0 %v1470, 111
      %v2362 = vpop.permute.xlu0 %2361
      %v2363 = vsel %vm1315, %v2352, %v2358
      %v2364 = vsel %vm1315, %v2354, %v2360
      %v2365 = vsel %vm1315, %v2356, %v2362
      %v2366 = vsel %vm1315, %v2358, %v2352
      %v2367 = vsel %vm1315, %v2360, %v2354
      %v2368 = vsel %vm1315, %v2362, %v2356
      %v2369 = vsel %vm1329, %v2363, 0.0
      %v2370 = vsel %vm1330, %v2366, 0.0
      %v2371 = vsel %vm1329, %v2364, 0.0
      %v2372 = vsel %vm1330, %v2367, 0.0
      %v2373 = vsel %vm1329, %v2365, 0.0
      %v2374 = vsel %vm1330, %v2368, 0.0
      %s2375 = scalar_lea.vmem %s5, 128
      %v2376 = vld [vmem:[%s2375] sm:$0xff]
      %v2377 = vld [vmem:[%s2375 + $0x8] sm:$0xff]
      %v2379 = vsel %vm1524, %v2376, 0
      %v2382 = vsel %vm1524, %v2377, 0
      %2384 = vmatprep.subr.mxu0 %v2370
      %2385 = vmatpush1.msra.mxu0 %v2369
      %2386 = vmatprep.subr.mxu0 %v2372
      %2387 = vmatpush1.msra.mxu0 %v2371
      %2388 = vmatprep.subr.mxu0 %v2374
      %2389 = vmatpush1.msra.mxu0 %v2373
      %2390 = vmatprep.subr.mxu0 0.0
      %2391 = vmatpush1.msra.mxu0 0.0
      %2392 = vmatprep.subr.mxu0 0.0
      %2393 = vmatpush1.msra.mxu0 0.0
      %2394 = vmatprep.subr.mxu0 0.0
      %2395 = vmatpush1.msra.mxu0 0.0
      %2396 = vmatprep.subr.mxu0 0.0
      %2397 = vmatpush1.msra.mxu0 0.0
      %2398 = vmatprep.subr.mxu0 0.0
      %2399 = vmatpush1.msra.mxu0 0.0
      %2400 = vmatprep.subr.mxu0 0.0
      %2401 = vmatpush1.msra.mxu0 0.0
      %2402 = vmatprep.subr.mxu0 0.0
      %2403 = vmatpush1.msra.mxu0 0.0
      %2404 = vmatprep.subr.mxu0 0.0
      %2405 = vmatpush1.msra.mxu0 0.0
      %2406 = vmatprep.subr.mxu0 0.0
      %2407 = vmatpush1.msra.mxu0 0.0
      %2408 = vmatprep.subr.mxu0 0.0
      %2409 = vmatpush1.msra.mxu0 0.0
      %2410 = vmatprep.subr.mxu0 0.0
      %2411 = vmatpush1.msra.mxu0 0.0
      %2412 = vmatprep.subr.mxu0 0.0
      %2413 = vmatpush1.msra.mxu0 0.0
      %2414 = vmatprep.subr.mxu0 0.0
      %2415 = vmatpush1.msra.mxu0 0.0
      %2416 = vmatprep.subr.mxu0 0.0
      %2417 = vmatpush1.msra.mxu0 0.0
      %2418 = vmatprep.subr.mxu0 0.0
      %2419 = vmatpush1.msra.mxu0 0.0
      %2420 = vmatprep.subr.mxu0 0.0
      %2421 = vmatpush1.msra.mxu0 0.0
      %2422 = vmatprep.subr.mxu0 0.0
      %2423 = vmatpush1.msra.mxu0 0.0
      %2424 = vmatprep.subr.mxu0 0.0
      %2425 = vmatpush1.msra.mxu0 0.0
      %2426 = vmatprep.subr.mxu0 0.0
      %2427 = vmatpush1.msra.mxu0 0.0
      %2428 = vmatprep.subr.mxu0 0.0
      %2429 = vmatpush1.msra.mxu0 0.0
      %2430 = vmatprep.subr.mxu0 0.0
      %2431 = vmatpush1.msra.mxu0 0.0
      %2432 = vmatprep.subr.mxu0 0.0
      %2433 = vmatpush1.msra.mxu0 0.0
      %2434 = vmatprep.subr.mxu0 0.0
      %2435 = vmatpush1.msra.mxu0 0.0
      %2436 = vmatprep.subr.mxu0 0.0
      %2437 = vmatpush1.msra.mxu0 0.0
      %2438 = vmatprep.subr.mxu0 0.0
      %2439 = vmatpush1.msra.mxu0 0.0
      %2440 = vmatprep.subr.mxu0 0.0
      %2441 = vmatpush1.msra.mxu0 0.0
      %2442 = vmatprep.subr.mxu0 0.0
      %2443 = vmatpush1.msra.mxu0 0.0
      %2444 = vmatprep.subr.mxu0 0.0
      %2445 = vmatpush1.msra.mxu0 0.0
      %2446 = vmatprep.subr.mxu0 0.0
      %2447 = vmatpush1.msra.mxu0 0.0
      %2448 = vmatprep.mubr.f32.mxu0 0.0
      %2449 = vmatmul.mubr.f32.gmra.mrb[0].mxu0 %v2379
      %v2450 = vpop.f32.mrb[0].mxu0
      %v2451 = vadd.f32 0.0, %v2450
      %v2452 = vpop.f32.mrb[0].mxu0
      %v2453 = vadd.f32 0.0, %v2452
      %2454 = vmatprep.mubr.f32.mxu0 0.0
      %2455 = vmatmul.mubr.f32.gmra.mrb[0].mxu0 %v2382
      %v2456 = vpop.f32.mrb[0].mxu0
      %v2457 = vadd.f32 0.0, %v2456
      %v2458 = vpop.f32.mrb[0].mxu0
      %v2459 = vadd.f32 0.0, %v2458
      %2460 = vdwg.mxu0
      %v2461 = vadd.f32 %v2347, %v2451
      %v2462 = vadd.f32 %v2348, %v2453
      %v2463 = vadd.f32 %v2349, %v2457
      %v2464 = vadd.f32 %v2350, %v2459
      %v2465 = vld [vmem:[%s6] sm:$0xff]
      %v2466 = vld [vmem:[%s6 + $0x8] sm:$0xff]
      %2468 = vset.pattern.permute.xlu0 0
      %2469 = vperm.xlu0 %2468, %v2465
      %v2470 = vpop.permute.xlu0 %2469
      %2473 = vset.pattern.permute.xlu0 0
      %2474 = vperm.xlu0 %2473, %v2466
      %v2475 = vpop.permute.xlu0 %2474
      %v2477 = vadd.f32 %v2461, %v2470
      %v2478 = vadd.f32 %v2462, %v2470
      %v2479 = vadd.f32 %v2463, %v2475
      %v2480 = vadd.f32 %v2464, %v2475
      %v2481 = vtanh.pop %v2477
      %v2482 = vtanh.pop %v2478
      %v2483 = vtanh.pop %v2479
      %v2484 = vtanh.pop %v2480
      %2485 = vst [vmem:[%s278] sm:$0xff] %v1465
      %2486 = vst [vmem:[%s278 + $0x8] sm:$0xff] %v1466
      %2487 = vst [vmem:[%s278 + $0x10] sm:$0xff] %v1467
      %2488 = vst [vmem:[%s278 + $0x18] sm:$0xff] %v1468
      %2489 = vst [vmem:[%s278 + $0x20] sm:$0xff] %v1469
      %2490 = vst [vmem:[%s278 + $0x28] sm:$0xff] %v1470
      %2491 = vst [vmem:[%s278 + $0x30] sm:$0xff] %v2481
      %2492 = vst [vmem:[%s278 + $0x38] sm:$0xff] %v2482
      %2493 = vst [vmem:[%s278 + $0x40] sm:$0xff] %v2483
      %2494 = vst [vmem:[%s278 + $0x48] sm:$0xff] %v2484
      %p2495 = scmp.lt.s32.totalorder %s18, 1
      %s2496 = scalar_select %p2495, %s18, 1
      %s2497 = smul.addr %s2496, 10
      %s2498 = smul.addr %s2497, 8
      %s2499 = scalar_lea.vmem %s7, %s2498
      // Predicated region
      $region49: #{fe_spp_sfl_parallel.2} parent=47 // pred_check
        %p2500 = pneg %p188
      $region50: #{fe_spp_sfl_parallel.2} parent=47 // pred_check_branch
        %2502 = sbr.rel (%p2500) target = $region52
      $region51: #{fe_spp_sfl_parallel.2} parent=47 // pred_region
        _
      $region52: #{fe_spp_sfl_parallel.2} parent=47 // pred_fallthru
        _
    $region48: #{fe_spp_sfl_parallel.2} parent=5 // pred_fallthru
      _
    %p2503 = scmp.le.s32.totalorder 2, %s13
    // Predicated region
    $region53: #{fe_spp_sfl_parallel.2} parent=5 // pred_check
      %p2504 = pneg %p2503
    $region54: #{fe_spp_sfl_parallel.2} parent=5 // pred_check_branch
      %2506 = sbr.rel (%p2504) target = $region56
    $region55: #{fe_spp_sfl_parallel.2} parent=5 // pred_region
      %s2507 = ssub.s32 %s13, 2
      // Predicated region
      $region57: #{fe_spp_sfl_parallel.2} parent=55 // pred_check
        %p2508 = pneg %p194
      $region58: #{fe_spp_sfl_parallel.2} parent=55 // pred_check_branch
        %2510 = sbr.rel (%p2508) target = $region60
      $region59: #{fe_spp_sfl_parallel.2} parent=55 // pred_region
        %p2511 = scmp.lt.s32.totalorder %s19, 1
        %s2512 = scalar_select %p2511, %s19, 1
        %s2513 = smul.addr %s2512, 10
        %s2514 = smul.addr %s2513, 8
        %s2515 = scalar_lea.vmem %s7, %s2514
      $region60: #{fe_spp_sfl_parallel.2} parent=55 // pred_fallthru
        _
    $region56: #{fe_spp_sfl_parallel.2} parent=5 // pred_fallthru
      _
  $region6: #{fe_spp_sfl_parallel.2} parent=0 // loop_footer
    %s17 = sadd.s32 1, %s13
  $region7: #{fe_spp_sfl_parallel.2} parent=0 // loop_footer_branch
    %12 = sbr.rel target = $region3
  $region8: #{fe_spp_sfl_parallel.2} parent=0 // loop_exit
    _

</llo_original>
